<compile_context>
chip_gen: v7x
topology: tpu7x:2x2x1
jax: 0.10.0
libtpu: 0.0.40
codegen_flags: <defaults>
</compile_context>

<pallas_src>
import math

import jax
import jax.numpy as jnp
from jax.experimental import pallas as pl
from jax.experimental.pallas import tpu as pltpu


# ----------------------------------------------------------------------------
# exact (erf-based) GELU, matching torch.nn.GELU() default
# ----------------------------------------------------------------------------
def _erf(x):
    # Abramowitz & Stegun 7.1.26, |error| < 1.5e-7 (~ float32 precision).
    p = 0.3275911
    a1, a2, a3, a4, a5 = (0.254829592, -0.284496736, 1.421413741,
                          -1.453152027, 1.061405429)
    sgn = jnp.where(x >= 0.0, 1.0, -1.0)
    ax = jnp.abs(x)
    t = 1.0 / (1.0 + p * ax)
    poly = ((((a5 * t + a4) * t + a3) * t + a2) * t + a1) * t
    return sgn * (1.0 - poly * jnp.exp(-ax * ax))


def _gelu(x):
    return 0.5 * x * (1.0 + _erf(x * (1.0 / math.sqrt(2.0))))


# ----------------------------------------------------------------------------
# Pallas kernel 1: causal SSM convolution (D-skip folded in) + GELU
# ----------------------------------------------------------------------------
def s4d_conv_kernel(tt_ref, u_ref, y_ref):
    # tt_ref: (H, L, L)     tt[h, t, l] = K'[h, l-t] for l >= t else 0
    #                       (K' has D folded into the zero-lag tap)
    # u_ref : (1, H, Bt, L) channel-major input block (lane dim = L)
    # y_ref : (1, H, Bt, L) GELU(causal_conv(u, K) + u * D)
    #
    # MXU: batched matmul over H (canonical (batch, M, K) x (batch, K, N)),
    # replacing the old VPU broadcast-multiply + XLU reduce.
    y = jnp.einsum('hbt,htl->hbl', u_ref[0], tt_ref[...],
                   preferred_element_type=jnp.float32)
    y_ref[0] = _gelu(y)


# ----------------------------------------------------------------------------
# Pallas kernel 2: fused 1x1 conv (H -> 2H) + GLU gate
# ----------------------------------------------------------------------------
def glu_proj_kernel(y_ref, w_ref, b_ref, o_ref):
    # y_ref: (H, Tt)  channel-major post-GELU tokens (lane dim = tokens)
    # w_ref: (2H, H)  fused Conv1d(k=1) weight (both GLU halves)
    # b_ref: (2H, 1)  fused bias
    # o_ref: (H, Tt)  a * sigmoid(g)
    h = y_ref.shape[0]
    z = jnp.dot(w_ref[...], y_ref[...],
                preferred_element_type=jnp.float32) + b_ref[...]
    a = z[:h, :]          # static sublane slices (offset multiple of 8)
    g = z[h:, :]
    o_ref[...] = a * jax.nn.sigmoid(g)


# ----------------------------------------------------------------------------
# parameter-only math (plain JAX glue): S4D kernel K and Toeplitz operand
# ----------------------------------------------------------------------------
def s4d_ssm_kernel(log_dt, C_re, C_im, log_A_real, A_imag, L):
    """K[h, l] = 2 * Re( sum_n C'[h,n] * exp(dt*A[h,n] * l) )  -- (H, L)."""
    dt = jnp.exp(log_dt)                                  # (H,)
    C = C_re + 1j * C_im                                  # (H, N/2)
    A = -jnp.exp(log_A_real) + 1j * A_imag                # (H, N/2)
    dtA = A * dt[:, None]
    Kpow = dtA[:, :, None] * jnp.arange(L)                # (H, N/2, L)
    Cm = C * (jnp.exp(dtA) - 1.0) / A
    K = 2.0 * jnp.einsum('hn,hnl->hl', Cm, jnp.exp(Kpow)).real
    return K.astype(jnp.float32)


def causal_toeplitz_tl(Kp):
    """tt[h, t, l] = Kp[h, l - t] if l >= t else 0  -- shape (H, L, L)."""
    H, L = Kp.shape
    t = jnp.arange(L)[:, None]
    l = jnp.arange(L)[None, :]
    lag = l - t
    gathered = Kp[:, jnp.clip(lag, 0, L - 1)]             # (H, L, L)
    return jnp.where((lag >= 0)[None, :, :], gathered, 0.0)


# ----------------------------------------------------------------------------
# forward wrapper
# ----------------------------------------------------------------------------
def s4d_forward(u, log_dt, C_re, C_im, log_A_real, A_imag, D, W_out, b_out,
                Bt=None):
    B, H, L = u.shape

    if Bt is None:
        Bt = 2 if B % 2 == 0 else 1
    assert B % Bt == 0, "demo wrapper assumes B divisible by Bt"
    nB = B // Bt

    # --- SSM kernel + fold D into the zero-lag tap (conv + u*D == conv') -----
    K = s4d_ssm_kernel(log_dt, C_re, C_im, log_A_real, A_imag, L)   # (H, L)
    Kp = K.at[:, 0].add(D)
    tt = causal_toeplitz_tl(Kp)                                     # (H, L, L)

    # --- kernel 1: channel-major conv + GELU, Bt batch elements per step -----
    u4 = u.reshape(nB, Bt, H, L).transpose(0, 2, 1, 3)              # (nB,H,Bt,L)
    conv_out = pl.pallas_call(
        s4d_conv_kernel,
        out_shape=jax.ShapeDtypeStruct((nB, H, Bt, L), jnp.float32),
        grid_spec=pltpu.PrefetchScalarGridSpec(
            num_scalar_prefetch=0,
            grid=(nB,),
            in_specs=[
                # grid-invariant Toeplitz operand (fetched once, index constant)
                pl.BlockSpec((H, L, L), lambda i: (0, 0, 0)),
                pl.BlockSpec((1, H, Bt, L), lambda i: (i, 0, 0, 0)),
            ],
            out_specs=pl.BlockSpec((1, H, Bt, L), lambda i: (i, 0, 0, 0)),
        ),
        compiler_params=pltpu.CompilerParams(
            dimension_semantics=("parallel",)),   # batch steps are independent
    )(tt, u4)

    # --- wrapper layout plumbing: channel-major token slab (H, B*L) ----------
    T = B * L
    y_cm = conv_out.transpose(1, 0, 2, 3).reshape(H, T)             # (H, B*L)

    # token-block size for the projection kernel (lane dim = tokens)
    Tt = min(T, 512) if T % 128 == 0 else T

    b2 = b_out.reshape(2 * H, 1)
    out_cm = pl.pallas_call(
        glu_proj_kernel,
        out_shape=jax.ShapeDtypeStruct((H, T), jnp.float32),
        grid_spec=pltpu.PrefetchScalarGridSpec(
            num_scalar_prefetch=0,
            grid=(T // Tt,),
            in_specs=[
                pl.BlockSpec((H, Tt), lambda j: (0, j)),
                pl.BlockSpec((2 * H, H), lambda j: (0, 0)),
                pl.BlockSpec((2 * H, 1), lambda j: (0, 0)),
            ],
            out_specs=pl.BlockSpec((H, Tt), lambda j: (0, j)),
        ),
        compiler_params=pltpu.CompilerParams(
            dimension_semantics=("parallel",)),
    )(y_cm, W_out, b2)

    # back to the module's (B, H, L) layout
    return out_cm.reshape(H, B, L).transpose(1, 0, 2)


# ----------------------------------------------------------------------------
# plain-JAX reference mirroring the PyTorch forward (FFT conv path)
# ----------------------------------------------------------------------------
def s4d_reference(u, log_dt, C_re, C_im, log_A_real, A_imag, D, W_out, b_out):
    B, H, L = u.shape
    K = s4d_ssm_kernel(log_dt, C_re, C_im, log_A_real, A_imag, L)   # (H, L)
    k_f = jnp.fft.rfft(K, n=2 * L)                                  # (H, L+1)
    u_f = jnp.fft.rfft(u, n=2 * L)                                  # (B, H, L+1)
    y = jnp.fft.irfft(u_f * k_f[None], n=2 * L)[..., :L]            # (B, H, L)
    y = y + u * D[:, None]
    y = jax.nn.gelu(y, approximate=False)                           # exact GELU
    # output_linear: Conv1d(H, 2H, k=1) then GLU(dim=-2)
    z = jnp.einsum('ch,bhl->bcl', W_out, y) + b_out[None, :, None]
    a, g = z[:, :H, :], z[:, H:, :]
    return a * jax.nn.sigmoid(g)


# ----------------------------------------------------------------------------
if __name__ == "__main__":
    B, H, L, N = 4, 32, 16, 64          # batch, d_model, sequence, d_state
    N2 = N // 2
    f32 = jnp.float32

    key = jax.random.PRNGKey(0)
    ks = jax.random.split(key, 8)

    # --- S4DKernel params (mirrors the torch init) ---
    log_dt = (jax.random.uniform(ks[0], (H,), f32)
              * (math.log(0.1) - math.log(0.001)) + math.log(0.001))
    C_re = jax.random.normal(ks[1], (H, N2), f32) * (1.0 / math.sqrt(2.0))
    C_im = jax.random.normal(ks[2], (H, N2), f32) * (1.0 / math.sqrt(2.0))
    log_A_real = jnp.log(0.5 * jnp.ones((H, N2), f32))
    A_imag = math.pi * jnp.broadcast_to(jnp.arange(N2, dtype=f32), (H, N2))

    # --- S4D params ---
    D = jax.random.normal(ks[3], (H,), f32)
    W_out = jax.random.normal(ks[4], (2 * H, H), f32) * (1.0 / math.sqrt(H))
    b_out = jax.random.normal(ks[5], (2 * H,), f32) * 0.02

    # --- input (B, H, L), transposed=True layout ---
    u = jax.random.normal(ks[6], (B, H, L), f32)

    out = s4d_forward(u, log_dt, C_re, C_im, log_A_real, A_imag, D, W_out, b_out)
    out = jax.block_until_ready(out)

    ref = s4d_reference(u, log_dt, C_re, C_im, log_A_real, A_imag, D, W_out, b_out)

    assert out.shape == (B, H, L)
    if not bool(jnp.allclose(out, ref, atol=1e-3, rtol=1e-3)):
        raise SystemExit("mismatch vs FFT-based S4D reference: "
                         f"max abs err = {float(jnp.max(jnp.abs(out - ref)))}")
    print("KERNEL_OK")
</pallas_src>

<mosaic_0001>
module attributes {stable_mosaic.version = 11 : i64} {
  func.func @s4d_conv_kernel(%arg0: i32, %arg1: memref<32x16x16xf32, #tpu.memory_space<vmem>>, %arg2: memref<1x32x2x16xf32, #tpu.memory_space<vmem>>, %arg3: memref<1x32x2x16xf32, #tpu.memory_space<vmem>>) attributes {dimension_semantics = [#tpu.dimension_semantics<parallel>], iteration_bounds = array<i64: 2>, scalar_prefetch = 0 : i64, scratch_operands = 0 : i64, tpu.core_type = #tpu.core_type<tc>, window_params = [{pipeline_mode = #tpu.pipeline_mode<synchronous>, transform_indices = @transform_0, window_bounds = array<i64: 32, 16, 16>}, {transform_indices = @transform_1, window_bounds = array<i64: 1, 32, 2, 16>}, {transform_indices = @transform_2, window_bounds = array<i64: 1, 32, 2, 16>}]} {
    %c0 = arith.constant 0 : index
    %c0_0 = arith.constant 0 : index
    %c0_1 = arith.constant 0 : index
    %c0_2 = arith.constant 0 : index
    %0 = vector.load %arg2[%c0, %c0_0, %c0_1, %c0_2] : memref<1x32x2x16xf32, #tpu.memory_space<vmem>>, vector<1x32x2x16xf32>
    %1 = vector.shape_cast %0 : vector<1x32x2x16xf32> to vector<32x2x16xf32>
    %c0_3 = arith.constant 0 : index
    %c0_4 = arith.constant 0 : index
    %c0_5 = arith.constant 0 : index
    %2 = vector.load %arg1[%c0_3, %c0_4, %c0_5] : memref<32x16x16xf32, #tpu.memory_space<vmem>>, vector<32x16x16xf32>
    "tpu.trace_start"() <{level = 10 : i32, message = "hbt,htl->hbl"}> : () -> ()
    %cst = arith.constant dense<0.000000e+00> : vector<32x2x16xf32>
    %3 = tpu.matmul %1, %2, %cst {dimension_numbers = #tpu.dot_dimension_numbers<[2], [1], [1], [2], [0, 0, 0, 1, 1, 2], [0], [0]>} : vector<32x2x16xf32>, vector<32x16x16xf32>, vector<32x2x16xf32> -> vector<32x2x16xf32>
    "tpu.trace_stop"() : () -> ()
    %cst_6 = arith.constant 5.000000e-01 : f32
    %4 = vector.broadcast %cst_6 : f32 to vector<32x2x16xf32>
    %5 = arith.mulf %4, %3 : vector<32x2x16xf32>
    %cst_7 = arith.constant 0.707106769 : f32
    %6 = vector.broadcast %cst_7 : f32 to vector<32x2x16xf32>
    %7 = arith.mulf %3, %6 : vector<32x2x16xf32>
    %cst_8 = arith.constant 0.000000e+00 : f32
    %8 = vector.broadcast %cst_8 : f32 to vector<32x2x16xf32>
    %9 = arith.cmpf oge, %7, %8 : vector<32x2x16xf32>
    %cst_9 = arith.constant 1.000000e+00 : f32
    %cst_10 = arith.constant -1.000000e+00 : f32
    %10 = vector.broadcast %cst_9 : f32 to vector<32x2x16xf32>
    %11 = vector.broadcast %cst_10 : f32 to vector<32x2x16xf32>
    %12 = arith.select %9, %10, %11 : vector<32x2x16xi1>, vector<32x2x16xf32>
    %13 = math.absf %7 : vector<32x2x16xf32>
    %cst_11 = arith.constant 0.327591091 : f32
    %14 = vector.broadcast %cst_11 : f32 to vector<32x2x16xf32>
    %15 = arith.mulf %14, %13 : vector<32x2x16xf32>
    %cst_12 = arith.constant 1.000000e+00 : f32
    %16 = vector.broadcast %cst_12 : f32 to vector<32x2x16xf32>
    %17 = arith.addf %16, %15 : vector<32x2x16xf32>
    %cst_13 = arith.constant 1.000000e+00 : f32
    %18 = vector.broadcast %cst_13 : f32 to vector<32x2x16xf32>
    %19 = arith.divf %18, %17 : vector<32x2x16xf32>
    %cst_14 = arith.constant 1.06140542 : f32
    %20 = vector.broadcast %cst_14 : f32 to vector<32x2x16xf32>
    %21 = arith.mulf %20, %19 : vector<32x2x16xf32>
    %cst_15 = arith.constant -1.45315206 : f32
    %22 = vector.broadcast %cst_15 : f32 to vector<32x2x16xf32>
    %23 = arith.addf %21, %22 : vector<32x2x16xf32>
    %24 = arith.mulf %23, %19 : vector<32x2x16xf32>
    %cst_16 = arith.constant 1.42141378 : f32
    %25 = vector.broadcast %cst_16 : f32 to vector<32x2x16xf32>
    %26 = arith.addf %24, %25 : vector<32x2x16xf32>
    %27 = arith.mulf %26, %19 : vector<32x2x16xf32>
    %cst_17 = arith.constant -0.284496725 : f32
    %28 = vector.broadcast %cst_17 : f32 to vector<32x2x16xf32>
    %29 = arith.addf %27, %28 : vector<32x2x16xf32>
    %30 = arith.mulf %29, %19 : vector<32x2x16xf32>
    %cst_18 = arith.constant 0.254829586 : f32
    %31 = vector.broadcast %cst_18 : f32 to vector<32x2x16xf32>
    %32 = arith.addf %30, %31 : vector<32x2x16xf32>
    %33 = arith.mulf %32, %19 : vector<32x2x16xf32>
    %cst_19 = arith.constant 0.000000e+00 : f32
    %34 = vector.broadcast %cst_19 : f32 to vector<32x2x16xf32>
    %35 = arith.subf %34, %13 : vector<32x2x16xf32>
    %36 = arith.mulf %35, %13 : vector<32x2x16xf32>
    %37 = math.exp %36 : vector<32x2x16xf32>
    %38 = arith.mulf %33, %37 : vector<32x2x16xf32>
    %cst_20 = arith.constant 1.000000e+00 : f32
    %39 = vector.broadcast %cst_20 : f32 to vector<32x2x16xf32>
    %40 = arith.subf %39, %38 : vector<32x2x16xf32>
    %41 = arith.mulf %12, %40 : vector<32x2x16xf32>
    %cst_21 = arith.constant 1.000000e+00 : f32
    %42 = vector.broadcast %cst_21 : f32 to vector<32x2x16xf32>
    %43 = arith.addf %42, %41 : vector<32x2x16xf32>
    %44 = arith.mulf %5, %43 : vector<32x2x16xf32>
    %c0_22 = arith.constant 0 : index
    %c0_23 = arith.constant 0 : index
    %c0_24 = arith.constant 0 : index
    %c0_25 = arith.constant 0 : index
    %45 = vector.load %arg3[%c0_22, %c0_23, %c0_24, %c0_25] : memref<1x32x2x16xf32, #tpu.memory_space<vmem>>, vector<1x32x2x16xf32>
    %46 = vector.shape_cast %45 : vector<1x32x2x16xf32> to vector<32x2x16xf32>
    %47 = vector.shape_cast %44 : vector<32x2x16xf32> to vector<1x32x2x16xf32>
    tpu.vector_store %arg3[%c0_22, %c0_23, %c0_24, %c0_25], %47 {strides = array<i32>} : memref<1x32x2x16xf32, #tpu.memory_space<vmem>>, vector<1x32x2x16xf32>,
    return
  }
  func.func @transform_0(%arg0: i32) -> (i32, i32, i32) {
    %c0_i32 = arith.constant 0 : i32
    %c0_i32_0 = arith.constant 0 : i32
    %c0_i32_1 = arith.constant 0 : i32
    %c0_i32_2 = arith.constant 0 : i32
    return %c0_i32, %c0_i32_0, %c0_i32_1 : i32, i32, i32
  }
  func.func @transform_1(%arg0: i32) -> (i32, i32, i32, i32) {
    %c0_i32 = arith.constant 0 : i32
    %c0_i32_0 = arith.constant 0 : i32
    %c0_i32_1 = arith.constant 0 : i32
    %c0_i32_2 = arith.constant 0 : i32
    return %arg0, %c0_i32, %c0_i32_0, %c0_i32_1 : i32, i32, i32, i32
  }
  func.func @transform_2(%arg0: i32) -> (i32, i32, i32, i32) {
    %c0_i32 = arith.constant 0 : i32
    %c0_i32_0 = arith.constant 0 : i32
    %c0_i32_1 = arith.constant 0 : i32
    %c0_i32_2 = arith.constant 0 : i32
    return %arg0, %c0_i32, %c0_i32_0, %c0_i32_1 : i32, i32, i32, i32
  }
}

</mosaic_0001>

<llo_original>
// kernel: tpu_custom_call.1
$region0: #{tpu_custom_call.1}
  #allocation0 [shape = 'u32[]', space=smem, size = 0x4, offset = 0x4, fixed_abs, tag = 'smem constant byte address 0x4 - core index']
  #allocation1 [shape = 'u32[144,128]{1,0:T(1,128)}', space=vmem, size = 0x12000, scoped, tag = 'internal scratch']
  %s0 = inlined_call_operand.vmem [shape: f32[32,16,16], index: 0, kind: input, shape index: {}]
  %s1 = inlined_call_operand.vmem [shape: f32[2,32,2,16], index: 1, kind: input, shape index: {}]
  %s2 = inlined_call_operand.vmem [shape: f32[2,32,2,16], index: 2, kind: output, shape index: {}]
  %s3 = sld [smem:[#allocation0]]
  $region41: #{tpu_custom_call.1} parent=0
    _
  %s5 = ssub.s32 1, %s3
  %s6 = scalar_select 0, %s5, %s3
  loop: start=0, step=1, limit=4
  $region2: #{tpu_custom_call.1} parent=0 // loop_pre_header
    _
  $region3: #{tpu_custom_call.1} parent=0 // loop_header
    %s8 = sphi 0, %s12
    %p9 = scmp.ge.s32.totalorder %s8, 4
    %s16 = sphi 0, %s16
    %s18 = sphi 0, %s16
    %s19 = sphi 0, %s18
    %s33 = sphi 0, %s19
    %s39 = sphi 0, %s41
    %s42 = sphi 0, %s39
    %s43 = sphi 0, %s42
    %s59 = sphi 0, %s43
    %s65 = sphi 0, %s67
    %s68 = sphi 0, %s65
    %s69 = sphi 0, %s68
    %s85 = sphi 0, %s69
  $region4: #{tpu_custom_call.1} parent=0 // loop_header_branch
    %11 = sbr.rel (%p9) target = $region8
  $region5: #{tpu_custom_call.1} parent=0 // loop_body
    %s13 = ssub.s32 %s8, 1
    %s14 = ssub.s32 %s8, 2
    %s15 = sadd.s32 %s8, 1
    %s17 = sadd.s32 %s16, 1
    %p20 = scmp.eq.s32.totalorder %s8, 1
    %p21 = scmp.ne.s32.totalorder %s16, %s18
    %p22 = scmp.eq.s32.totalorder %s8, 0
    %p23 = por %p21, %p22
    %p24 = scmp.ne.s32.totalorder %s16, %s18
    %p25 = scmp.eq.s32.totalorder %s13, 1
    %p26 = por %p24, %p25
    %p27 = scmp.ne.s32.totalorder %s18, %s19
    %p28 = scmp.eq.s32.totalorder %s13, 0
    %p29 = por %p27, %p28
    %p30 = scmp.ne.s32.totalorder %s18, %s19
    %p31 = scmp.eq.s32.totalorder %s14, 1
    %p32 = por %p30, %p31
    %p34 = scmp.ne.s32.totalorder %s19, %s33
    %p35 = scmp.eq.s32.totalorder %s14, 0
    %p36 = por %p34, %p35
    %s37 = ssub.s32 %s8, %s15
    %p38 = scmp.eq.s32.totalorder %s37, 0
    %s40 = sadd.s32 %s39, 1
    %s41 = scalar_select %p38, %s39, %s40
    %p44 = pneg %p38
    %p45 = scmp.eq.s32.totalorder %s8, 1
    %p46 = por %p44, %p45
    %p47 = scmp.ne.s32.totalorder %s39, %s42
    %p48 = scmp.eq.s32.totalorder %s8, 0
    %p49 = por %p47, %p48
    %p50 = scmp.ne.s32.totalorder %s39, %s42
    %p51 = scmp.eq.s32.totalorder %s13, 1
    %p52 = por %p50, %p51
    %p53 = scmp.ne.s32.totalorder %s42, %s43
    %p54 = scmp.eq.s32.totalorder %s13, 0
    %p55 = por %p53, %p54
    %p56 = scmp.ne.s32.totalorder %s42, %s43
    %p57 = scmp.eq.s32.totalorder %s14, 1
    %p58 = por %p56, %p57
    %p60 = scmp.ne.s32.totalorder %s43, %s59
    %p61 = scmp.eq.s32.totalorder %s14, 0
    %p62 = por %p60, %p61
    %s63 = ssub.s32 %s8, %s15
    %p64 = scmp.eq.s32.totalorder %s63, 0
    %s66 = sadd.s32 %s65, 1
    %s67 = scalar_select %p64, %s65, %s66
    %p70 = pneg %p64
    %p71 = scmp.eq.s32.totalorder %s8, 1
    %p72 = por %p70, %p71
    %p73 = scmp.ne.s32.totalorder %s65, %s68
    %p74 = scmp.eq.s32.totalorder %s8, 0
    %p75 = por %p73, %p74
    %p76 = scmp.ne.s32.totalorder %s65, %s68
    %p77 = scmp.eq.s32.totalorder %s13, 1
    %p78 = por %p76, %p77
    %p79 = scmp.ne.s32.totalorder %s68, %s69
    %p80 = scmp.eq.s32.totalorder %s13, 0
    %p81 = por %p79, %p80
    %p82 = scmp.ne.s32.totalorder %s68, %s69
    %p83 = scmp.eq.s32.totalorder %s14, 1
    %p84 = por %p82, %p83
    %p86 = scmp.ne.s32.totalorder %s69, %s85
    %p87 = scmp.eq.s32.totalorder %s14, 0
    %p88 = por %p86, %p87
    %p89 = scmp.le.s32.totalorder 1, %s8
    %p90 = scmp.lt.s32.totalorder %s8, 3
    %p91 = pnand %p89, %p90
    %p92 = pneg %p91
    // Predicated region
    $region9: #{tpu_custom_call.1} parent=5 // pred_check
      _
    $region10: #{tpu_custom_call.1} parent=5 // pred_check_branch
      %94 = sbr.rel (%p91) target = $region12
    $region11: #{tpu_custom_call.1} parent=5 // pred_region
      %s95 = ssub.s32 %s8, 1
      // Predicated region
      $region13: #{tpu_custom_call.1} parent=11 // pred_check
        %p96 = pneg %p29
      $region14: #{tpu_custom_call.1} parent=11 // pred_check_branch
        %98 = sbr.rel (%p96) target = $region16
      $region15: #{tpu_custom_call.1} parent=11 // pred_region
        _
      $region16: #{tpu_custom_call.1} parent=11 // pred_fallthru
        _
    $region12: #{tpu_custom_call.1} parent=5 // pred_fallthru
      _
    %p99 = scmp.lt.s32.totalorder %s8, 2
    // Predicated region
    $region17: #{tpu_custom_call.1} parent=5 // pred_check
      %p100 = pneg %p99
    $region18: #{tpu_custom_call.1} parent=5 // pred_check_branch
      %102 = sbr.rel (%p100) target = $region20
    $region19: #{tpu_custom_call.1} parent=5 // pred_region
      // Predicated region
      $region21: #{tpu_custom_call.1} parent=19 // pred_check
        %p103 = pneg %p49
      $region22: #{tpu_custom_call.1} parent=19 // pred_check_branch
        %105 = sbr.rel (%p103) target = $region24
      $region23: #{tpu_custom_call.1} parent=19 // pred_region
        %p106 = scmp.lt.s32.totalorder %s8, 1
        %s107 = scalar_select %p106, %s8, 1
        %s108 = smul.addr %s107, 32
        %s109 = smul.addr %s108, 2
        %s110 = scalar_lea.vmem %s1, %s109
      $region24: #{tpu_custom_call.1} parent=19 // pred_fallthru
        _
    $region20: #{tpu_custom_call.1} parent=5 // pred_fallthru
      _
    %p111 = scmp.le.s32.totalorder 1, %s8
    %p112 = scmp.lt.s32.totalorder %s8, 3
    %p113 = pnand %p111, %p112
    %p114 = pneg %p113
    // Predicated region
    $region25: #{tpu_custom_call.1} parent=5 // pred_check
      _
    $region26: #{tpu_custom_call.1} parent=5 // pred_check_branch
      %116 = sbr.rel (%p113) target = $region28
    $region27: #{tpu_custom_call.1} parent=5 // pred_region
      %s117 = ssub.s32 %s8, 1
      %p118 = pneg %p29
      %p119 = pneg %p26
      %p120 = scmp.lt.s32.totalorder %s13, 1
      %s121 = scalar_select %p120, %s13, 1
      %s122 = smul.addr %s121, 32
      %s123 = smul.addr %s122, 2
      %s124 = scalar_lea.vmem %s1, %s123
      %p125 = pneg %p55
      %p126 = pneg %p52
      %p127 = pneg %p81
      %p128 = pneg %p78
      %p129 = scmp.lt.s32.totalorder %s13, 1
      %s130 = scalar_select %p129, %s13, 1
      %s131 = smul.addr %s130, 32
      %s132 = smul.addr %s131, 2
      %s133 = scalar_lea.vmem %s2, %s132
      %p134 = scmp.lt.s32.totalorder %s13, 1
      %s135 = scalar_select %p134, %s13, 1
      %s136 = smul.addr %s135, 32
      %s137 = smul.addr %s136, 2
      %s138 = scalar_lea.vmem %s1, %s137
      %p139 = scmp.lt.s32.totalorder %s13, 1
      %s140 = scalar_select %p139, %s13, 1
      %s141 = smul.addr %s140, 32
      %s142 = smul.addr %s141, 2
      %s143 = scalar_lea.vmem %s2, %s142
      %v144 = vld [vmem:[%s138] sm:$0x3]
      %v145 = vld [vmem:[%s138 + $0x2] sm:$0x3]
      %v146 = vld [vmem:[%s138 + $0x4] sm:$0x3]
      %v147 = vld [vmem:[%s138 + $0x6] sm:$0x3]
      %v148 = vld [vmem:[%s138 + $0x8] sm:$0x3]
      %v149 = vld [vmem:[%s138 + $0xa] sm:$0x3]
      %v150 = vld [vmem:[%s138 + $0xc] sm:$0x3]
      %v151 = vld [vmem:[%s138 + $0xe] sm:$0x3]
      %v152 = vld [vmem:[%s138 + $0x10] sm:$0x3]
      %v153 = vld [vmem:[%s138 + $0x12] sm:$0x3]
      %v154 = vld [vmem:[%s138 + $0x14] sm:$0x3]
      %v155 = vld [vmem:[%s138 + $0x16] sm:$0x3]
      %v156 = vld [vmem:[%s138 + $0x18] sm:$0x3]
      %v157 = vld [vmem:[%s138 + $0x1a] sm:$0x3]
      %v158 = vld [vmem:[%s138 + $0x1c] sm:$0x3]
      %v159 = vld [vmem:[%s138 + $0x1e] sm:$0x3]
      %v160 = vld [vmem:[%s138 + $0x20] sm:$0x3]
      %v161 = vld [vmem:[%s138 + $0x22] sm:$0x3]
      %v162 = vld [vmem:[%s138 + $0x24] sm:$0x3]
      %v163 = vld [vmem:[%s138 + $0x26] sm:$0x3]
      %v164 = vld [vmem:[%s138 + $0x28] sm:$0x3]
      %v165 = vld [vmem:[%s138 + $0x2a] sm:$0x3]
      %v166 = vld [vmem:[%s138 + $0x2c] sm:$0x3]
      %v167 = vld [vmem:[%s138 + $0x2e] sm:$0x3]
      %v168 = vld [vmem:[%s138 + $0x30] sm:$0x3]
      %v169 = vld [vmem:[%s138 + $0x32] sm:$0x3]
      %v170 = vld [vmem:[%s138 + $0x34] sm:$0x3]
      %v171 = vld [vmem:[%s138 + $0x36] sm:$0x3]
      %v172 = vld [vmem:[%s138 + $0x38] sm:$0x3]
      %v173 = vld [vmem:[%s138 + $0x3a] sm:$0x3]
      %v174 = vld [vmem:[%s138 + $0x3c] sm:$0x3]
      %v175 = vld [vmem:[%s138 + $0x3e] sm:$0x3]
      %v176 = vld [vmem:[%s0] sm:$0xff]
      %v177 = vld [vmem:[%s0 + $0x8] sm:$0xff]
      %v178 = vld [vmem:[%s0 + $0x10] sm:$0xff]
      %v179 = vld [vmem:[%s0 + $0x18] sm:$0xff]
      %v180 = vld [vmem:[%s0 + $0x20] sm:$0xff]
      %v181 = vld [vmem:[%s0 + $0x28] sm:$0xff]
      %v182 = vld [vmem:[%s0 + $0x30] sm:$0xff]
      %v183 = vld [vmem:[%s0 + $0x38] sm:$0xff]
      %v184 = vld [vmem:[%s0 + $0x40] sm:$0xff]
      %v185 = vld [vmem:[%s0 + $0x48] sm:$0xff]
      %v186 = vld [vmem:[%s0 + $0x50] sm:$0xff]
      %v187 = vld [vmem:[%s0 + $0x58] sm:$0xff]
      %v188 = vld [vmem:[%s0 + $0x60] sm:$0xff]
      %v189 = vld [vmem:[%s0 + $0x68] sm:$0xff]
      %v190 = vld [vmem:[%s0 + $0x70] sm:$0xff]
      %v191 = vld [vmem:[%s0 + $0x78] sm:$0xff]
      %v192 = vld [vmem:[%s0 + $0x80] sm:$0xff]
      %v193 = vld [vmem:[%s0 + $0x88] sm:$0xff]
      %v194 = vld [vmem:[%s0 + $0x90] sm:$0xff]
      %v195 = vld [vmem:[%s0 + $0x98] sm:$0xff]
      %v196 = vld [vmem:[%s0 + $0xa0] sm:$0xff]
      %v197 = vld [vmem:[%s0 + $0xa8] sm:$0xff]
      %v198 = vld [vmem:[%s0 + $0xb0] sm:$0xff]
      %v199 = vld [vmem:[%s0 + $0xb8] sm:$0xff]
      %v200 = vld [vmem:[%s0 + $0xc0] sm:$0xff]
      %v201 = vld [vmem:[%s0 + $0xc8] sm:$0xff]
      %v202 = vld [vmem:[%s0 + $0xd0] sm:$0xff]
      %v203 = vld [vmem:[%s0 + $0xd8] sm:$0xff]
      %v204 = vld [vmem:[%s0 + $0xe0] sm:$0xff]
      %v205 = vld [vmem:[%s0 + $0xe8] sm:$0xff]
      %v206 = vld [vmem:[%s0 + $0xf0] sm:$0xff]
      %v207 = vld [vmem:[%s0 + $0xf8] sm:$0xff]
      %v208 = vld [vmem:[%s0 + $0x100] sm:$0xff]
      %v209 = vld [vmem:[%s0 + $0x108] sm:$0xff]
      %v210 = vld [vmem:[%s0 + $0x110] sm:$0xff]
      %v211 = vld [vmem:[%s0 + $0x118] sm:$0xff]
      %v212 = vld [vmem:[%s0 + $0x120] sm:$0xff]
      %v213 = vld [vmem:[%s0 + $0x128] sm:$0xff]
      %v214 = vld [vmem:[%s0 + $0x130] sm:$0xff]
      %v215 = vld [vmem:[%s0 + $0x138] sm:$0xff]
      %v216 = vld [vmem:[%s0 + $0x140] sm:$0xff]
      %v217 = vld [vmem:[%s0 + $0x148] sm:$0xff]
      %v218 = vld [vmem:[%s0 + $0x150] sm:$0xff]
      %v219 = vld [vmem:[%s0 + $0x158] sm:$0xff]
      %v220 = vld [vmem:[%s0 + $0x160] sm:$0xff]
      %v221 = vld [vmem:[%s0 + $0x168] sm:$0xff]
      %v222 = vld [vmem:[%s0 + $0x170] sm:$0xff]
      %v223 = vld [vmem:[%s0 + $0x178] sm:$0xff]
      %v224 = vld [vmem:[%s0 + $0x180] sm:$0xff]
      %v225 = vld [vmem:[%s0 + $0x188] sm:$0xff]
      %v226 = vld [vmem:[%s0 + $0x190] sm:$0xff]
      %v227 = vld [vmem:[%s0 + $0x198] sm:$0xff]
      %v228 = vld [vmem:[%s0 + $0x1a0] sm:$0xff]
      %v229 = vld [vmem:[%s0 + $0x1a8] sm:$0xff]
      %v230 = vld [vmem:[%s0 + $0x1b0] sm:$0xff]
      %v231 = vld [vmem:[%s0 + $0x1b8] sm:$0xff]
      %v232 = vld [vmem:[%s0 + $0x1c0] sm:$0xff]
      %v233 = vld [vmem:[%s0 + $0x1c8] sm:$0xff]
      %v234 = vld [vmem:[%s0 + $0x1d0] sm:$0xff]
      %v235 = vld [vmem:[%s0 + $0x1d8] sm:$0xff]
      %v236 = vld [vmem:[%s0 + $0x1e0] sm:$0xff]
      %v237 = vld [vmem:[%s0 + $0x1e8] sm:$0xff]
      %v238 = vld [vmem:[%s0 + $0x1f0] sm:$0xff]
      %v239 = vld [vmem:[%s0 + $0x1f8] sm:$0xff]
      %vm240 = vcmask 130048
      %v242 = vsel %vm240, %v144, 0
      %244 = vmatprep.subr.mxu0 0.0
      %245 = vmatpush1.msra.mxu0 %v176
      %246 = vmatprep.subr.mxu0 0.0
      %247 = vmatpush1.msra.mxu0 %v177
      %248 = vmatprep.subr.mxu0 0.0
      %249 = vmatpush1.msra.mxu0 0.0
      %250 = vmatprep.subr.mxu0 0.0
      %251 = vmatpush1.msra.mxu0 0.0
      %252 = vmatprep.subr.mxu0 0.0
      %253 = vmatpush1.msra.mxu0 0.0
      %254 = vmatprep.subr.mxu0 0.0
      %255 = vmatpush1.msra.mxu0 0.0
      %256 = vmatprep.subr.mxu0 0.0
      %257 = vmatpush1.msra.mxu0 0.0
      %258 = vmatprep.subr.mxu0 0.0
      %259 = vmatpush1.msra.mxu0 0.0
      %260 = vmatprep.subr.mxu0 0.0
      %261 = vmatpush1.msra.mxu0 0.0
      %262 = vmatprep.subr.mxu0 0.0
      %263 = vmatpush1.msra.mxu0 0.0
      %264 = vmatprep.subr.mxu0 0.0
      %265 = vmatpush1.msra.mxu0 0.0
      %266 = vmatprep.subr.mxu0 0.0
      %267 = vmatpush1.msra.mxu0 0.0
      %268 = vmatprep.subr.mxu0 0.0
      %269 = vmatpush1.msra.mxu0 0.0
      %270 = vmatprep.subr.mxu0 0.0
      %271 = vmatpush1.msra.mxu0 0.0
      %272 = vmatprep.subr.mxu0 0.0
      %273 = vmatpush1.msra.mxu0 0.0
      %274 = vmatprep.subr.mxu0 0.0
      %275 = vmatpush1.msra.mxu0 0.0
      %276 = vmatprep.subr.mxu0 0.0
      %277 = vmatpush1.msra.mxu0 0.0
      %278 = vmatprep.subr.mxu0 0.0
      %279 = vmatpush1.msra.mxu0 0.0
      %280 = vmatprep.subr.mxu0 0.0
      %281 = vmatpush1.msra.mxu0 0.0
      %282 = vmatprep.subr.mxu0 0.0
      %283 = vmatpush1.msra.mxu0 0.0
      %284 = vmatprep.subr.mxu0 0.0
      %285 = vmatpush1.msra.mxu0 0.0
      %286 = vmatprep.subr.mxu0 0.0
      %287 = vmatpush1.msra.mxu0 0.0
      %288 = vmatprep.subr.mxu0 0.0
      %289 = vmatpush1.msra.mxu0 0.0
      %290 = vmatprep.subr.mxu0 0.0
      %291 = vmatpush1.msra.mxu0 0.0
      %292 = vmatprep.subr.mxu0 0.0
      %293 = vmatpush1.msra.mxu0 0.0
      %294 = vmatprep.subr.mxu0 0.0
      %295 = vmatpush1.msra.mxu0 0.0
      %296 = vmatprep.subr.mxu0 0.0
      %297 = vmatpush1.msra.mxu0 0.0
      %298 = vmatprep.subr.mxu0 0.0
      %299 = vmatpush1.msra.mxu0 0.0
      %300 = vmatprep.subr.mxu0 0.0
      %301 = vmatpush1.msra.mxu0 0.0
      %302 = vmatprep.subr.mxu0 0.0
      %303 = vmatpush1.msra.mxu0 0.0
      %304 = vmatprep.subr.mxu0 0.0
      %305 = vmatpush1.msra.mxu0 0.0
      %306 = vmatprep.subr.mxu0 0.0
      %307 = vmatpush1.msra.mxu0 0.0
      %308 = vmatprep.mubr.f32.mxu0 0.0
      %309 = vmatmul.mubr.f32.gmra.mrb[0].mxu0 %v242
      %v310 = vpop.f32.mrb[0].mxu0
      %v311 = vadd.f32 0.0, %v310
      %v312 = vpop.f32.mrb[0].mxu0
      %313 = vdwg.mxu0
      %v315 = vsel %vm240, %v145, 0
      %317 = vmatprep.subr.mxu0 0.0
      %318 = vmatpush1.msra.mxu0 %v178
      %319 = vmatprep.subr.mxu0 0.0
      %320 = vmatpush1.msra.mxu0 %v179
      %321 = vmatprep.subr.mxu0 0.0
      %322 = vmatpush1.msra.mxu0 0.0
      %323 = vmatprep.subr.mxu0 0.0
      %324 = vmatpush1.msra.mxu0 0.0
      %325 = vmatprep.subr.mxu0 0.0
      %326 = vmatpush1.msra.mxu0 0.0
      %327 = vmatprep.subr.mxu0 0.0
      %328 = vmatpush1.msra.mxu0 0.0
      %329 = vmatprep.subr.mxu0 0.0
      %330 = vmatpush1.msra.mxu0 0.0
      %331 = vmatprep.subr.mxu0 0.0
      %332 = vmatpush1.msra.mxu0 0.0
      %333 = vmatprep.subr.mxu0 0.0
      %334 = vmatpush1.msra.mxu0 0.0
      %335 = vmatprep.subr.mxu0 0.0
      %336 = vmatpush1.msra.mxu0 0.0
      %337 = vmatprep.subr.mxu0 0.0
      %338 = vmatpush1.msra.mxu0 0.0
      %339 = vmatprep.subr.mxu0 0.0
      %340 = vmatpush1.msra.mxu0 0.0
      %341 = vmatprep.subr.mxu0 0.0
      %342 = vmatpush1.msra.mxu0 0.0
      %343 = vmatprep.subr.mxu0 0.0
      %344 = vmatpush1.msra.mxu0 0.0
      %345 = vmatprep.subr.mxu0 0.0
      %346 = vmatpush1.msra.mxu0 0.0
      %347 = vmatprep.subr.mxu0 0.0
      %348 = vmatpush1.msra.mxu0 0.0
      %349 = vmatprep.subr.mxu0 0.0
      %350 = vmatpush1.msra.mxu0 0.0
      %351 = vmatprep.subr.mxu0 0.0
      %352 = vmatpush1.msra.mxu0 0.0
      %353 = vmatprep.subr.mxu0 0.0
      %354 = vmatpush1.msra.mxu0 0.0
      %355 = vmatprep.subr.mxu0 0.0
      %356 = vmatpush1.msra.mxu0 0.0
      %357 = vmatprep.subr.mxu0 0.0
      %358 = vmatpush1.msra.mxu0 0.0
      %359 = vmatprep.subr.mxu0 0.0
      %360 = vmatpush1.msra.mxu0 0.0
      %361 = vmatprep.subr.mxu0 0.0
      %362 = vmatpush1.msra.mxu0 0.0
      %363 = vmatprep.subr.mxu0 0.0
      %364 = vmatpush1.msra.mxu0 0.0
      %365 = vmatprep.subr.mxu0 0.0
      %366 = vmatpush1.msra.mxu0 0.0
      %367 = vmatprep.subr.mxu0 0.0
      %368 = vmatpush1.msra.mxu0 0.0
      %369 = vmatprep.subr.mxu0 0.0
      %370 = vmatpush1.msra.mxu0 0.0
      %371 = vmatprep.subr.mxu0 0.0
      %372 = vmatpush1.msra.mxu0 0.0
      %373 = vmatprep.subr.mxu0 0.0
      %374 = vmatpush1.msra.mxu0 0.0
      %375 = vmatprep.subr.mxu0 0.0
      %376 = vmatpush1.msra.mxu0 0.0
      %377 = vmatprep.subr.mxu0 0.0
      %378 = vmatpush1.msra.mxu0 0.0
      %379 = vmatprep.subr.mxu0 0.0
      %380 = vmatpush1.msra.mxu0 0.0
      %381 = vmatprep.mubr.f32.mxu0 0.0
      %382 = vmatmul.mubr.f32.gmra.mrb[0].mxu0 %v315
      %v383 = vpop.f32.mrb[0].mxu0
      %v384 = vadd.f32 0.0, %v383
      %v385 = vpop.f32.mrb[0].mxu0
      %386 = vdwg.mxu0
      %v388 = vsel %vm240, %v146, 0
      %390 = vmatprep.subr.mxu0 0.0
      %391 = vmatpush1.msra.mxu0 %v180
      %392 = vmatprep.subr.mxu0 0.0
      %393 = vmatpush1.msra.mxu0 %v181
      %394 = vmatprep.subr.mxu0 0.0
      %395 = vmatpush1.msra.mxu0 0.0
      %396 = vmatprep.subr.mxu0 0.0
      %397 = vmatpush1.msra.mxu0 0.0
      %398 = vmatprep.subr.mxu0 0.0
      %399 = vmatpush1.msra.mxu0 0.0
      %400 = vmatprep.subr.mxu0 0.0
      %401 = vmatpush1.msra.mxu0 0.0
      %402 = vmatprep.subr.mxu0 0.0
      %403 = vmatpush1.msra.mxu0 0.0
      %404 = vmatprep.subr.mxu0 0.0
      %405 = vmatpush1.msra.mxu0 0.0
      %406 = vmatprep.subr.mxu0 0.0
      %407 = vmatpush1.msra.mxu0 0.0
      %408 = vmatprep.subr.mxu0 0.0
      %409 = vmatpush1.msra.mxu0 0.0
      %410 = vmatprep.subr.mxu0 0.0
      %411 = vmatpush1.msra.mxu0 0.0
      %412 = vmatprep.subr.mxu0 0.0
      %413 = vmatpush1.msra.mxu0 0.0
      %414 = vmatprep.subr.mxu0 0.0
      %415 = vmatpush1.msra.mxu0 0.0
      %416 = vmatprep.subr.mxu0 0.0
      %417 = vmatpush1.msra.mxu0 0.0
      %418 = vmatprep.subr.mxu0 0.0
      %419 = vmatpush1.msra.mxu0 0.0
      %420 = vmatprep.subr.mxu0 0.0
      %421 = vmatpush1.msra.mxu0 0.0
      %422 = vmatprep.subr.mxu0 0.0
      %423 = vmatpush1.msra.mxu0 0.0
      %424 = vmatprep.subr.mxu0 0.0
      %425 = vmatpush1.msra.mxu0 0.0
      %426 = vmatprep.subr.mxu0 0.0
      %427 = vmatpush1.msra.mxu0 0.0
      %428 = vmatprep.subr.mxu0 0.0
      %429 = vmatpush1.msra.mxu0 0.0
      %430 = vmatprep.subr.mxu0 0.0
      %431 = vmatpush1.msra.mxu0 0.0
      %432 = vmatprep.subr.mxu0 0.0
      %433 = vmatpush1.msra.mxu0 0.0
      %434 = vmatprep.subr.mxu0 0.0
      %435 = vmatpush1.msra.mxu0 0.0
      %436 = vmatprep.subr.mxu0 0.0
      %437 = vmatpush1.msra.mxu0 0.0
      %438 = vmatprep.subr.mxu0 0.0
      %439 = vmatpush1.msra.mxu0 0.0
      %440 = vmatprep.subr.mxu0 0.0
      %441 = vmatpush1.msra.mxu0 0.0
      %442 = vmatprep.subr.mxu0 0.0
      %443 = vmatpush1.msra.mxu0 0.0
      %444 = vmatprep.subr.mxu0 0.0
      %445 = vmatpush1.msra.mxu0 0.0
      %446 = vmatprep.subr.mxu0 0.0
      %447 = vmatpush1.msra.mxu0 0.0
      %448 = vmatprep.subr.mxu0 0.0
      %449 = vmatpush1.msra.mxu0 0.0
      %450 = vmatprep.subr.mxu0 0.0
      %451 = vmatpush1.msra.mxu0 0.0
      %452 = vmatprep.subr.mxu0 0.0
      %453 = vmatpush1.msra.mxu0 0.0
      %454 = vmatprep.mubr.f32.mxu0 0.0
      %455 = vmatmul.mubr.f32.gmra.mrb[0].mxu0 %v388
      %v456 = vpop.f32.mrb[0].mxu0
      %v457 = vadd.f32 0.0, %v456
      %v458 = vpop.f32.mrb[0].mxu0
      %459 = vdwg.mxu0
      %v461 = vsel %vm240, %v147, 0
      %463 = vmatprep.subr.mxu0 0.0
      %464 = vmatpush1.msra.mxu0 %v182
      %465 = vmatprep.subr.mxu0 0.0
      %466 = vmatpush1.msra.mxu0 %v183
      %467 = vmatprep.subr.mxu0 0.0
      %468 = vmatpush1.msra.mxu0 0.0
      %469 = vmatprep.subr.mxu0 0.0
      %470 = vmatpush1.msra.mxu0 0.0
      %471 = vmatprep.subr.mxu0 0.0
      %472 = vmatpush1.msra.mxu0 0.0
      %473 = vmatprep.subr.mxu0 0.0
      %474 = vmatpush1.msra.mxu0 0.0
      %475 = vmatprep.subr.mxu0 0.0
      %476 = vmatpush1.msra.mxu0 0.0
      %477 = vmatprep.subr.mxu0 0.0
      %478 = vmatpush1.msra.mxu0 0.0
      %479 = vmatprep.subr.mxu0 0.0
      %480 = vmatpush1.msra.mxu0 0.0
      %481 = vmatprep.subr.mxu0 0.0
      %482 = vmatpush1.msra.mxu0 0.0
      %483 = vmatprep.subr.mxu0 0.0
      %484 = vmatpush1.msra.mxu0 0.0
      %485 = vmatprep.subr.mxu0 0.0
      %486 = vmatpush1.msra.mxu0 0.0
      %487 = vmatprep.subr.mxu0 0.0
      %488 = vmatpush1.msra.mxu0 0.0
      %489 = vmatprep.subr.mxu0 0.0
      %490 = vmatpush1.msra.mxu0 0.0
      %491 = vmatprep.subr.mxu0 0.0
      %492 = vmatpush1.msra.mxu0 0.0
      %493 = vmatprep.subr.mxu0 0.0
      %494 = vmatpush1.msra.mxu0 0.0
      %495 = vmatprep.subr.mxu0 0.0
      %496 = vmatpush1.msra.mxu0 0.0
      %497 = vmatprep.subr.mxu0 0.0
      %498 = vmatpush1.msra.mxu0 0.0
      %499 = vmatprep.subr.mxu0 0.0
      %500 = vmatpush1.msra.mxu0 0.0
      %501 = vmatprep.subr.mxu0 0.0
      %502 = vmatpush1.msra.mxu0 0.0
      %503 = vmatprep.subr.mxu0 0.0
      %504 = vmatpush1.msra.mxu0 0.0
      %505 = vmatprep.subr.mxu0 0.0
      %506 = vmatpush1.msra.mxu0 0.0
      %507 = vmatprep.subr.mxu0 0.0
      %508 = vmatpush1.msra.mxu0 0.0
      %509 = vmatprep.subr.mxu0 0.0
      %510 = vmatpush1.msra.mxu0 0.0
      %511 = vmatprep.subr.mxu0 0.0
      %512 = vmatpush1.msra.mxu0 0.0
      %513 = vmatprep.subr.mxu0 0.0
      %514 = vmatpush1.msra.mxu0 0.0
      %515 = vmatprep.subr.mxu0 0.0
      %516 = vmatpush1.msra.mxu0 0.0
      %517 = vmatprep.subr.mxu0 0.0
      %518 = vmatpush1.msra.mxu0 0.0
      %519 = vmatprep.subr.mxu0 0.0
      %520 = vmatpush1.msra.mxu0 0.0
      %521 = vmatprep.subr.mxu0 0.0
      %522 = vmatpush1.msra.mxu0 0.0
      %523 = vmatprep.subr.mxu0 0.0
      %524 = vmatpush1.msra.mxu0 0.0
      %525 = vmatprep.subr.mxu0 0.0
      %526 = vmatpush1.msra.mxu0 0.0
      %527 = vmatprep.mubr.f32.mxu0 0.0
      %528 = vmatmul.mubr.f32.gmra.mrb[0].mxu0 %v461
      %v529 = vpop.f32.mrb[0].mxu0
      %v530 = vadd.f32 0.0, %v529
      %v531 = vpop.f32.mrb[0].mxu0
      %532 = vdwg.mxu0
      %v534 = vsel %vm240, %v148, 0
      %536 = vmatprep.subr.mxu0 0.0
      %537 = vmatpush1.msra.mxu0 %v184
      %538 = vmatprep.subr.mxu0 0.0
      %539 = vmatpush1.msra.mxu0 %v185
      %540 = vmatprep.subr.mxu0 0.0
      %541 = vmatpush1.msra.mxu0 0.0
      %542 = vmatprep.subr.mxu0 0.0
      %543 = vmatpush1.msra.mxu0 0.0
      %544 = vmatprep.subr.mxu0 0.0
      %545 = vmatpush1.msra.mxu0 0.0
      %546 = vmatprep.subr.mxu0 0.0
      %547 = vmatpush1.msra.mxu0 0.0
      %548 = vmatprep.subr.mxu0 0.0
      %549 = vmatpush1.msra.mxu0 0.0
      %550 = vmatprep.subr.mxu0 0.0
      %551 = vmatpush1.msra.mxu0 0.0
      %552 = vmatprep.subr.mxu0 0.0
      %553 = vmatpush1.msra.mxu0 0.0
      %554 = vmatprep.subr.mxu0 0.0
      %555 = vmatpush1.msra.mxu0 0.0
      %556 = vmatprep.subr.mxu0 0.0
      %557 = vmatpush1.msra.mxu0 0.0
      %558 = vmatprep.subr.mxu0 0.0
      %559 = vmatpush1.msra.mxu0 0.0
      %560 = vmatprep.subr.mxu0 0.0
      %561 = vmatpush1.msra.mxu0 0.0
      %562 = vmatprep.subr.mxu0 0.0
      %563 = vmatpush1.msra.mxu0 0.0
      %564 = vmatprep.subr.mxu0 0.0
      %565 = vmatpush1.msra.mxu0 0.0
      %566 = vmatprep.subr.mxu0 0.0
      %567 = vmatpush1.msra.mxu0 0.0
      %568 = vmatprep.subr.mxu0 0.0
      %569 = vmatpush1.msra.mxu0 0.0
      %570 = vmatprep.subr.mxu0 0.0
      %571 = vmatpush1.msra.mxu0 0.0
      %572 = vmatprep.subr.mxu0 0.0
      %573 = vmatpush1.msra.mxu0 0.0
      %574 = vmatprep.subr.mxu0 0.0
      %575 = vmatpush1.msra.mxu0 0.0
      %576 = vmatprep.subr.mxu0 0.0
      %577 = vmatpush1.msra.mxu0 0.0
      %578 = vmatprep.subr.mxu0 0.0
      %579 = vmatpush1.msra.mxu0 0.0
      %580 = vmatprep.subr.mxu0 0.0
      %581 = vmatpush1.msra.mxu0 0.0
      %582 = vmatprep.subr.mxu0 0.0
      %583 = vmatpush1.msra.mxu0 0.0
      %584 = vmatprep.subr.mxu0 0.0
      %585 = vmatpush1.msra.mxu0 0.0
      %586 = vmatprep.subr.mxu0 0.0
      %587 = vmatpush1.msra.mxu0 0.0
      %588 = vmatprep.subr.mxu0 0.0
      %589 = vmatpush1.msra.mxu0 0.0
      %590 = vmatprep.subr.mxu0 0.0
      %591 = vmatpush1.msra.mxu0 0.0
      %592 = vmatprep.subr.mxu0 0.0
      %593 = vmatpush1.msra.mxu0 0.0
      %594 = vmatprep.subr.mxu0 0.0
      %595 = vmatpush1.msra.mxu0 0.0
      %596 = vmatprep.subr.mxu0 0.0
      %597 = vmatpush1.msra.mxu0 0.0
      %598 = vmatprep.subr.mxu0 0.0
      %599 = vmatpush1.msra.mxu0 0.0
      %600 = vmatprep.mubr.f32.mxu0 0.0
      %601 = vmatmul.mubr.f32.gmra.mrb[0].mxu0 %v534
      %v602 = vpop.f32.mrb[0].mxu0
      %v603 = vadd.f32 0.0, %v602
      %v604 = vpop.f32.mrb[0].mxu0
      %605 = vdwg.mxu0
      %v607 = vsel %vm240, %v149, 0
      %609 = vmatprep.subr.mxu0 0.0
      %610 = vmatpush1.msra.mxu0 %v186
      %611 = vmatprep.subr.mxu0 0.0
      %612 = vmatpush1.msra.mxu0 %v187
      %613 = vmatprep.subr.mxu0 0.0
      %614 = vmatpush1.msra.mxu0 0.0
      %615 = vmatprep.subr.mxu0 0.0
      %616 = vmatpush1.msra.mxu0 0.0
      %617 = vmatprep.subr.mxu0 0.0
      %618 = vmatpush1.msra.mxu0 0.0
      %619 = vmatprep.subr.mxu0 0.0
      %620 = vmatpush1.msra.mxu0 0.0
      %621 = vmatprep.subr.mxu0 0.0
      %622 = vmatpush1.msra.mxu0 0.0
      %623 = vmatprep.subr.mxu0 0.0
      %624 = vmatpush1.msra.mxu0 0.0
      %625 = vmatprep.subr.mxu0 0.0
      %626 = vmatpush1.msra.mxu0 0.0
      %627 = vmatprep.subr.mxu0 0.0
      %628 = vmatpush1.msra.mxu0 0.0
      %629 = vmatprep.subr.mxu0 0.0
      %630 = vmatpush1.msra.mxu0 0.0
      %631 = vmatprep.subr.mxu0 0.0
      %632 = vmatpush1.msra.mxu0 0.0
      %633 = vmatprep.subr.mxu0 0.0
      %634 = vmatpush1.msra.mxu0 0.0
      %635 = vmatprep.subr.mxu0 0.0
      %636 = vmatpush1.msra.mxu0 0.0
      %637 = vmatprep.subr.mxu0 0.0
      %638 = vmatpush1.msra.mxu0 0.0
      %639 = vmatprep.subr.mxu0 0.0
      %640 = vmatpush1.msra.mxu0 0.0
      %641 = vmatprep.subr.mxu0 0.0
      %642 = vmatpush1.msra.mxu0 0.0
      %643 = vmatprep.subr.mxu0 0.0
      %644 = vmatpush1.msra.mxu0 0.0
      %645 = vmatprep.subr.mxu0 0.0
      %646 = vmatpush1.msra.mxu0 0.0
      %647 = vmatprep.subr.mxu0 0.0
      %648 = vmatpush1.msra.mxu0 0.0
      %649 = vmatprep.subr.mxu0 0.0
      %650 = vmatpush1.msra.mxu0 0.0
      %651 = vmatprep.subr.mxu0 0.0
      %652 = vmatpush1.msra.mxu0 0.0
      %653 = vmatprep.subr.mxu0 0.0
      %654 = vmatpush1.msra.mxu0 0.0
      %655 = vmatprep.subr.mxu0 0.0
      %656 = vmatpush1.msra.mxu0 0.0
      %657 = vmatprep.subr.mxu0 0.0
      %658 = vmatpush1.msra.mxu0 0.0
      %659 = vmatprep.subr.mxu0 0.0
      %660 = vmatpush1.msra.mxu0 0.0
      %661 = vmatprep.subr.mxu0 0.0
      %662 = vmatpush1.msra.mxu0 0.0
      %663 = vmatprep.subr.mxu0 0.0
      %664 = vmatpush1.msra.mxu0 0.0
      %665 = vmatprep.subr.mxu0 0.0
      %666 = vmatpush1.msra.mxu0 0.0
      %667 = vmatprep.subr.mxu0 0.0
      %668 = vmatpush1.msra.mxu0 0.0
      %669 = vmatprep.subr.mxu0 0.0
      %670 = vmatpush1.msra.mxu0 0.0
      %671 = vmatprep.subr.mxu0 0.0
      %672 = vmatpush1.msra.mxu0 0.0
      %673 = vmatprep.mubr.f32.mxu0 0.0
      %674 = vmatmul.mubr.f32.gmra.mrb[0].mxu0 %v607
      %v675 = vpop.f32.mrb[0].mxu0
      %v676 = vadd.f32 0.0, %v675
      %v677 = vpop.f32.mrb[0].mxu0
      %678 = vdwg.mxu0
      %v680 = vsel %vm240, %v150, 0
      %682 = vmatprep.subr.mxu0 0.0
      %683 = vmatpush1.msra.mxu0 %v188
      %684 = vmatprep.subr.mxu0 0.0
      %685 = vmatpush1.msra.mxu0 %v189
      %686 = vmatprep.subr.mxu0 0.0
      %687 = vmatpush1.msra.mxu0 0.0
      %688 = vmatprep.subr.mxu0 0.0
      %689 = vmatpush1.msra.mxu0 0.0
      %690 = vmatprep.subr.mxu0 0.0
      %691 = vmatpush1.msra.mxu0 0.0
      %692 = vmatprep.subr.mxu0 0.0
      %693 = vmatpush1.msra.mxu0 0.0
      %694 = vmatprep.subr.mxu0 0.0
      %695 = vmatpush1.msra.mxu0 0.0
      %696 = vmatprep.subr.mxu0 0.0
      %697 = vmatpush1.msra.mxu0 0.0
      %698 = vmatprep.subr.mxu0 0.0
      %699 = vmatpush1.msra.mxu0 0.0
      %700 = vmatprep.subr.mxu0 0.0
      %701 = vmatpush1.msra.mxu0 0.0
      %702 = vmatprep.subr.mxu0 0.0
      %703 = vmatpush1.msra.mxu0 0.0
      %704 = vmatprep.subr.mxu0 0.0
      %705 = vmatpush1.msra.mxu0 0.0
      %706 = vmatprep.subr.mxu0 0.0
      %707 = vmatpush1.msra.mxu0 0.0
      %708 = vmatprep.subr.mxu0 0.0
      %709 = vmatpush1.msra.mxu0 0.0
      %710 = vmatprep.subr.mxu0 0.0
      %711 = vmatpush1.msra.mxu0 0.0
      %712 = vmatprep.subr.mxu0 0.0
      %713 = vmatpush1.msra.mxu0 0.0
      %714 = vmatprep.subr.mxu0 0.0
      %715 = vmatpush1.msra.mxu0 0.0
      %716 = vmatprep.subr.mxu0 0.0
      %717 = vmatpush1.msra.mxu0 0.0
      %718 = vmatprep.subr.mxu0 0.0
      %719 = vmatpush1.msra.mxu0 0.0
      %720 = vmatprep.subr.mxu0 0.0
      %721 = vmatpush1.msra.mxu0 0.0
      %722 = vmatprep.subr.mxu0 0.0
      %723 = vmatpush1.msra.mxu0 0.0
      %724 = vmatprep.subr.mxu0 0.0
      %725 = vmatpush1.msra.mxu0 0.0
      %726 = vmatprep.subr.mxu0 0.0
      %727 = vmatpush1.msra.mxu0 0.0
      %728 = vmatprep.subr.mxu0 0.0
      %729 = vmatpush1.msra.mxu0 0.0
      %730 = vmatprep.subr.mxu0 0.0
      %731 = vmatpush1.msra.mxu0 0.0
      %732 = vmatprep.subr.mxu0 0.0
      %733 = vmatpush1.msra.mxu0 0.0
      %734 = vmatprep.subr.mxu0 0.0
      %735 = vmatpush1.msra.mxu0 0.0
      %736 = vmatprep.subr.mxu0 0.0
      %737 = vmatpush1.msra.mxu0 0.0
      %738 = vmatprep.subr.mxu0 0.0
      %739 = vmatpush1.msra.mxu0 0.0
      %740 = vmatprep.subr.mxu0 0.0
      %741 = vmatpush1.msra.mxu0 0.0
      %742 = vmatprep.subr.mxu0 0.0
      %743 = vmatpush1.msra.mxu0 0.0
      %744 = vmatprep.subr.mxu0 0.0
      %745 = vmatpush1.msra.mxu0 0.0
      %746 = vmatprep.mubr.f32.mxu0 0.0
      %747 = vmatmul.mubr.f32.gmra.mrb[0].mxu0 %v680
      %v748 = vpop.f32.mrb[0].mxu0
      %v749 = vadd.f32 0.0, %v748
      %v750 = vpop.f32.mrb[0].mxu0
      %751 = vdwg.mxu0
      %v753 = vsel %vm240, %v151, 0
      %755 = vmatprep.subr.mxu0 0.0
      %756 = vmatpush1.msra.mxu0 %v190
      %757 = vmatprep.subr.mxu0 0.0
      %758 = vmatpush1.msra.mxu0 %v191
      %759 = vmatprep.subr.mxu0 0.0
      %760 = vmatpush1.msra.mxu0 0.0
      %761 = vmatprep.subr.mxu0 0.0
      %762 = vmatpush1.msra.mxu0 0.0
      %763 = vmatprep.subr.mxu0 0.0
      %764 = vmatpush1.msra.mxu0 0.0
      %765 = vmatprep.subr.mxu0 0.0
      %766 = vmatpush1.msra.mxu0 0.0
      %767 = vmatprep.subr.mxu0 0.0
      %768 = vmatpush1.msra.mxu0 0.0
      %769 = vmatprep.subr.mxu0 0.0
      %770 = vmatpush1.msra.mxu0 0.0
      %771 = vmatprep.subr.mxu0 0.0
      %772 = vmatpush1.msra.mxu0 0.0
      %773 = vmatprep.subr.mxu0 0.0
      %774 = vmatpush1.msra.mxu0 0.0
      %775 = vmatprep.subr.mxu0 0.0
      %776 = vmatpush1.msra.mxu0 0.0
      %777 = vmatprep.subr.mxu0 0.0
      %778 = vmatpush1.msra.mxu0 0.0
      %779 = vmatprep.subr.mxu0 0.0
      %780 = vmatpush1.msra.mxu0 0.0
      %781 = vmatprep.subr.mxu0 0.0
      %782 = vmatpush1.msra.mxu0 0.0
      %783 = vmatprep.subr.mxu0 0.0
      %784 = vmatpush1.msra.mxu0 0.0
      %785 = vmatprep.subr.mxu0 0.0
      %786 = vmatpush1.msra.mxu0 0.0
      %787 = vmatprep.subr.mxu0 0.0
      %788 = vmatpush1.msra.mxu0 0.0
      %789 = vmatprep.subr.mxu0 0.0
      %790 = vmatpush1.msra.mxu0 0.0
      %791 = vmatprep.subr.mxu0 0.0
      %792 = vmatpush1.msra.mxu0 0.0
      %793 = vmatprep.subr.mxu0 0.0
      %794 = vmatpush1.msra.mxu0 0.0
      %795 = vmatprep.subr.mxu0 0.0
      %796 = vmatpush1.msra.mxu0 0.0
      %797 = vmatprep.subr.mxu0 0.0
      %798 = vmatpush1.msra.mxu0 0.0
      %799 = vmatprep.subr.mxu0 0.0
      %800 = vmatpush1.msra.mxu0 0.0
      %801 = vmatprep.subr.mxu0 0.0
      %802 = vmatpush1.msra.mxu0 0.0
      %803 = vmatprep.subr.mxu0 0.0
      %804 = vmatpush1.msra.mxu0 0.0
      %805 = vmatprep.subr.mxu0 0.0
      %806 = vmatpush1.msra.mxu0 0.0
      %807 = vmatprep.subr.mxu0 0.0
      %808 = vmatpush1.msra.mxu0 0.0
      %809 = vmatprep.subr.mxu0 0.0
      %810 = vmatpush1.msra.mxu0 0.0
      %811 = vmatprep.subr.mxu0 0.0
      %812 = vmatpush1.msra.mxu0 0.0
      %813 = vmatprep.subr.mxu0 0.0
      %814 = vmatpush1.msra.mxu0 0.0
      %815 = vmatprep.subr.mxu0 0.0
      %816 = vmatpush1.msra.mxu0 0.0
      %817 = vmatprep.subr.mxu0 0.0
      %818 = vmatpush1.msra.mxu0 0.0
      %819 = vmatprep.mubr.f32.mxu0 0.0
      %820 = vmatmul.mubr.f32.gmra.mrb[0].mxu0 %v753
      %v821 = vpop.f32.mrb[0].mxu0
      %v822 = vadd.f32 0.0, %v821
      %v823 = vpop.f32.mrb[0].mxu0
      %824 = vdwg.mxu0
      %v826 = vsel %vm240, %v152, 0
      %828 = vmatprep.subr.mxu0 0.0
      %829 = vmatpush1.msra.mxu0 %v192
      %830 = vmatprep.subr.mxu0 0.0
      %831 = vmatpush1.msra.mxu0 %v193
      %832 = vmatprep.subr.mxu0 0.0
      %833 = vmatpush1.msra.mxu0 0.0
      %834 = vmatprep.subr.mxu0 0.0
      %835 = vmatpush1.msra.mxu0 0.0
      %836 = vmatprep.subr.mxu0 0.0
      %837 = vmatpush1.msra.mxu0 0.0
      %838 = vmatprep.subr.mxu0 0.0
      %839 = vmatpush1.msra.mxu0 0.0
      %840 = vmatprep.subr.mxu0 0.0
      %841 = vmatpush1.msra.mxu0 0.0
      %842 = vmatprep.subr.mxu0 0.0
      %843 = vmatpush1.msra.mxu0 0.0
      %844 = vmatprep.subr.mxu0 0.0
      %845 = vmatpush1.msra.mxu0 0.0
      %846 = vmatprep.subr.mxu0 0.0
      %847 = vmatpush1.msra.mxu0 0.0
      %848 = vmatprep.subr.mxu0 0.0
      %849 = vmatpush1.msra.mxu0 0.0
      %850 = vmatprep.subr.mxu0 0.0
      %851 = vmatpush1.msra.mxu0 0.0
      %852 = vmatprep.subr.mxu0 0.0
      %853 = vmatpush1.msra.mxu0 0.0
      %854 = vmatprep.subr.mxu0 0.0
      %855 = vmatpush1.msra.mxu0 0.0
      %856 = vmatprep.subr.mxu0 0.0
      %857 = vmatpush1.msra.mxu0 0.0
      %858 = vmatprep.subr.mxu0 0.0
      %859 = vmatpush1.msra.mxu0 0.0
      %860 = vmatprep.subr.mxu0 0.0
      %861 = vmatpush1.msra.mxu0 0.0
      %862 = vmatprep.subr.mxu0 0.0
      %863 = vmatpush1.msra.mxu0 0.0
      %864 = vmatprep.subr.mxu0 0.0
      %865 = vmatpush1.msra.mxu0 0.0
      %866 = vmatprep.subr.mxu0 0.0
      %867 = vmatpush1.msra.mxu0 0.0
      %868 = vmatprep.subr.mxu0 0.0
      %869 = vmatpush1.msra.mxu0 0.0
      %870 = vmatprep.subr.mxu0 0.0
      %871 = vmatpush1.msra.mxu0 0.0
      %872 = vmatprep.subr.mxu0 0.0
      %873 = vmatpush1.msra.mxu0 0.0
      %874 = vmatprep.subr.mxu0 0.0
      %875 = vmatpush1.msra.mxu0 0.0
      %876 = vmatprep.subr.mxu0 0.0
      %877 = vmatpush1.msra.mxu0 0.0
      %878 = vmatprep.subr.mxu0 0.0
      %879 = vmatpush1.msra.mxu0 0.0
      %880 = vmatprep.subr.mxu0 0.0
      %881 = vmatpush1.msra.mxu0 0.0
      %882 = vmatprep.subr.mxu0 0.0
      %883 = vmatpush1.msra.mxu0 0.0
      %884 = vmatprep.subr.mxu0 0.0
      %885 = vmatpush1.msra.mxu0 0.0
      %886 = vmatprep.subr.mxu0 0.0
      %887 = vmatpush1.msra.mxu0 0.0
      %888 = vmatprep.subr.mxu0 0.0
      %889 = vmatpush1.msra.mxu0 0.0
      %890 = vmatprep.subr.mxu0 0.0
      %891 = vmatpush1.msra.mxu0 0.0
      %892 = vmatprep.mubr.f32.mxu0 0.0
      %893 = vmatmul.mubr.f32.gmra.mrb[0].mxu0 %v826
      %v894 = vpop.f32.mrb[0].mxu0
      %v895 = vadd.f32 0.0, %v894
      %v896 = vpop.f32.mrb[0].mxu0
      %897 = vdwg.mxu0
      %v899 = vsel %vm240, %v153, 0
      %901 = vmatprep.subr.mxu0 0.0
      %902 = vmatpush1.msra.mxu0 %v194
      %903 = vmatprep.subr.mxu0 0.0
      %904 = vmatpush1.msra.mxu0 %v195
      %905 = vmatprep.subr.mxu0 0.0
      %906 = vmatpush1.msra.mxu0 0.0
      %907 = vmatprep.subr.mxu0 0.0
      %908 = vmatpush1.msra.mxu0 0.0
      %909 = vmatprep.subr.mxu0 0.0
      %910 = vmatpush1.msra.mxu0 0.0
      %911 = vmatprep.subr.mxu0 0.0
      %912 = vmatpush1.msra.mxu0 0.0
      %913 = vmatprep.subr.mxu0 0.0
      %914 = vmatpush1.msra.mxu0 0.0
      %915 = vmatprep.subr.mxu0 0.0
      %916 = vmatpush1.msra.mxu0 0.0
      %917 = vmatprep.subr.mxu0 0.0
      %918 = vmatpush1.msra.mxu0 0.0
      %919 = vmatprep.subr.mxu0 0.0
      %920 = vmatpush1.msra.mxu0 0.0
      %921 = vmatprep.subr.mxu0 0.0
      %922 = vmatpush1.msra.mxu0 0.0
      %923 = vmatprep.subr.mxu0 0.0
      %924 = vmatpush1.msra.mxu0 0.0
      %925 = vmatprep.subr.mxu0 0.0
      %926 = vmatpush1.msra.mxu0 0.0
      %927 = vmatprep.subr.mxu0 0.0
      %928 = vmatpush1.msra.mxu0 0.0
      %929 = vmatprep.subr.mxu0 0.0
      %930 = vmatpush1.msra.mxu0 0.0
      %931 = vmatprep.subr.mxu0 0.0
      %932 = vmatpush1.msra.mxu0 0.0
      %933 = vmatprep.subr.mxu0 0.0
      %934 = vmatpush1.msra.mxu0 0.0
      %935 = vmatprep.subr.mxu0 0.0
      %936 = vmatpush1.msra.mxu0 0.0
      %937 = vmatprep.subr.mxu0 0.0
      %938 = vmatpush1.msra.mxu0 0.0
      %939 = vmatprep.subr.mxu0 0.0
      %940 = vmatpush1.msra.mxu0 0.0
      %941 = vmatprep.subr.mxu0 0.0
      %942 = vmatpush1.msra.mxu0 0.0
      %943 = vmatprep.subr.mxu0 0.0
      %944 = vmatpush1.msra.mxu0 0.0
      %945 = vmatprep.subr.mxu0 0.0
      %946 = vmatpush1.msra.mxu0 0.0
      %947 = vmatprep.subr.mxu0 0.0
      %948 = vmatpush1.msra.mxu0 0.0
      %949 = vmatprep.subr.mxu0 0.0
      %950 = vmatpush1.msra.mxu0 0.0
      %951 = vmatprep.subr.mxu0 0.0
      %952 = vmatpush1.msra.mxu0 0.0
      %953 = vmatprep.subr.mxu0 0.0
      %954 = vmatpush1.msra.mxu0 0.0
      %955 = vmatprep.subr.mxu0 0.0
      %956 = vmatpush1.msra.mxu0 0.0
      %957 = vmatprep.subr.mxu0 0.0
      %958 = vmatpush1.msra.mxu0 0.0
      %959 = vmatprep.subr.mxu0 0.0
      %960 = vmatpush1.msra.mxu0 0.0
      %961 = vmatprep.subr.mxu0 0.0
      %962 = vmatpush1.msra.mxu0 0.0
      %963 = vmatprep.subr.mxu0 0.0
      %964 = vmatpush1.msra.mxu0 0.0
      %965 = vmatprep.mubr.f32.mxu0 0.0
      %966 = vmatmul.mubr.f32.gmra.mrb[0].mxu0 %v899
      %v967 = vpop.f32.mrb[0].mxu0
      %v968 = vadd.f32 0.0, %v967
      %v969 = vpop.f32.mrb[0].mxu0
      %970 = vdwg.mxu0
      %v972 = vsel %vm240, %v154, 0
      %974 = vmatprep.subr.mxu0 0.0
      %975 = vmatpush1.msra.mxu0 %v196
      %976 = vmatprep.subr.mxu0 0.0
      %977 = vmatpush1.msra.mxu0 %v197
      %978 = vmatprep.subr.mxu0 0.0
      %979 = vmatpush1.msra.mxu0 0.0
      %980 = vmatprep.subr.mxu0 0.0
      %981 = vmatpush1.msra.mxu0 0.0
      %982 = vmatprep.subr.mxu0 0.0
      %983 = vmatpush1.msra.mxu0 0.0
      %984 = vmatprep.subr.mxu0 0.0
      %985 = vmatpush1.msra.mxu0 0.0
      %986 = vmatprep.subr.mxu0 0.0
      %987 = vmatpush1.msra.mxu0 0.0
      %988 = vmatprep.subr.mxu0 0.0
      %989 = vmatpush1.msra.mxu0 0.0
      %990 = vmatprep.subr.mxu0 0.0
      %991 = vmatpush1.msra.mxu0 0.0
      %992 = vmatprep.subr.mxu0 0.0
      %993 = vmatpush1.msra.mxu0 0.0
      %994 = vmatprep.subr.mxu0 0.0
      %995 = vmatpush1.msra.mxu0 0.0
      %996 = vmatprep.subr.mxu0 0.0
      %997 = vmatpush1.msra.mxu0 0.0
      %998 = vmatprep.subr.mxu0 0.0
      %999 = vmatpush1.msra.mxu0 0.0
      %1000 = vmatprep.subr.mxu0 0.0
      %1001 = vmatpush1.msra.mxu0 0.0
      %1002 = vmatprep.subr.mxu0 0.0
      %1003 = vmatpush1.msra.mxu0 0.0
      %1004 = vmatprep.subr.mxu0 0.0
      %1005 = vmatpush1.msra.mxu0 0.0
      %1006 = vmatprep.subr.mxu0 0.0
      %1007 = vmatpush1.msra.mxu0 0.0
      %1008 = vmatprep.subr.mxu0 0.0
      %1009 = vmatpush1.msra.mxu0 0.0
      %1010 = vmatprep.subr.mxu0 0.0
      %1011 = vmatpush1.msra.mxu0 0.0
      %1012 = vmatprep.subr.mxu0 0.0
      %1013 = vmatpush1.msra.mxu0 0.0
      %1014 = vmatprep.subr.mxu0 0.0
      %1015 = vmatpush1.msra.mxu0 0.0
      %1016 = vmatprep.subr.mxu0 0.0
      %1017 = vmatpush1.msra.mxu0 0.0
      %1018 = vmatprep.subr.mxu0 0.0
      %1019 = vmatpush1.msra.mxu0 0.0
      %1020 = vmatprep.subr.mxu0 0.0
      %1021 = vmatpush1.msra.mxu0 0.0
      %1022 = vmatprep.subr.mxu0 0.0
      %1023 = vmatpush1.msra.mxu0 0.0
      %1024 = vmatprep.subr.mxu0 0.0
      %1025 = vmatpush1.msra.mxu0 0.0
      %1026 = vmatprep.subr.mxu0 0.0
      %1027 = vmatpush1.msra.mxu0 0.0
      %1028 = vmatprep.subr.mxu0 0.0
      %1029 = vmatpush1.msra.mxu0 0.0
      %1030 = vmatprep.subr.mxu0 0.0
      %1031 = vmatpush1.msra.mxu0 0.0
      %1032 = vmatprep.subr.mxu0 0.0
      %1033 = vmatpush1.msra.mxu0 0.0
      %1034 = vmatprep.subr.mxu0 0.0
      %1035 = vmatpush1.msra.mxu0 0.0
      %1036 = vmatprep.subr.mxu0 0.0
      %1037 = vmatpush1.msra.mxu0 0.0
      %1038 = vmatprep.mubr.f32.mxu0 0.0
      %1039 = vmatmul.mubr.f32.gmra.mrb[0].mxu0 %v972
      %v1040 = vpop.f32.mrb[0].mxu0
      %v1041 = vadd.f32 0.0, %v1040
      %v1042 = vpop.f32.mrb[0].mxu0
      %1043 = vdwg.mxu0
      %v1045 = vsel %vm240, %v155, 0
      %1047 = vmatprep.subr.mxu0 0.0
      %1048 = vmatpush1.msra.mxu0 %v198
      %1049 = vmatprep.subr.mxu0 0.0
      %1050 = vmatpush1.msra.mxu0 %v199
      %1051 = vmatprep.subr.mxu0 0.0
      %1052 = vmatpush1.msra.mxu0 0.0
      %1053 = vmatprep.subr.mxu0 0.0
      %1054 = vmatpush1.msra.mxu0 0.0
      %1055 = vmatprep.subr.mxu0 0.0
      %1056 = vmatpush1.msra.mxu0 0.0
      %1057 = vmatprep.subr.mxu0 0.0
      %1058 = vmatpush1.msra.mxu0 0.0
      %1059 = vmatprep.subr.mxu0 0.0
      %1060 = vmatpush1.msra.mxu0 0.0
      %1061 = vmatprep.subr.mxu0 0.0
      %1062 = vmatpush1.msra.mxu0 0.0
      %1063 = vmatprep.subr.mxu0 0.0
      %1064 = vmatpush1.msra.mxu0 0.0
      %1065 = vmatprep.subr.mxu0 0.0
      %1066 = vmatpush1.msra.mxu0 0.0
      %1067 = vmatprep.subr.mxu0 0.0
      %1068 = vmatpush1.msra.mxu0 0.0
      %1069 = vmatprep.subr.mxu0 0.0
      %1070 = vmatpush1.msra.mxu0 0.0
      %1071 = vmatprep.subr.mxu0 0.0
      %1072 = vmatpush1.msra.mxu0 0.0
      %1073 = vmatprep.subr.mxu0 0.0
      %1074 = vmatpush1.msra.mxu0 0.0
      %1075 = vmatprep.subr.mxu0 0.0
      %1076 = vmatpush1.msra.mxu0 0.0
      %1077 = vmatprep.subr.mxu0 0.0
      %1078 = vmatpush1.msra.mxu0 0.0
      %1079 = vmatprep.subr.mxu0 0.0
      %1080 = vmatpush1.msra.mxu0 0.0
      %1081 = vmatprep.subr.mxu0 0.0
      %1082 = vmatpush1.msra.mxu0 0.0
      %1083 = vmatprep.subr.mxu0 0.0
      %1084 = vmatpush1.msra.mxu0 0.0
      %1085 = vmatprep.subr.mxu0 0.0
      %1086 = vmatpush1.msra.mxu0 0.0
      %1087 = vmatprep.subr.mxu0 0.0
      %1088 = vmatpush1.msra.mxu0 0.0
      %1089 = vmatprep.subr.mxu0 0.0
      %1090 = vmatpush1.msra.mxu0 0.0
      %1091 = vmatprep.subr.mxu0 0.0
      %1092 = vmatpush1.msra.mxu0 0.0
      %1093 = vmatprep.subr.mxu0 0.0
      %1094 = vmatpush1.msra.mxu0 0.0
      %1095 = vmatprep.subr.mxu0 0.0
      %1096 = vmatpush1.msra.mxu0 0.0
      %1097 = vmatprep.subr.mxu0 0.0
      %1098 = vmatpush1.msra.mxu0 0.0
      %1099 = vmatprep.subr.mxu0 0.0
      %1100 = vmatpush1.msra.mxu0 0.0
      %1101 = vmatprep.subr.mxu0 0.0
      %1102 = vmatpush1.msra.mxu0 0.0
      %1103 = vmatprep.subr.mxu0 0.0
      %1104 = vmatpush1.msra.mxu0 0.0
      %1105 = vmatprep.subr.mxu0 0.0
      %1106 = vmatpush1.msra.mxu0 0.0
      %1107 = vmatprep.subr.mxu0 0.0
      %1108 = vmatpush1.msra.mxu0 0.0
      %1109 = vmatprep.subr.mxu0 0.0
      %1110 = vmatpush1.msra.mxu0 0.0
      %1111 = vmatprep.mubr.f32.mxu0 0.0
      %1112 = vmatmul.mubr.f32.gmra.mrb[0].mxu0 %v1045
      %v1113 = vpop.f32.mrb[0].mxu0
      %v1114 = vadd.f32 0.0, %v1113
      %v1115 = vpop.f32.mrb[0].mxu0
      %1116 = vdwg.mxu0
      %v1118 = vsel %vm240, %v156, 0
      %1120 = vmatprep.subr.mxu0 0.0
      %1121 = vmatpush1.msra.mxu0 %v200
      %1122 = vmatprep.subr.mxu0 0.0
      %1123 = vmatpush1.msra.mxu0 %v201
      %1124 = vmatprep.subr.mxu0 0.0
      %1125 = vmatpush1.msra.mxu0 0.0
      %1126 = vmatprep.subr.mxu0 0.0
      %1127 = vmatpush1.msra.mxu0 0.0
      %1128 = vmatprep.subr.mxu0 0.0
      %1129 = vmatpush1.msra.mxu0 0.0
      %1130 = vmatprep.subr.mxu0 0.0
      %1131 = vmatpush1.msra.mxu0 0.0
      %1132 = vmatprep.subr.mxu0 0.0
      %1133 = vmatpush1.msra.mxu0 0.0
      %1134 = vmatprep.subr.mxu0 0.0
      %1135 = vmatpush1.msra.mxu0 0.0
      %1136 = vmatprep.subr.mxu0 0.0
      %1137 = vmatpush1.msra.mxu0 0.0
      %1138 = vmatprep.subr.mxu0 0.0
      %1139 = vmatpush1.msra.mxu0 0.0
      %1140 = vmatprep.subr.mxu0 0.0
      %1141 = vmatpush1.msra.mxu0 0.0
      %1142 = vmatprep.subr.mxu0 0.0
      %1143 = vmatpush1.msra.mxu0 0.0
      %1144 = vmatprep.subr.mxu0 0.0
      %1145 = vmatpush1.msra.mxu0 0.0
      %1146 = vmatprep.subr.mxu0 0.0
      %1147 = vmatpush1.msra.mxu0 0.0
      %1148 = vmatprep.subr.mxu0 0.0
      %1149 = vmatpush1.msra.mxu0 0.0
      %1150 = vmatprep.subr.mxu0 0.0
      %1151 = vmatpush1.msra.mxu0 0.0
      %1152 = vmatprep.subr.mxu0 0.0
      %1153 = vmatpush1.msra.mxu0 0.0
      %1154 = vmatprep.subr.mxu0 0.0
      %1155 = vmatpush1.msra.mxu0 0.0
      %1156 = vmatprep.subr.mxu0 0.0
      %1157 = vmatpush1.msra.mxu0 0.0
      %1158 = vmatprep.subr.mxu0 0.0
      %1159 = vmatpush1.msra.mxu0 0.0
      %1160 = vmatprep.subr.mxu0 0.0
      %1161 = vmatpush1.msra.mxu0 0.0
      %1162 = vmatprep.subr.mxu0 0.0
      %1163 = vmatpush1.msra.mxu0 0.0
      %1164 = vmatprep.subr.mxu0 0.0
      %1165 = vmatpush1.msra.mxu0 0.0
      %1166 = vmatprep.subr.mxu0 0.0
      %1167 = vmatpush1.msra.mxu0 0.0
      %1168 = vmatprep.subr.mxu0 0.0
      %1169 = vmatpush1.msra.mxu0 0.0
      %1170 = vmatprep.subr.mxu0 0.0
      %1171 = vmatpush1.msra.mxu0 0.0
      %1172 = vmatprep.subr.mxu0 0.0
      %1173 = vmatpush1.msra.mxu0 0.0
      %1174 = vmatprep.subr.mxu0 0.0
      %1175 = vmatpush1.msra.mxu0 0.0
      %1176 = vmatprep.subr.mxu0 0.0
      %1177 = vmatpush1.msra.mxu0 0.0
      %1178 = vmatprep.subr.mxu0 0.0
      %1179 = vmatpush1.msra.mxu0 0.0
      %1180 = vmatprep.subr.mxu0 0.0
      %1181 = vmatpush1.msra.mxu0 0.0
      %1182 = vmatprep.subr.mxu0 0.0
      %1183 = vmatpush1.msra.mxu0 0.0
      %1184 = vmatprep.mubr.f32.mxu0 0.0
      %1185 = vmatmul.mubr.f32.gmra.mrb[0].mxu0 %v1118
      %v1186 = vpop.f32.mrb[0].mxu0
      %v1187 = vadd.f32 0.0, %v1186
      %v1188 = vpop.f32.mrb[0].mxu0
      %1189 = vdwg.mxu0
      %v1191 = vsel %vm240, %v157, 0
      %1193 = vmatprep.subr.mxu0 0.0
      %1194 = vmatpush1.msra.mxu0 %v202
      %1195 = vmatprep.subr.mxu0 0.0
      %1196 = vmatpush1.msra.mxu0 %v203
      %1197 = vmatprep.subr.mxu0 0.0
      %1198 = vmatpush1.msra.mxu0 0.0
      %1199 = vmatprep.subr.mxu0 0.0
      %1200 = vmatpush1.msra.mxu0 0.0
      %1201 = vmatprep.subr.mxu0 0.0
      %1202 = vmatpush1.msra.mxu0 0.0
      %1203 = vmatprep.subr.mxu0 0.0
      %1204 = vmatpush1.msra.mxu0 0.0
      %1205 = vmatprep.subr.mxu0 0.0
      %1206 = vmatpush1.msra.mxu0 0.0
      %1207 = vmatprep.subr.mxu0 0.0
      %1208 = vmatpush1.msra.mxu0 0.0
      %1209 = vmatprep.subr.mxu0 0.0
      %1210 = vmatpush1.msra.mxu0 0.0
      %1211 = vmatprep.subr.mxu0 0.0
      %1212 = vmatpush1.msra.mxu0 0.0
      %1213 = vmatprep.subr.mxu0 0.0
      %1214 = vmatpush1.msra.mxu0 0.0
      %1215 = vmatprep.subr.mxu0 0.0
      %1216 = vmatpush1.msra.mxu0 0.0
      %1217 = vmatprep.subr.mxu0 0.0
      %1218 = vmatpush1.msra.mxu0 0.0
      %1219 = vmatprep.subr.mxu0 0.0
      %1220 = vmatpush1.msra.mxu0 0.0
      %1221 = vmatprep.subr.mxu0 0.0
      %1222 = vmatpush1.msra.mxu0 0.0
      %1223 = vmatprep.subr.mxu0 0.0
      %1224 = vmatpush1.msra.mxu0 0.0
      %1225 = vmatprep.subr.mxu0 0.0
      %1226 = vmatpush1.msra.mxu0 0.0
      %1227 = vmatprep.subr.mxu0 0.0
      %1228 = vmatpush1.msra.mxu0 0.0
      %1229 = vmatprep.subr.mxu0 0.0
      %1230 = vmatpush1.msra.mxu0 0.0
      %1231 = vmatprep.subr.mxu0 0.0
      %1232 = vmatpush1.msra.mxu0 0.0
      %1233 = vmatprep.subr.mxu0 0.0
      %1234 = vmatpush1.msra.mxu0 0.0
      %1235 = vmatprep.subr.mxu0 0.0
      %1236 = vmatpush1.msra.mxu0 0.0
      %1237 = vmatprep.subr.mxu0 0.0
      %1238 = vmatpush1.msra.mxu0 0.0
      %1239 = vmatprep.subr.mxu0 0.0
      %1240 = vmatpush1.msra.mxu0 0.0
      %1241 = vmatprep.subr.mxu0 0.0
      %1242 = vmatpush1.msra.mxu0 0.0
      %1243 = vmatprep.subr.mxu0 0.0
      %1244 = vmatpush1.msra.mxu0 0.0
      %1245 = vmatprep.subr.mxu0 0.0
      %1246 = vmatpush1.msra.mxu0 0.0
      %1247 = vmatprep.subr.mxu0 0.0
      %1248 = vmatpush1.msra.mxu0 0.0
      %1249 = vmatprep.subr.mxu0 0.0
      %1250 = vmatpush1.msra.mxu0 0.0
      %1251 = vmatprep.subr.mxu0 0.0
      %1252 = vmatpush1.msra.mxu0 0.0
      %1253 = vmatprep.subr.mxu0 0.0
      %1254 = vmatpush1.msra.mxu0 0.0
      %1255 = vmatprep.subr.mxu0 0.0
      %1256 = vmatpush1.msra.mxu0 0.0
      %1257 = vmatprep.mubr.f32.mxu0 0.0
      %1258 = vmatmul.mubr.f32.gmra.mrb[0].mxu0 %v1191
      %v1259 = vpop.f32.mrb[0].mxu0
      %v1260 = vadd.f32 0.0, %v1259
      %v1261 = vpop.f32.mrb[0].mxu0
      %1262 = vdwg.mxu0
      %v1264 = vsel %vm240, %v158, 0
      %1266 = vmatprep.subr.mxu0 0.0
      %1267 = vmatpush1.msra.mxu0 %v204
      %1268 = vmatprep.subr.mxu0 0.0
      %1269 = vmatpush1.msra.mxu0 %v205
      %1270 = vmatprep.subr.mxu0 0.0
      %1271 = vmatpush1.msra.mxu0 0.0
      %1272 = vmatprep.subr.mxu0 0.0
      %1273 = vmatpush1.msra.mxu0 0.0
      %1274 = vmatprep.subr.mxu0 0.0
      %1275 = vmatpush1.msra.mxu0 0.0
      %1276 = vmatprep.subr.mxu0 0.0
      %1277 = vmatpush1.msra.mxu0 0.0
      %1278 = vmatprep.subr.mxu0 0.0
      %1279 = vmatpush1.msra.mxu0 0.0
      %1280 = vmatprep.subr.mxu0 0.0
      %1281 = vmatpush1.msra.mxu0 0.0
      %1282 = vmatprep.subr.mxu0 0.0
      %1283 = vmatpush1.msra.mxu0 0.0
      %1284 = vmatprep.subr.mxu0 0.0
      %1285 = vmatpush1.msra.mxu0 0.0
      %1286 = vmatprep.subr.mxu0 0.0
      %1287 = vmatpush1.msra.mxu0 0.0
      %1288 = vmatprep.subr.mxu0 0.0
      %1289 = vmatpush1.msra.mxu0 0.0
      %1290 = vmatprep.subr.mxu0 0.0
      %1291 = vmatpush1.msra.mxu0 0.0
      %1292 = vmatprep.subr.mxu0 0.0
      %1293 = vmatpush1.msra.mxu0 0.0
      %1294 = vmatprep.subr.mxu0 0.0
      %1295 = vmatpush1.msra.mxu0 0.0
      %1296 = vmatprep.subr.mxu0 0.0
      %1297 = vmatpush1.msra.mxu0 0.0
      %1298 = vmatprep.subr.mxu0 0.0
      %1299 = vmatpush1.msra.mxu0 0.0
      %1300 = vmatprep.subr.mxu0 0.0
      %1301 = vmatpush1.msra.mxu0 0.0
      %1302 = vmatprep.subr.mxu0 0.0
      %1303 = vmatpush1.msra.mxu0 0.0
      %1304 = vmatprep.subr.mxu0 0.0
      %1305 = vmatpush1.msra.mxu0 0.0
      %1306 = vmatprep.subr.mxu0 0.0
      %1307 = vmatpush1.msra.mxu0 0.0
      %1308 = vmatprep.subr.mxu0 0.0
      %1309 = vmatpush1.msra.mxu0 0.0
      %1310 = vmatprep.subr.mxu0 0.0
      %1311 = vmatpush1.msra.mxu0 0.0
      %1312 = vmatprep.subr.mxu0 0.0
      %1313 = vmatpush1.msra.mxu0 0.0
      %1314 = vmatprep.subr.mxu0 0.0
      %1315 = vmatpush1.msra.mxu0 0.0
      %1316 = vmatprep.subr.mxu0 0.0
      %1317 = vmatpush1.msra.mxu0 0.0
      %1318 = vmatprep.subr.mxu0 0.0
      %1319 = vmatpush1.msra.mxu0 0.0
      %1320 = vmatprep.subr.mxu0 0.0
      %1321 = vmatpush1.msra.mxu0 0.0
      %1322 = vmatprep.subr.mxu0 0.0
      %1323 = vmatpush1.msra.mxu0 0.0
      %1324 = vmatprep.subr.mxu0 0.0
      %1325 = vmatpush1.msra.mxu0 0.0
      %1326 = vmatprep.subr.mxu0 0.0
      %1327 = vmatpush1.msra.mxu0 0.0
      %1328 = vmatprep.subr.mxu0 0.0
      %1329 = vmatpush1.msra.mxu0 0.0
      %1330 = vmatprep.mubr.f32.mxu0 0.0
      %1331 = vmatmul.mubr.f32.gmra.mrb[0].mxu0 %v1264
      %v1332 = vpop.f32.mrb[0].mxu0
      %v1333 = vadd.f32 0.0, %v1332
      %v1334 = vpop.f32.mrb[0].mxu0
      %1335 = vdwg.mxu0
      %v1337 = vsel %vm240, %v159, 0
      %1339 = vmatprep.subr.mxu0 0.0
      %1340 = vmatpush1.msra.mxu0 %v206
      %1341 = vmatprep.subr.mxu0 0.0
      %1342 = vmatpush1.msra.mxu0 %v207
      %1343 = vmatprep.subr.mxu0 0.0
      %1344 = vmatpush1.msra.mxu0 0.0
      %1345 = vmatprep.subr.mxu0 0.0
      %1346 = vmatpush1.msra.mxu0 0.0
      %1347 = vmatprep.subr.mxu0 0.0
      %1348 = vmatpush1.msra.mxu0 0.0
      %1349 = vmatprep.subr.mxu0 0.0
      %1350 = vmatpush1.msra.mxu0 0.0
      %1351 = vmatprep.subr.mxu0 0.0
      %1352 = vmatpush1.msra.mxu0 0.0
      %1353 = vmatprep.subr.mxu0 0.0
      %1354 = vmatpush1.msra.mxu0 0.0
      %1355 = vmatprep.subr.mxu0 0.0
      %1356 = vmatpush1.msra.mxu0 0.0
      %1357 = vmatprep.subr.mxu0 0.0
      %1358 = vmatpush1.msra.mxu0 0.0
      %1359 = vmatprep.subr.mxu0 0.0
      %1360 = vmatpush1.msra.mxu0 0.0
      %1361 = vmatprep.subr.mxu0 0.0
      %1362 = vmatpush1.msra.mxu0 0.0
      %1363 = vmatprep.subr.mxu0 0.0
      %1364 = vmatpush1.msra.mxu0 0.0
      %1365 = vmatprep.subr.mxu0 0.0
      %1366 = vmatpush1.msra.mxu0 0.0
      %1367 = vmatprep.subr.mxu0 0.0
      %1368 = vmatpush1.msra.mxu0 0.0
      %1369 = vmatprep.subr.mxu0 0.0
      %1370 = vmatpush1.msra.mxu0 0.0
      %1371 = vmatprep.subr.mxu0 0.0
      %1372 = vmatpush1.msra.mxu0 0.0
      %1373 = vmatprep.subr.mxu0 0.0
      %1374 = vmatpush1.msra.mxu0 0.0
      %1375 = vmatprep.subr.mxu0 0.0
      %1376 = vmatpush1.msra.mxu0 0.0
      %1377 = vmatprep.subr.mxu0 0.0
      %1378 = vmatpush1.msra.mxu0 0.0
      %1379 = vmatprep.subr.mxu0 0.0
      %1380 = vmatpush1.msra.mxu0 0.0
      %1381 = vmatprep.subr.mxu0 0.0
      %1382 = vmatpush1.msra.mxu0 0.0
      %1383 = vmatprep.subr.mxu0 0.0
      %1384 = vmatpush1.msra.mxu0 0.0
      %1385 = vmatprep.subr.mxu0 0.0
      %1386 = vmatpush1.msra.mxu0 0.0
      %1387 = vmatprep.subr.mxu0 0.0
      %1388 = vmatpush1.msra.mxu0 0.0
      %1389 = vmatprep.subr.mxu0 0.0
      %1390 = vmatpush1.msra.mxu0 0.0
      %1391 = vmatprep.subr.mxu0 0.0
      %1392 = vmatpush1.msra.mxu0 0.0
      %1393 = vmatprep.subr.mxu0 0.0
      %1394 = vmatpush1.msra.mxu0 0.0
      %1395 = vmatprep.subr.mxu0 0.0
      %1396 = vmatpush1.msra.mxu0 0.0
      %1397 = vmatprep.subr.mxu0 0.0
      %1398 = vmatpush1.msra.mxu0 0.0
      %1399 = vmatprep.subr.mxu0 0.0
      %1400 = vmatpush1.msra.mxu0 0.0
      %1401 = vmatprep.subr.mxu0 0.0
      %1402 = vmatpush1.msra.mxu0 0.0
      %1403 = vmatprep.mubr.f32.mxu0 0.0
      %1404 = vmatmul.mubr.f32.gmra.mrb[0].mxu0 %v1337
      %v1405 = vpop.f32.mrb[0].mxu0
      %v1406 = vadd.f32 0.0, %v1405
      %v1407 = vpop.f32.mrb[0].mxu0
      %1408 = vdwg.mxu0
      %v1410 = vsel %vm240, %v160, 0
      %1412 = vmatprep.subr.mxu0 0.0
      %1413 = vmatpush1.msra.mxu0 %v208
      %1414 = vmatprep.subr.mxu0 0.0
      %1415 = vmatpush1.msra.mxu0 %v209
      %1416 = vmatprep.subr.mxu0 0.0
      %1417 = vmatpush1.msra.mxu0 0.0
      %1418 = vmatprep.subr.mxu0 0.0
      %1419 = vmatpush1.msra.mxu0 0.0
      %1420 = vmatprep.subr.mxu0 0.0
      %1421 = vmatpush1.msra.mxu0 0.0
      %1422 = vmatprep.subr.mxu0 0.0
      %1423 = vmatpush1.msra.mxu0 0.0
      %1424 = vmatprep.subr.mxu0 0.0
      %1425 = vmatpush1.msra.mxu0 0.0
      %1426 = vmatprep.subr.mxu0 0.0
      %1427 = vmatpush1.msra.mxu0 0.0
      %1428 = vmatprep.subr.mxu0 0.0
      %1429 = vmatpush1.msra.mxu0 0.0
      %1430 = vmatprep.subr.mxu0 0.0
      %1431 = vmatpush1.msra.mxu0 0.0
      %1432 = vmatprep.subr.mxu0 0.0
      %1433 = vmatpush1.msra.mxu0 0.0
      %1434 = vmatprep.subr.mxu0 0.0
      %1435 = vmatpush1.msra.mxu0 0.0
      %1436 = vmatprep.subr.mxu0 0.0
      %1437 = vmatpush1.msra.mxu0 0.0
      %1438 = vmatprep.subr.mxu0 0.0
      %1439 = vmatpush1.msra.mxu0 0.0
      %1440 = vmatprep.subr.mxu0 0.0
      %1441 = vmatpush1.msra.mxu0 0.0
      %1442 = vmatprep.subr.mxu0 0.0
      %1443 = vmatpush1.msra.mxu0 0.0
      %1444 = vmatprep.subr.mxu0 0.0
      %1445 = vmatpush1.msra.mxu0 0.0
      %1446 = vmatprep.subr.mxu0 0.0
      %1447 = vmatpush1.msra.mxu0 0.0
      %1448 = vmatprep.subr.mxu0 0.0
      %1449 = vmatpush1.msra.mxu0 0.0
      %1450 = vmatprep.subr.mxu0 0.0
      %1451 = vmatpush1.msra.mxu0 0.0
      %1452 = vmatprep.subr.mxu0 0.0
      %1453 = vmatpush1.msra.mxu0 0.0
      %1454 = vmatprep.subr.mxu0 0.0
      %1455 = vmatpush1.msra.mxu0 0.0
      %1456 = vmatprep.subr.mxu0 0.0
      %1457 = vmatpush1.msra.mxu0 0.0
      %1458 = vmatprep.subr.mxu0 0.0
      %1459 = vmatpush1.msra.mxu0 0.0
      %1460 = vmatprep.subr.mxu0 0.0
      %1461 = vmatpush1.msra.mxu0 0.0
      %1462 = vmatprep.subr.mxu0 0.0
      %1463 = vmatpush1.msra.mxu0 0.0
      %1464 = vmatprep.subr.mxu0 0.0
      %1465 = vmatpush1.msra.mxu0 0.0
      %1466 = vmatprep.subr.mxu0 0.0
      %1467 = vmatpush1.msra.mxu0 0.0
      %1468 = vmatprep.subr.mxu0 0.0
      %1469 = vmatpush1.msra.mxu0 0.0
      %1470 = vmatprep.subr.mxu0 0.0
      %1471 = vmatpush1.msra.mxu0 0.0
      %1472 = vmatprep.subr.mxu0 0.0
      %1473 = vmatpush1.msra.mxu0 0.0
      %1474 = vmatprep.subr.mxu0 0.0
      %1475 = vmatpush1.msra.mxu0 0.0
      %1476 = vmatprep.mubr.f32.mxu0 0.0
      %1477 = vmatmul.mubr.f32.gmra.mrb[0].mxu0 %v1410
      %v1478 = vpop.f32.mrb[0].mxu0
      %v1479 = vadd.f32 0.0, %v1478
      %v1480 = vpop.f32.mrb[0].mxu0
      %1481 = vdwg.mxu0
      %v1483 = vsel %vm240, %v161, 0
      %1485 = vmatprep.subr.mxu0 0.0
      %1486 = vmatpush1.msra.mxu0 %v210
      %1487 = vmatprep.subr.mxu0 0.0
      %1488 = vmatpush1.msra.mxu0 %v211
      %1489 = vmatprep.subr.mxu0 0.0
      %1490 = vmatpush1.msra.mxu0 0.0
      %1491 = vmatprep.subr.mxu0 0.0
      %1492 = vmatpush1.msra.mxu0 0.0
      %1493 = vmatprep.subr.mxu0 0.0
      %1494 = vmatpush1.msra.mxu0 0.0
      %1495 = vmatprep.subr.mxu0 0.0
      %1496 = vmatpush1.msra.mxu0 0.0
      %1497 = vmatprep.subr.mxu0 0.0
      %1498 = vmatpush1.msra.mxu0 0.0
      %1499 = vmatprep.subr.mxu0 0.0
      %1500 = vmatpush1.msra.mxu0 0.0
      %1501 = vmatprep.subr.mxu0 0.0
      %1502 = vmatpush1.msra.mxu0 0.0
      %1503 = vmatprep.subr.mxu0 0.0
      %1504 = vmatpush1.msra.mxu0 0.0
      %1505 = vmatprep.subr.mxu0 0.0
      %1506 = vmatpush1.msra.mxu0 0.0
      %1507 = vmatprep.subr.mxu0 0.0
      %1508 = vmatpush1.msra.mxu0 0.0
      %1509 = vmatprep.subr.mxu0 0.0
      %1510 = vmatpush1.msra.mxu0 0.0
      %1511 = vmatprep.subr.mxu0 0.0
      %1512 = vmatpush1.msra.mxu0 0.0
      %1513 = vmatprep.subr.mxu0 0.0
      %1514 = vmatpush1.msra.mxu0 0.0
      %1515 = vmatprep.subr.mxu0 0.0
      %1516 = vmatpush1.msra.mxu0 0.0
      %1517 = vmatprep.subr.mxu0 0.0
      %1518 = vmatpush1.msra.mxu0 0.0
      %1519 = vmatprep.subr.mxu0 0.0
      %1520 = vmatpush1.msra.mxu0 0.0
      %1521 = vmatprep.subr.mxu0 0.0
      %1522 = vmatpush1.msra.mxu0 0.0
      %1523 = vmatprep.subr.mxu0 0.0
      %1524 = vmatpush1.msra.mxu0 0.0
      %1525 = vmatprep.subr.mxu0 0.0
      %1526 = vmatpush1.msra.mxu0 0.0
      %1527 = vmatprep.subr.mxu0 0.0
      %1528 = vmatpush1.msra.mxu0 0.0
      %1529 = vmatprep.subr.mxu0 0.0
      %1530 = vmatpush1.msra.mxu0 0.0
      %1531 = vmatprep.subr.mxu0 0.0
      %1532 = vmatpush1.msra.mxu0 0.0
      %1533 = vmatprep.subr.mxu0 0.0
      %1534 = vmatpush1.msra.mxu0 0.0
      %1535 = vmatprep.subr.mxu0 0.0
      %1536 = vmatpush1.msra.mxu0 0.0
      %1537 = vmatprep.subr.mxu0 0.0
      %1538 = vmatpush1.msra.mxu0 0.0
      %1539 = vmatprep.subr.mxu0 0.0
      %1540 = vmatpush1.msra.mxu0 0.0
      %1541 = vmatprep.subr.mxu0 0.0
      %1542 = vmatpush1.msra.mxu0 0.0
      %1543 = vmatprep.subr.mxu0 0.0
      %1544 = vmatpush1.msra.mxu0 0.0
      %1545 = vmatprep.subr.mxu0 0.0
      %1546 = vmatpush1.msra.mxu0 0.0
      %1547 = vmatprep.subr.mxu0 0.0
      %1548 = vmatpush1.msra.mxu0 0.0
      %1549 = vmatprep.mubr.f32.mxu0 0.0
      %1550 = vmatmul.mubr.f32.gmra.mrb[0].mxu0 %v1483
      %v1551 = vpop.f32.mrb[0].mxu0
      %v1552 = vadd.f32 0.0, %v1551
      %v1553 = vpop.f32.mrb[0].mxu0
      %1554 = vdwg.mxu0
      %v1556 = vsel %vm240, %v162, 0
      %1558 = vmatprep.subr.mxu0 0.0
      %1559 = vmatpush1.msra.mxu0 %v212
      %1560 = vmatprep.subr.mxu0 0.0
      %1561 = vmatpush1.msra.mxu0 %v213
      %1562 = vmatprep.subr.mxu0 0.0
      %1563 = vmatpush1.msra.mxu0 0.0
      %1564 = vmatprep.subr.mxu0 0.0
      %1565 = vmatpush1.msra.mxu0 0.0
      %1566 = vmatprep.subr.mxu0 0.0
      %1567 = vmatpush1.msra.mxu0 0.0
      %1568 = vmatprep.subr.mxu0 0.0
      %1569 = vmatpush1.msra.mxu0 0.0
      %1570 = vmatprep.subr.mxu0 0.0
      %1571 = vmatpush1.msra.mxu0 0.0
      %1572 = vmatprep.subr.mxu0 0.0
      %1573 = vmatpush1.msra.mxu0 0.0
      %1574 = vmatprep.subr.mxu0 0.0
      %1575 = vmatpush1.msra.mxu0 0.0
      %1576 = vmatprep.subr.mxu0 0.0
      %1577 = vmatpush1.msra.mxu0 0.0
      %1578 = vmatprep.subr.mxu0 0.0
      %1579 = vmatpush1.msra.mxu0 0.0
      %1580 = vmatprep.subr.mxu0 0.0
      %1581 = vmatpush1.msra.mxu0 0.0
      %1582 = vmatprep.subr.mxu0 0.0
      %1583 = vmatpush1.msra.mxu0 0.0
      %1584 = vmatprep.subr.mxu0 0.0
      %1585 = vmatpush1.msra.mxu0 0.0
      %1586 = vmatprep.subr.mxu0 0.0
      %1587 = vmatpush1.msra.mxu0 0.0
      %1588 = vmatprep.subr.mxu0 0.0
      %1589 = vmatpush1.msra.mxu0 0.0
      %1590 = vmatprep.subr.mxu0 0.0
      %1591 = vmatpush1.msra.mxu0 0.0
      %1592 = vmatprep.subr.mxu0 0.0
      %1593 = vmatpush1.msra.mxu0 0.0
      %1594 = vmatprep.subr.mxu0 0.0
      %1595 = vmatpush1.msra.mxu0 0.0
      %1596 = vmatprep.subr.mxu0 0.0
      %1597 = vmatpush1.msra.mxu0 0.0
      %1598 = vmatprep.subr.mxu0 0.0
      %1599 = vmatpush1.msra.mxu0 0.0
      %1600 = vmatprep.subr.mxu0 0.0
      %1601 = vmatpush1.msra.mxu0 0.0
      %1602 = vmatprep.subr.mxu0 0.0
      %1603 = vmatpush1.msra.mxu0 0.0
      %1604 = vmatprep.subr.mxu0 0.0
      %1605 = vmatpush1.msra.mxu0 0.0
      %1606 = vmatprep.subr.mxu0 0.0
      %1607 = vmatpush1.msra.mxu0 0.0
      %1608 = vmatprep.subr.mxu0 0.0
      %1609 = vmatpush1.msra.mxu0 0.0
      %1610 = vmatprep.subr.mxu0 0.0
      %1611 = vmatpush1.msra.mxu0 0.0
      %1612 = vmatprep.subr.mxu0 0.0
      %1613 = vmatpush1.msra.mxu0 0.0
      %1614 = vmatprep.subr.mxu0 0.0
      %1615 = vmatpush1.msra.mxu0 0.0
      %1616 = vmatprep.subr.mxu0 0.0
      %1617 = vmatpush1.msra.mxu0 0.0
      %1618 = vmatprep.subr.mxu0 0.0
      %1619 = vmatpush1.msra.mxu0 0.0
      %1620 = vmatprep.subr.mxu0 0.0
      %1621 = vmatpush1.msra.mxu0 0.0
      %1622 = vmatprep.mubr.f32.mxu0 0.0
      %1623 = vmatmul.mubr.f32.gmra.mrb[0].mxu0 %v1556
      %v1624 = vpop.f32.mrb[0].mxu0
      %v1625 = vadd.f32 0.0, %v1624
      %v1626 = vpop.f32.mrb[0].mxu0
      %1627 = vdwg.mxu0
      %v1629 = vsel %vm240, %v163, 0
      %1631 = vmatprep.subr.mxu0 0.0
      %1632 = vmatpush1.msra.mxu0 %v214
      %1633 = vmatprep.subr.mxu0 0.0
      %1634 = vmatpush1.msra.mxu0 %v215
      %1635 = vmatprep.subr.mxu0 0.0
      %1636 = vmatpush1.msra.mxu0 0.0
      %1637 = vmatprep.subr.mxu0 0.0
      %1638 = vmatpush1.msra.mxu0 0.0
      %1639 = vmatprep.subr.mxu0 0.0
      %1640 = vmatpush1.msra.mxu0 0.0
      %1641 = vmatprep.subr.mxu0 0.0
      %1642 = vmatpush1.msra.mxu0 0.0
      %1643 = vmatprep.subr.mxu0 0.0
      %1644 = vmatpush1.msra.mxu0 0.0
      %1645 = vmatprep.subr.mxu0 0.0
      %1646 = vmatpush1.msra.mxu0 0.0
      %1647 = vmatprep.subr.mxu0 0.0
      %1648 = vmatpush1.msra.mxu0 0.0
      %1649 = vmatprep.subr.mxu0 0.0
      %1650 = vmatpush1.msra.mxu0 0.0
      %1651 = vmatprep.subr.mxu0 0.0
      %1652 = vmatpush1.msra.mxu0 0.0
      %1653 = vmatprep.subr.mxu0 0.0
      %1654 = vmatpush1.msra.mxu0 0.0
      %1655 = vmatprep.subr.mxu0 0.0
      %1656 = vmatpush1.msra.mxu0 0.0
      %1657 = vmatprep.subr.mxu0 0.0
      %1658 = vmatpush1.msra.mxu0 0.0
      %1659 = vmatprep.subr.mxu0 0.0
      %1660 = vmatpush1.msra.mxu0 0.0
      %1661 = vmatprep.subr.mxu0 0.0
      %1662 = vmatpush1.msra.mxu0 0.0
      %1663 = vmatprep.subr.mxu0 0.0
      %1664 = vmatpush1.msra.mxu0 0.0
      %1665 = vmatprep.subr.mxu0 0.0
      %1666 = vmatpush1.msra.mxu0 0.0
      %1667 = vmatprep.subr.mxu0 0.0
      %1668 = vmatpush1.msra.mxu0 0.0
      %1669 = vmatprep.subr.mxu0 0.0
      %1670 = vmatpush1.msra.mxu0 0.0
      %1671 = vmatprep.subr.mxu0 0.0
      %1672 = vmatpush1.msra.mxu0 0.0
      %1673 = vmatprep.subr.mxu0 0.0
      %1674 = vmatpush1.msra.mxu0 0.0
      %1675 = vmatprep.subr.mxu0 0.0
      %1676 = vmatpush1.msra.mxu0 0.0
      %1677 = vmatprep.subr.mxu0 0.0
      %1678 = vmatpush1.msra.mxu0 0.0
      %1679 = vmatprep.subr.mxu0 0.0
      %1680 = vmatpush1.msra.mxu0 0.0
      %1681 = vmatprep.subr.mxu0 0.0
      %1682 = vmatpush1.msra.mxu0 0.0
      %1683 = vmatprep.subr.mxu0 0.0
      %1684 = vmatpush1.msra.mxu0 0.0
      %1685 = vmatprep.subr.mxu0 0.0
      %1686 = vmatpush1.msra.mxu0 0.0
      %1687 = vmatprep.subr.mxu0 0.0
      %1688 = vmatpush1.msra.mxu0 0.0
      %1689 = vmatprep.subr.mxu0 0.0
      %1690 = vmatpush1.msra.mxu0 0.0
      %1691 = vmatprep.subr.mxu0 0.0
      %1692 = vmatpush1.msra.mxu0 0.0
      %1693 = vmatprep.subr.mxu0 0.0
      %1694 = vmatpush1.msra.mxu0 0.0
      %1695 = vmatprep.mubr.f32.mxu0 0.0
      %1696 = vmatmul.mubr.f32.gmra.mrb[0].mxu0 %v1629
      %v1697 = vpop.f32.mrb[0].mxu0
      %v1698 = vadd.f32 0.0, %v1697
      %v1699 = vpop.f32.mrb[0].mxu0
      %1700 = vdwg.mxu0
      %v1702 = vsel %vm240, %v164, 0
      %1704 = vmatprep.subr.mxu0 0.0
      %1705 = vmatpush1.msra.mxu0 %v216
      %1706 = vmatprep.subr.mxu0 0.0
      %1707 = vmatpush1.msra.mxu0 %v217
      %1708 = vmatprep.subr.mxu0 0.0
      %1709 = vmatpush1.msra.mxu0 0.0
      %1710 = vmatprep.subr.mxu0 0.0
      %1711 = vmatpush1.msra.mxu0 0.0
      %1712 = vmatprep.subr.mxu0 0.0
      %1713 = vmatpush1.msra.mxu0 0.0
      %1714 = vmatprep.subr.mxu0 0.0
      %1715 = vmatpush1.msra.mxu0 0.0
      %1716 = vmatprep.subr.mxu0 0.0
      %1717 = vmatpush1.msra.mxu0 0.0
      %1718 = vmatprep.subr.mxu0 0.0
      %1719 = vmatpush1.msra.mxu0 0.0
      %1720 = vmatprep.subr.mxu0 0.0
      %1721 = vmatpush1.msra.mxu0 0.0
      %1722 = vmatprep.subr.mxu0 0.0
      %1723 = vmatpush1.msra.mxu0 0.0
      %1724 = vmatprep.subr.mxu0 0.0
      %1725 = vmatpush1.msra.mxu0 0.0
      %1726 = vmatprep.subr.mxu0 0.0
      %1727 = vmatpush1.msra.mxu0 0.0
      %1728 = vmatprep.subr.mxu0 0.0
      %1729 = vmatpush1.msra.mxu0 0.0
      %1730 = vmatprep.subr.mxu0 0.0
      %1731 = vmatpush1.msra.mxu0 0.0
      %1732 = vmatprep.subr.mxu0 0.0
      %1733 = vmatpush1.msra.mxu0 0.0
      %1734 = vmatprep.subr.mxu0 0.0
      %1735 = vmatpush1.msra.mxu0 0.0
      %1736 = vmatprep.subr.mxu0 0.0
      %1737 = vmatpush1.msra.mxu0 0.0
      %1738 = vmatprep.subr.mxu0 0.0
      %1739 = vmatpush1.msra.mxu0 0.0
      %1740 = vmatprep.subr.mxu0 0.0
      %1741 = vmatpush1.msra.mxu0 0.0
      %1742 = vmatprep.subr.mxu0 0.0
      %1743 = vmatpush1.msra.mxu0 0.0
      %1744 = vmatprep.subr.mxu0 0.0
      %1745 = vmatpush1.msra.mxu0 0.0
      %1746 = vmatprep.subr.mxu0 0.0
      %1747 = vmatpush1.msra.mxu0 0.0
      %1748 = vmatprep.subr.mxu0 0.0
      %1749 = vmatpush1.msra.mxu0 0.0
      %1750 = vmatprep.subr.mxu0 0.0
      %1751 = vmatpush1.msra.mxu0 0.0
      %1752 = vmatprep.subr.mxu0 0.0
      %1753 = vmatpush1.msra.mxu0 0.0
      %1754 = vmatprep.subr.mxu0 0.0
      %1755 = vmatpush1.msra.mxu0 0.0
      %1756 = vmatprep.subr.mxu0 0.0
      %1757 = vmatpush1.msra.mxu0 0.0
      %1758 = vmatprep.subr.mxu0 0.0
      %1759 = vmatpush1.msra.mxu0 0.0
      %1760 = vmatprep.subr.mxu0 0.0
      %1761 = vmatpush1.msra.mxu0 0.0
      %1762 = vmatprep.subr.mxu0 0.0
      %1763 = vmatpush1.msra.mxu0 0.0
      %1764 = vmatprep.subr.mxu0 0.0
      %1765 = vmatpush1.msra.mxu0 0.0
      %1766 = vmatprep.subr.mxu0 0.0
      %1767 = vmatpush1.msra.mxu0 0.0
      %1768 = vmatprep.mubr.f32.mxu0 0.0
      %1769 = vmatmul.mubr.f32.gmra.mrb[0].mxu0 %v1702
      %v1770 = vpop.f32.mrb[0].mxu0
      %v1771 = vadd.f32 0.0, %v1770
      %v1772 = vpop.f32.mrb[0].mxu0
      %1773 = vdwg.mxu0
      %v1775 = vsel %vm240, %v165, 0
      %1777 = vmatprep.subr.mxu0 0.0
      %1778 = vmatpush1.msra.mxu0 %v218
      %1779 = vmatprep.subr.mxu0 0.0
      %1780 = vmatpush1.msra.mxu0 %v219
      %1781 = vmatprep.subr.mxu0 0.0
      %1782 = vmatpush1.msra.mxu0 0.0
      %1783 = vmatprep.subr.mxu0 0.0
      %1784 = vmatpush1.msra.mxu0 0.0
      %1785 = vmatprep.subr.mxu0 0.0
      %1786 = vmatpush1.msra.mxu0 0.0
      %1787 = vmatprep.subr.mxu0 0.0
      %1788 = vmatpush1.msra.mxu0 0.0
      %1789 = vmatprep.subr.mxu0 0.0
      %1790 = vmatpush1.msra.mxu0 0.0
      %1791 = vmatprep.subr.mxu0 0.0
      %1792 = vmatpush1.msra.mxu0 0.0
      %1793 = vmatprep.subr.mxu0 0.0
      %1794 = vmatpush1.msra.mxu0 0.0
      %1795 = vmatprep.subr.mxu0 0.0
      %1796 = vmatpush1.msra.mxu0 0.0
      %1797 = vmatprep.subr.mxu0 0.0
      %1798 = vmatpush1.msra.mxu0 0.0
      %1799 = vmatprep.subr.mxu0 0.0
      %1800 = vmatpush1.msra.mxu0 0.0
      %1801 = vmatprep.subr.mxu0 0.0
      %1802 = vmatpush1.msra.mxu0 0.0
      %1803 = vmatprep.subr.mxu0 0.0
      %1804 = vmatpush1.msra.mxu0 0.0
      %1805 = vmatprep.subr.mxu0 0.0
      %1806 = vmatpush1.msra.mxu0 0.0
      %1807 = vmatprep.subr.mxu0 0.0
      %1808 = vmatpush1.msra.mxu0 0.0
      %1809 = vmatprep.subr.mxu0 0.0
      %1810 = vmatpush1.msra.mxu0 0.0
      %1811 = vmatprep.subr.mxu0 0.0
      %1812 = vmatpush1.msra.mxu0 0.0
      %1813 = vmatprep.subr.mxu0 0.0
      %1814 = vmatpush1.msra.mxu0 0.0
      %1815 = vmatprep.subr.mxu0 0.0
      %1816 = vmatpush1.msra.mxu0 0.0
      %1817 = vmatprep.subr.mxu0 0.0
      %1818 = vmatpush1.msra.mxu0 0.0
      %1819 = vmatprep.subr.mxu0 0.0
      %1820 = vmatpush1.msra.mxu0 0.0
      %1821 = vmatprep.subr.mxu0 0.0
      %1822 = vmatpush1.msra.mxu0 0.0
      %1823 = vmatprep.subr.mxu0 0.0
      %1824 = vmatpush1.msra.mxu0 0.0
      %1825 = vmatprep.subr.mxu0 0.0
      %1826 = vmatpush1.msra.mxu0 0.0
      %1827 = vmatprep.subr.mxu0 0.0
      %1828 = vmatpush1.msra.mxu0 0.0
      %1829 = vmatprep.subr.mxu0 0.0
      %1830 = vmatpush1.msra.mxu0 0.0
      %1831 = vmatprep.subr.mxu0 0.0
      %1832 = vmatpush1.msra.mxu0 0.0
      %1833 = vmatprep.subr.mxu0 0.0
      %1834 = vmatpush1.msra.mxu0 0.0
      %1835 = vmatprep.subr.mxu0 0.0
      %1836 = vmatpush1.msra.mxu0 0.0
      %1837 = vmatprep.subr.mxu0 0.0
      %1838 = vmatpush1.msra.mxu0 0.0
      %1839 = vmatprep.subr.mxu0 0.0
      %1840 = vmatpush1.msra.mxu0 0.0
      %1841 = vmatprep.mubr.f32.mxu0 0.0
      %1842 = vmatmul.mubr.f32.gmra.mrb[0].mxu0 %v1775
      %v1843 = vpop.f32.mrb[0].mxu0
      %v1844 = vadd.f32 0.0, %v1843
      %v1845 = vpop.f32.mrb[0].mxu0
      %1846 = vdwg.mxu0
      %v1848 = vsel %vm240, %v166, 0
      %1850 = vmatprep.subr.mxu0 0.0
      %1851 = vmatpush1.msra.mxu0 %v220
      %1852 = vmatprep.subr.mxu0 0.0
      %1853 = vmatpush1.msra.mxu0 %v221
      %1854 = vmatprep.subr.mxu0 0.0
      %1855 = vmatpush1.msra.mxu0 0.0
      %1856 = vmatprep.subr.mxu0 0.0
      %1857 = vmatpush1.msra.mxu0 0.0
      %1858 = vmatprep.subr.mxu0 0.0
      %1859 = vmatpush1.msra.mxu0 0.0
      %1860 = vmatprep.subr.mxu0 0.0
      %1861 = vmatpush1.msra.mxu0 0.0
      %1862 = vmatprep.subr.mxu0 0.0
      %1863 = vmatpush1.msra.mxu0 0.0
      %1864 = vmatprep.subr.mxu0 0.0
      %1865 = vmatpush1.msra.mxu0 0.0
      %1866 = vmatprep.subr.mxu0 0.0
      %1867 = vmatpush1.msra.mxu0 0.0
      %1868 = vmatprep.subr.mxu0 0.0
      %1869 = vmatpush1.msra.mxu0 0.0
      %1870 = vmatprep.subr.mxu0 0.0
      %1871 = vmatpush1.msra.mxu0 0.0
      %1872 = vmatprep.subr.mxu0 0.0
      %1873 = vmatpush1.msra.mxu0 0.0
      %1874 = vmatprep.subr.mxu0 0.0
      %1875 = vmatpush1.msra.mxu0 0.0
      %1876 = vmatprep.subr.mxu0 0.0
      %1877 = vmatpush1.msra.mxu0 0.0
      %1878 = vmatprep.subr.mxu0 0.0
      %1879 = vmatpush1.msra.mxu0 0.0
      %1880 = vmatprep.subr.mxu0 0.0
      %1881 = vmatpush1.msra.mxu0 0.0
      %1882 = vmatprep.subr.mxu0 0.0
      %1883 = vmatpush1.msra.mxu0 0.0
      %1884 = vmatprep.subr.mxu0 0.0
      %1885 = vmatpush1.msra.mxu0 0.0
      %1886 = vmatprep.subr.mxu0 0.0
      %1887 = vmatpush1.msra.mxu0 0.0
      %1888 = vmatprep.subr.mxu0 0.0
      %1889 = vmatpush1.msra.mxu0 0.0
      %1890 = vmatprep.subr.mxu0 0.0
      %1891 = vmatpush1.msra.mxu0 0.0
      %1892 = vmatprep.subr.mxu0 0.0
      %1893 = vmatpush1.msra.mxu0 0.0
      %1894 = vmatprep.subr.mxu0 0.0
      %1895 = vmatpush1.msra.mxu0 0.0
      %1896 = vmatprep.subr.mxu0 0.0
      %1897 = vmatpush1.msra.mxu0 0.0
      %1898 = vmatprep.subr.mxu0 0.0
      %1899 = vmatpush1.msra.mxu0 0.0
      %1900 = vmatprep.subr.mxu0 0.0
      %1901 = vmatpush1.msra.mxu0 0.0
      %1902 = vmatprep.subr.mxu0 0.0
      %1903 = vmatpush1.msra.mxu0 0.0
      %1904 = vmatprep.subr.mxu0 0.0
      %1905 = vmatpush1.msra.mxu0 0.0
      %1906 = vmatprep.subr.mxu0 0.0
      %1907 = vmatpush1.msra.mxu0 0.0
      %1908 = vmatprep.subr.mxu0 0.0
      %1909 = vmatpush1.msra.mxu0 0.0
      %1910 = vmatprep.subr.mxu0 0.0
      %1911 = vmatpush1.msra.mxu0 0.0
      %1912 = vmatprep.subr.mxu0 0.0
      %1913 = vmatpush1.msra.mxu0 0.0
      %1914 = vmatprep.mubr.f32.mxu0 0.0
      %1915 = vmatmul.mubr.f32.gmra.mrb[0].mxu0 %v1848
      %v1916 = vpop.f32.mrb[0].mxu0
      %v1917 = vadd.f32 0.0, %v1916
      %v1918 = vpop.f32.mrb[0].mxu0
      %1919 = vdwg.mxu0
      %v1921 = vsel %vm240, %v167, 0
      %1923 = vmatprep.subr.mxu0 0.0
      %1924 = vmatpush1.msra.mxu0 %v222
      %1925 = vmatprep.subr.mxu0 0.0
      %1926 = vmatpush1.msra.mxu0 %v223
      %1927 = vmatprep.subr.mxu0 0.0
      %1928 = vmatpush1.msra.mxu0 0.0
      %1929 = vmatprep.subr.mxu0 0.0
      %1930 = vmatpush1.msra.mxu0 0.0
      %1931 = vmatprep.subr.mxu0 0.0
      %1932 = vmatpush1.msra.mxu0 0.0
      %1933 = vmatprep.subr.mxu0 0.0
      %1934 = vmatpush1.msra.mxu0 0.0
      %1935 = vmatprep.subr.mxu0 0.0
      %1936 = vmatpush1.msra.mxu0 0.0
      %1937 = vmatprep.subr.mxu0 0.0
      %1938 = vmatpush1.msra.mxu0 0.0
      %1939 = vmatprep.subr.mxu0 0.0
      %1940 = vmatpush1.msra.mxu0 0.0
      %1941 = vmatprep.subr.mxu0 0.0
      %1942 = vmatpush1.msra.mxu0 0.0
      %1943 = vmatprep.subr.mxu0 0.0
      %1944 = vmatpush1.msra.mxu0 0.0
      %1945 = vmatprep.subr.mxu0 0.0
      %1946 = vmatpush1.msra.mxu0 0.0
      %1947 = vmatprep.subr.mxu0 0.0
      %1948 = vmatpush1.msra.mxu0 0.0
      %1949 = vmatprep.subr.mxu0 0.0
      %1950 = vmatpush1.msra.mxu0 0.0
      %1951 = vmatprep.subr.mxu0 0.0
      %1952 = vmatpush1.msra.mxu0 0.0
      %1953 = vmatprep.subr.mxu0 0.0
      %1954 = vmatpush1.msra.mxu0 0.0
      %1955 = vmatprep.subr.mxu0 0.0
      %1956 = vmatpush1.msra.mxu0 0.0
      %1957 = vmatprep.subr.mxu0 0.0
      %1958 = vmatpush1.msra.mxu0 0.0
      %1959 = vmatprep.subr.mxu0 0.0
      %1960 = vmatpush1.msra.mxu0 0.0
      %1961 = vmatprep.subr.mxu0 0.0
      %1962 = vmatpush1.msra.mxu0 0.0
      %1963 = vmatprep.subr.mxu0 0.0
      %1964 = vmatpush1.msra.mxu0 0.0
      %1965 = vmatprep.subr.mxu0 0.0
      %1966 = vmatpush1.msra.mxu0 0.0
      %1967 = vmatprep.subr.mxu0 0.0
      %1968 = vmatpush1.msra.mxu0 0.0
      %1969 = vmatprep.subr.mxu0 0.0
      %1970 = vmatpush1.msra.mxu0 0.0
      %1971 = vmatprep.subr.mxu0 0.0
      %1972 = vmatpush1.msra.mxu0 0.0
      %1973 = vmatprep.subr.mxu0 0.0
      %1974 = vmatpush1.msra.mxu0 0.0
      %1975 = vmatprep.subr.mxu0 0.0
      %1976 = vmatpush1.msra.mxu0 0.0
      %1977 = vmatprep.subr.mxu0 0.0
      %1978 = vmatpush1.msra.mxu0 0.0
      %1979 = vmatprep.subr.mxu0 0.0
      %1980 = vmatpush1.msra.mxu0 0.0
      %1981 = vmatprep.subr.mxu0 0.0
      %1982 = vmatpush1.msra.mxu0 0.0
      %1983 = vmatprep.subr.mxu0 0.0
      %1984 = vmatpush1.msra.mxu0 0.0
      %1985 = vmatprep.subr.mxu0 0.0
      %1986 = vmatpush1.msra.mxu0 0.0
      %1987 = vmatprep.mubr.f32.mxu0 0.0
      %1988 = vmatmul.mubr.f32.gmra.mrb[0].mxu0 %v1921
      %v1989 = vpop.f32.mrb[0].mxu0
      %v1990 = vadd.f32 0.0, %v1989
      %v1991 = vpop.f32.mrb[0].mxu0
      %1992 = vdwg.mxu0
      %v1994 = vsel %vm240, %v168, 0
      %1996 = vmatprep.subr.mxu0 0.0
      %1997 = vmatpush1.msra.mxu0 %v224
      %1998 = vmatprep.subr.mxu0 0.0
      %1999 = vmatpush1.msra.mxu0 %v225
      %2000 = vmatprep.subr.mxu0 0.0
      %2001 = vmatpush1.msra.mxu0 0.0
      %2002 = vmatprep.subr.mxu0 0.0
      %2003 = vmatpush1.msra.mxu0 0.0
      %2004 = vmatprep.subr.mxu0 0.0
      %2005 = vmatpush1.msra.mxu0 0.0
      %2006 = vmatprep.subr.mxu0 0.0
      %2007 = vmatpush1.msra.mxu0 0.0
      %2008 = vmatprep.subr.mxu0 0.0
      %2009 = vmatpush1.msra.mxu0 0.0
      %2010 = vmatprep.subr.mxu0 0.0
      %2011 = vmatpush1.msra.mxu0 0.0
      %2012 = vmatprep.subr.mxu0 0.0
      %2013 = vmatpush1.msra.mxu0 0.0
      %2014 = vmatprep.subr.mxu0 0.0
      %2015 = vmatpush1.msra.mxu0 0.0
      %2016 = vmatprep.subr.mxu0 0.0
      %2017 = vmatpush1.msra.mxu0 0.0
      %2018 = vmatprep.subr.mxu0 0.0
      %2019 = vmatpush1.msra.mxu0 0.0
      %2020 = vmatprep.subr.mxu0 0.0
      %2021 = vmatpush1.msra.mxu0 0.0
      %2022 = vmatprep.subr.mxu0 0.0
      %2023 = vmatpush1.msra.mxu0 0.0
      %2024 = vmatprep.subr.mxu0 0.0
      %2025 = vmatpush1.msra.mxu0 0.0
      %2026 = vmatprep.subr.mxu0 0.0
      %2027 = vmatpush1.msra.mxu0 0.0
      %2028 = vmatprep.subr.mxu0 0.0
      %2029 = vmatpush1.msra.mxu0 0.0
      %2030 = vmatprep.subr.mxu0 0.0
      %2031 = vmatpush1.msra.mxu0 0.0
      %2032 = vmatprep.subr.mxu0 0.0
      %2033 = vmatpush1.msra.mxu0 0.0
      %2034 = vmatprep.subr.mxu0 0.0
      %2035 = vmatpush1.msra.mxu0 0.0
      %2036 = vmatprep.subr.mxu0 0.0
      %2037 = vmatpush1.msra.mxu0 0.0
      %2038 = vmatprep.subr.mxu0 0.0
      %2039 = vmatpush1.msra.mxu0 0.0
      %2040 = vmatprep.subr.mxu0 0.0
      %2041 = vmatpush1.msra.mxu0 0.0
      %2042 = vmatprep.subr.mxu0 0.0
      %2043 = vmatpush1.msra.mxu0 0.0
      %2044 = vmatprep.subr.mxu0 0.0
      %2045 = vmatpush1.msra.mxu0 0.0
      %2046 = vmatprep.subr.mxu0 0.0
      %2047 = vmatpush1.msra.mxu0 0.0
      %2048 = vmatprep.subr.mxu0 0.0
      %2049 = vmatpush1.msra.mxu0 0.0
      %2050 = vmatprep.subr.mxu0 0.0
      %2051 = vmatpush1.msra.mxu0 0.0
      %2052 = vmatprep.subr.mxu0 0.0
      %2053 = vmatpush1.msra.mxu0 0.0
      %2054 = vmatprep.subr.mxu0 0.0
      %2055 = vmatpush1.msra.mxu0 0.0
      %2056 = vmatprep.subr.mxu0 0.0
      %2057 = vmatpush1.msra.mxu0 0.0
      %2058 = vmatprep.subr.mxu0 0.0
      %2059 = vmatpush1.msra.mxu0 0.0
      %2060 = vmatprep.mubr.f32.mxu0 0.0
      %2061 = vmatmul.mubr.f32.gmra.mrb[0].mxu0 %v1994
      %v2062 = vpop.f32.mrb[0].mxu0
      %v2063 = vadd.f32 0.0, %v2062
      %v2064 = vpop.f32.mrb[0].mxu0
      %2065 = vdwg.mxu0
      %v2067 = vsel %vm240, %v169, 0
      %2069 = vmatprep.subr.mxu0 0.0
      %2070 = vmatpush1.msra.mxu0 %v226
      %2071 = vmatprep.subr.mxu0 0.0
      %2072 = vmatpush1.msra.mxu0 %v227
      %2073 = vmatprep.subr.mxu0 0.0
      %2074 = vmatpush1.msra.mxu0 0.0
      %2075 = vmatprep.subr.mxu0 0.0
      %2076 = vmatpush1.msra.mxu0 0.0
      %2077 = vmatprep.subr.mxu0 0.0
      %2078 = vmatpush1.msra.mxu0 0.0
      %2079 = vmatprep.subr.mxu0 0.0
      %2080 = vmatpush1.msra.mxu0 0.0
      %2081 = vmatprep.subr.mxu0 0.0
      %2082 = vmatpush1.msra.mxu0 0.0
      %2083 = vmatprep.subr.mxu0 0.0
      %2084 = vmatpush1.msra.mxu0 0.0
      %2085 = vmatprep.subr.mxu0 0.0
      %2086 = vmatpush1.msra.mxu0 0.0
      %2087 = vmatprep.subr.mxu0 0.0
      %2088 = vmatpush1.msra.mxu0 0.0
      %2089 = vmatprep.subr.mxu0 0.0
      %2090 = vmatpush1.msra.mxu0 0.0
      %2091 = vmatprep.subr.mxu0 0.0
      %2092 = vmatpush1.msra.mxu0 0.0
      %2093 = vmatprep.subr.mxu0 0.0
      %2094 = vmatpush1.msra.mxu0 0.0
      %2095 = vmatprep.subr.mxu0 0.0
      %2096 = vmatpush1.msra.mxu0 0.0
      %2097 = vmatprep.subr.mxu0 0.0
      %2098 = vmatpush1.msra.mxu0 0.0
      %2099 = vmatprep.subr.mxu0 0.0
      %2100 = vmatpush1.msra.mxu0 0.0
      %2101 = vmatprep.subr.mxu0 0.0
      %2102 = vmatpush1.msra.mxu0 0.0
      %2103 = vmatprep.subr.mxu0 0.0
      %2104 = vmatpush1.msra.mxu0 0.0
      %2105 = vmatprep.subr.mxu0 0.0
      %2106 = vmatpush1.msra.mxu0 0.0
      %2107 = vmatprep.subr.mxu0 0.0
      %2108 = vmatpush1.msra.mxu0 0.0
      %2109 = vmatprep.subr.mxu0 0.0
      %2110 = vmatpush1.msra.mxu0 0.0
      %2111 = vmatprep.subr.mxu0 0.0
      %2112 = vmatpush1.msra.mxu0 0.0
      %2113 = vmatprep.subr.mxu0 0.0
      %2114 = vmatpush1.msra.mxu0 0.0
      %2115 = vmatprep.subr.mxu0 0.0
      %2116 = vmatpush1.msra.mxu0 0.0
      %2117 = vmatprep.subr.mxu0 0.0
      %2118 = vmatpush1.msra.mxu0 0.0
      %2119 = vmatprep.subr.mxu0 0.0
      %2120 = vmatpush1.msra.mxu0 0.0
      %2121 = vmatprep.subr.mxu0 0.0
      %2122 = vmatpush1.msra.mxu0 0.0
      %2123 = vmatprep.subr.mxu0 0.0
      %2124 = vmatpush1.msra.mxu0 0.0
      %2125 = vmatprep.subr.mxu0 0.0
      %2126 = vmatpush1.msra.mxu0 0.0
      %2127 = vmatprep.subr.mxu0 0.0
      %2128 = vmatpush1.msra.mxu0 0.0
      %2129 = vmatprep.subr.mxu0 0.0
      %2130 = vmatpush1.msra.mxu0 0.0
      %2131 = vmatprep.subr.mxu0 0.0
      %2132 = vmatpush1.msra.mxu0 0.0
      %2133 = vmatprep.mubr.f32.mxu0 0.0
      %2134 = vmatmul.mubr.f32.gmra.mrb[0].mxu0 %v2067
      %v2135 = vpop.f32.mrb[0].mxu0
      %v2136 = vadd.f32 0.0, %v2135
      %v2137 = vpop.f32.mrb[0].mxu0
      %2138 = vdwg.mxu0
      %v2140 = vsel %vm240, %v170, 0
      %2142 = vmatprep.subr.mxu0 0.0
      %2143 = vmatpush1.msra.mxu0 %v228
      %2144 = vmatprep.subr.mxu0 0.0
      %2145 = vmatpush1.msra.mxu0 %v229
      %2146 = vmatprep.subr.mxu0 0.0
      %2147 = vmatpush1.msra.mxu0 0.0
      %2148 = vmatprep.subr.mxu0 0.0
      %2149 = vmatpush1.msra.mxu0 0.0
      %2150 = vmatprep.subr.mxu0 0.0
      %2151 = vmatpush1.msra.mxu0 0.0
      %2152 = vmatprep.subr.mxu0 0.0
      %2153 = vmatpush1.msra.mxu0 0.0
      %2154 = vmatprep.subr.mxu0 0.0
      %2155 = vmatpush1.msra.mxu0 0.0
      %2156 = vmatprep.subr.mxu0 0.0
      %2157 = vmatpush1.msra.mxu0 0.0
      %2158 = vmatprep.subr.mxu0 0.0
      %2159 = vmatpush1.msra.mxu0 0.0
      %2160 = vmatprep.subr.mxu0 0.0
      %2161 = vmatpush1.msra.mxu0 0.0
      %2162 = vmatprep.subr.mxu0 0.0
      %2163 = vmatpush1.msra.mxu0 0.0
      %2164 = vmatprep.subr.mxu0 0.0
      %2165 = vmatpush1.msra.mxu0 0.0
      %2166 = vmatprep.subr.mxu0 0.0
      %2167 = vmatpush1.msra.mxu0 0.0
      %2168 = vmatprep.subr.mxu0 0.0
      %2169 = vmatpush1.msra.mxu0 0.0
      %2170 = vmatprep.subr.mxu0 0.0
      %2171 = vmatpush1.msra.mxu0 0.0
      %2172 = vmatprep.subr.mxu0 0.0
      %2173 = vmatpush1.msra.mxu0 0.0
      %2174 = vmatprep.subr.mxu0 0.0
      %2175 = vmatpush1.msra.mxu0 0.0
      %2176 = vmatprep.subr.mxu0 0.0
      %2177 = vmatpush1.msra.mxu0 0.0
      %2178 = vmatprep.subr.mxu0 0.0
      %2179 = vmatpush1.msra.mxu0 0.0
      %2180 = vmatprep.subr.mxu0 0.0
      %2181 = vmatpush1.msra.mxu0 0.0
      %2182 = vmatprep.subr.mxu0 0.0
      %2183 = vmatpush1.msra.mxu0 0.0
      %2184 = vmatprep.subr.mxu0 0.0
      %2185 = vmatpush1.msra.mxu0 0.0
      %2186 = vmatprep.subr.mxu0 0.0
      %2187 = vmatpush1.msra.mxu0 0.0
      %2188 = vmatprep.subr.mxu0 0.0
      %2189 = vmatpush1.msra.mxu0 0.0
      %2190 = vmatprep.subr.mxu0 0.0
      %2191 = vmatpush1.msra.mxu0 0.0
      %2192 = vmatprep.subr.mxu0 0.0
      %2193 = vmatpush1.msra.mxu0 0.0
      %2194 = vmatprep.subr.mxu0 0.0
      %2195 = vmatpush1.msra.mxu0 0.0
      %2196 = vmatprep.subr.mxu0 0.0
      %2197 = vmatpush1.msra.mxu0 0.0
      %2198 = vmatprep.subr.mxu0 0.0
      %2199 = vmatpush1.msra.mxu0 0.0
      %2200 = vmatprep.subr.mxu0 0.0
      %2201 = vmatpush1.msra.mxu0 0.0
      %2202 = vmatprep.subr.mxu0 0.0
      %2203 = vmatpush1.msra.mxu0 0.0
      %2204 = vmatprep.subr.mxu0 0.0
      %2205 = vmatpush1.msra.mxu0 0.0
      %2206 = vmatprep.mubr.f32.mxu0 0.0
      %2207 = vmatmul.mubr.f32.gmra.mrb[0].mxu0 %v2140
      %v2208 = vpop.f32.mrb[0].mxu0
      %v2209 = vadd.f32 0.0, %v2208
      %v2210 = vpop.f32.mrb[0].mxu0
      %2211 = vdwg.mxu0
      %v2213 = vsel %vm240, %v171, 0
      %2215 = vmatprep.subr.mxu0 0.0
      %2216 = vmatpush1.msra.mxu0 %v230
      %2217 = vmatprep.subr.mxu0 0.0
      %2218 = vmatpush1.msra.mxu0 %v231
      %2219 = vmatprep.subr.mxu0 0.0
      %2220 = vmatpush1.msra.mxu0 0.0
      %2221 = vmatprep.subr.mxu0 0.0
      %2222 = vmatpush1.msra.mxu0 0.0
      %2223 = vmatprep.subr.mxu0 0.0
      %2224 = vmatpush1.msra.mxu0 0.0
      %2225 = vmatprep.subr.mxu0 0.0
      %2226 = vmatpush1.msra.mxu0 0.0
      %2227 = vmatprep.subr.mxu0 0.0
      %2228 = vmatpush1.msra.mxu0 0.0
      %2229 = vmatprep.subr.mxu0 0.0
      %2230 = vmatpush1.msra.mxu0 0.0
      %2231 = vmatprep.subr.mxu0 0.0
      %2232 = vmatpush1.msra.mxu0 0.0
      %2233 = vmatprep.subr.mxu0 0.0
      %2234 = vmatpush1.msra.mxu0 0.0
      %2235 = vmatprep.subr.mxu0 0.0
      %2236 = vmatpush1.msra.mxu0 0.0
      %2237 = vmatprep.subr.mxu0 0.0
      %2238 = vmatpush1.msra.mxu0 0.0
      %2239 = vmatprep.subr.mxu0 0.0
      %2240 = vmatpush1.msra.mxu0 0.0
      %2241 = vmatprep.subr.mxu0 0.0
      %2242 = vmatpush1.msra.mxu0 0.0
      %2243 = vmatprep.subr.mxu0 0.0
      %2244 = vmatpush1.msra.mxu0 0.0
      %2245 = vmatprep.subr.mxu0 0.0
      %2246 = vmatpush1.msra.mxu0 0.0
      %2247 = vmatprep.subr.mxu0 0.0
      %2248 = vmatpush1.msra.mxu0 0.0
      %2249 = vmatprep.subr.mxu0 0.0
      %2250 = vmatpush1.msra.mxu0 0.0
      %2251 = vmatprep.subr.mxu0 0.0
      %2252 = vmatpush1.msra.mxu0 0.0
      %2253 = vmatprep.subr.mxu0 0.0
      %2254 = vmatpush1.msra.mxu0 0.0
      %2255 = vmatprep.subr.mxu0 0.0
      %2256 = vmatpush1.msra.mxu0 0.0
      %2257 = vmatprep.subr.mxu0 0.0
      %2258 = vmatpush1.msra.mxu0 0.0
      %2259 = vmatprep.subr.mxu0 0.0
      %2260 = vmatpush1.msra.mxu0 0.0
      %2261 = vmatprep.subr.mxu0 0.0
      %2262 = vmatpush1.msra.mxu0 0.0
      %2263 = vmatprep.subr.mxu0 0.0
      %2264 = vmatpush1.msra.mxu0 0.0
      %2265 = vmatprep.subr.mxu0 0.0
      %2266 = vmatpush1.msra.mxu0 0.0
      %2267 = vmatprep.subr.mxu0 0.0
      %2268 = vmatpush1.msra.mxu0 0.0
      %2269 = vmatprep.subr.mxu0 0.0
      %2270 = vmatpush1.msra.mxu0 0.0
      %2271 = vmatprep.subr.mxu0 0.0
      %2272 = vmatpush1.msra.mxu0 0.0
      %2273 = vmatprep.subr.mxu0 0.0
      %2274 = vmatpush1.msra.mxu0 0.0
      %2275 = vmatprep.subr.mxu0 0.0
      %2276 = vmatpush1.msra.mxu0 0.0
      %2277 = vmatprep.subr.mxu0 0.0
      %2278 = vmatpush1.msra.mxu0 0.0
      %2279 = vmatprep.mubr.f32.mxu0 0.0
      %2280 = vmatmul.mubr.f32.gmra.mrb[0].mxu0 %v2213
      %v2281 = vpop.f32.mrb[0].mxu0
      %v2282 = vadd.f32 0.0, %v2281
      %v2283 = vpop.f32.mrb[0].mxu0
      %2284 = vdwg.mxu0
      %v2286 = vsel %vm240, %v172, 0
      %2288 = vmatprep.subr.mxu0 0.0
      %2289 = vmatpush1.msra.mxu0 %v232
      %2290 = vmatprep.subr.mxu0 0.0
      %2291 = vmatpush1.msra.mxu0 %v233
      %2292 = vmatprep.subr.mxu0 0.0
      %2293 = vmatpush1.msra.mxu0 0.0
      %2294 = vmatprep.subr.mxu0 0.0
      %2295 = vmatpush1.msra.mxu0 0.0
      %2296 = vmatprep.subr.mxu0 0.0
      %2297 = vmatpush1.msra.mxu0 0.0
      %2298 = vmatprep.subr.mxu0 0.0
      %2299 = vmatpush1.msra.mxu0 0.0
      %2300 = vmatprep.subr.mxu0 0.0
      %2301 = vmatpush1.msra.mxu0 0.0
      %2302 = vmatprep.subr.mxu0 0.0
      %2303 = vmatpush1.msra.mxu0 0.0
      %2304 = vmatprep.subr.mxu0 0.0
      %2305 = vmatpush1.msra.mxu0 0.0
      %2306 = vmatprep.subr.mxu0 0.0
      %2307 = vmatpush1.msra.mxu0 0.0
      %2308 = vmatprep.subr.mxu0 0.0
      %2309 = vmatpush1.msra.mxu0 0.0
      %2310 = vmatprep.subr.mxu0 0.0
      %2311 = vmatpush1.msra.mxu0 0.0
      %2312 = vmatprep.subr.mxu0 0.0
      %2313 = vmatpush1.msra.mxu0 0.0
      %2314 = vmatprep.subr.mxu0 0.0
      %2315 = vmatpush1.msra.mxu0 0.0
      %2316 = vmatprep.subr.mxu0 0.0
      %2317 = vmatpush1.msra.mxu0 0.0
      %2318 = vmatprep.subr.mxu0 0.0
      %2319 = vmatpush1.msra.mxu0 0.0
      %2320 = vmatprep.subr.mxu0 0.0
      %2321 = vmatpush1.msra.mxu0 0.0
      %2322 = vmatprep.subr.mxu0 0.0
      %2323 = vmatpush1.msra.mxu0 0.0
      %2324 = vmatprep.subr.mxu0 0.0
      %2325 = vmatpush1.msra.mxu0 0.0
      %2326 = vmatprep.subr.mxu0 0.0
      %2327 = vmatpush1.msra.mxu0 0.0
      %2328 = vmatprep.subr.mxu0 0.0
      %2329 = vmatpush1.msra.mxu0 0.0
      %2330 = vmatprep.subr.mxu0 0.0
      %2331 = vmatpush1.msra.mxu0 0.0
      %2332 = vmatprep.subr.mxu0 0.0
      %2333 = vmatpush1.msra.mxu0 0.0
      %2334 = vmatprep.subr.mxu0 0.0
      %2335 = vmatpush1.msra.mxu0 0.0
      %2336 = vmatprep.subr.mxu0 0.0
      %2337 = vmatpush1.msra.mxu0 0.0
      %2338 = vmatprep.subr.mxu0 0.0
      %2339 = vmatpush1.msra.mxu0 0.0
      %2340 = vmatprep.subr.mxu0 0.0
      %2341 = vmatpush1.msra.mxu0 0.0
      %2342 = vmatprep.subr.mxu0 0.0
      %2343 = vmatpush1.msra.mxu0 0.0
      %2344 = vmatprep.subr.mxu0 0.0
      %2345 = vmatpush1.msra.mxu0 0.0
      %2346 = vmatprep.subr.mxu0 0.0
      %2347 = vmatpush1.msra.mxu0 0.0
      %2348 = vmatprep.subr.mxu0 0.0
      %2349 = vmatpush1.msra.mxu0 0.0
      %2350 = vmatprep.subr.mxu0 0.0
      %2351 = vmatpush1.msra.mxu0 0.0
      %2352 = vmatprep.mubr.f32.mxu0 0.0
      %2353 = vmatmul.mubr.f32.gmra.mrb[0].mxu0 %v2286
      %v2354 = vpop.f32.mrb[0].mxu0
      %v2355 = vadd.f32 0.0, %v2354
      %v2356 = vpop.f32.mrb[0].mxu0
      %2357 = vdwg.mxu0
      %v2359 = vsel %vm240, %v173, 0
      %2361 = vmatprep.subr.mxu0 0.0
      %2362 = vmatpush1.msra.mxu0 %v234
      %2363 = vmatprep.subr.mxu0 0.0
      %2364 = vmatpush1.msra.mxu0 %v235
      %2365 = vmatprep.subr.mxu0 0.0
      %2366 = vmatpush1.msra.mxu0 0.0
      %2367 = vmatprep.subr.mxu0 0.0
      %2368 = vmatpush1.msra.mxu0 0.0
      %2369 = vmatprep.subr.mxu0 0.0
      %2370 = vmatpush1.msra.mxu0 0.0
      %2371 = vmatprep.subr.mxu0 0.0
      %2372 = vmatpush1.msra.mxu0 0.0
      %2373 = vmatprep.subr.mxu0 0.0
      %2374 = vmatpush1.msra.mxu0 0.0
      %2375 = vmatprep.subr.mxu0 0.0
      %2376 = vmatpush1.msra.mxu0 0.0
      %2377 = vmatprep.subr.mxu0 0.0
      %2378 = vmatpush1.msra.mxu0 0.0
      %2379 = vmatprep.subr.mxu0 0.0
      %2380 = vmatpush1.msra.mxu0 0.0
      %2381 = vmatprep.subr.mxu0 0.0
      %2382 = vmatpush1.msra.mxu0 0.0
      %2383 = vmatprep.subr.mxu0 0.0
      %2384 = vmatpush1.msra.mxu0 0.0
      %2385 = vmatprep.subr.mxu0 0.0
      %2386 = vmatpush1.msra.mxu0 0.0
      %2387 = vmatprep.subr.mxu0 0.0
      %2388 = vmatpush1.msra.mxu0 0.0
      %2389 = vmatprep.subr.mxu0 0.0
      %2390 = vmatpush1.msra.mxu0 0.0
      %2391 = vmatprep.subr.mxu0 0.0
      %2392 = vmatpush1.msra.mxu0 0.0
      %2393 = vmatprep.subr.mxu0 0.0
      %2394 = vmatpush1.msra.mxu0 0.0
      %2395 = vmatprep.subr.mxu0 0.0
      %2396 = vmatpush1.msra.mxu0 0.0
      %2397 = vmatprep.subr.mxu0 0.0
      %2398 = vmatpush1.msra.mxu0 0.0
      %2399 = vmatprep.subr.mxu0 0.0
      %2400 = vmatpush1.msra.mxu0 0.0
      %2401 = vmatprep.subr.mxu0 0.0
      %2402 = vmatpush1.msra.mxu0 0.0
      %2403 = vmatprep.subr.mxu0 0.0
      %2404 = vmatpush1.msra.mxu0 0.0
      %2405 = vmatprep.subr.mxu0 0.0
      %2406 = vmatpush1.msra.mxu0 0.0
      %2407 = vmatprep.subr.mxu0 0.0
      %2408 = vmatpush1.msra.mxu0 0.0
      %2409 = vmatprep.subr.mxu0 0.0
      %2410 = vmatpush1.msra.mxu0 0.0
      %2411 = vmatprep.subr.mxu0 0.0
      %2412 = vmatpush1.msra.mxu0 0.0
      %2413 = vmatprep.subr.mxu0 0.0
      %2414 = vmatpush1.msra.mxu0 0.0
      %2415 = vmatprep.subr.mxu0 0.0
      %2416 = vmatpush1.msra.mxu0 0.0
      %2417 = vmatprep.subr.mxu0 0.0
      %2418 = vmatpush1.msra.mxu0 0.0
      %2419 = vmatprep.subr.mxu0 0.0
      %2420 = vmatpush1.msra.mxu0 0.0
      %2421 = vmatprep.subr.mxu0 0.0
      %2422 = vmatpush1.msra.mxu0 0.0
      %2423 = vmatprep.subr.mxu0 0.0
      %2424 = vmatpush1.msra.mxu0 0.0
      %2425 = vmatprep.mubr.f32.mxu0 0.0
      %2426 = vmatmul.mubr.f32.gmra.mrb[0].mxu0 %v2359
      %v2427 = vpop.f32.mrb[0].mxu0
      %v2428 = vadd.f32 0.0, %v2427
      %v2429 = vpop.f32.mrb[0].mxu0
      %2430 = vdwg.mxu0
      %v2432 = vsel %vm240, %v174, 0
      %2434 = vmatprep.subr.mxu0 0.0
      %2435 = vmatpush1.msra.mxu0 %v236
      %2436 = vmatprep.subr.mxu0 0.0
      %2437 = vmatpush1.msra.mxu0 %v237
      %2438 = vmatprep.subr.mxu0 0.0
      %2439 = vmatpush1.msra.mxu0 0.0
      %2440 = vmatprep.subr.mxu0 0.0
      %2441 = vmatpush1.msra.mxu0 0.0
      %2442 = vmatprep.subr.mxu0 0.0
      %2443 = vmatpush1.msra.mxu0 0.0
      %2444 = vmatprep.subr.mxu0 0.0
      %2445 = vmatpush1.msra.mxu0 0.0
      %2446 = vmatprep.subr.mxu0 0.0
      %2447 = vmatpush1.msra.mxu0 0.0
      %2448 = vmatprep.subr.mxu0 0.0
      %2449 = vmatpush1.msra.mxu0 0.0
      %2450 = vmatprep.subr.mxu0 0.0
      %2451 = vmatpush1.msra.mxu0 0.0
      %2452 = vmatprep.subr.mxu0 0.0
      %2453 = vmatpush1.msra.mxu0 0.0
      %2454 = vmatprep.subr.mxu0 0.0
      %2455 = vmatpush1.msra.mxu0 0.0
      %2456 = vmatprep.subr.mxu0 0.0
      %2457 = vmatpush1.msra.mxu0 0.0
      %2458 = vmatprep.subr.mxu0 0.0
      %2459 = vmatpush1.msra.mxu0 0.0
      %2460 = vmatprep.subr.mxu0 0.0
      %2461 = vmatpush1.msra.mxu0 0.0
      %2462 = vmatprep.subr.mxu0 0.0
      %2463 = vmatpush1.msra.mxu0 0.0
      %2464 = vmatprep.subr.mxu0 0.0
      %2465 = vmatpush1.msra.mxu0 0.0
      %2466 = vmatprep.subr.mxu0 0.0
      %2467 = vmatpush1.msra.mxu0 0.0
      %2468 = vmatprep.subr.mxu0 0.0
      %2469 = vmatpush1.msra.mxu0 0.0
      %2470 = vmatprep.subr.mxu0 0.0
      %2471 = vmatpush1.msra.mxu0 0.0
      %2472 = vmatprep.subr.mxu0 0.0
      %2473 = vmatpush1.msra.mxu0 0.0
      %2474 = vmatprep.subr.mxu0 0.0
      %2475 = vmatpush1.msra.mxu0 0.0
      %2476 = vmatprep.subr.mxu0 0.0
      %2477 = vmatpush1.msra.mxu0 0.0
      %2478 = vmatprep.subr.mxu0 0.0
      %2479 = vmatpush1.msra.mxu0 0.0
      %2480 = vmatprep.subr.mxu0 0.0
      %2481 = vmatpush1.msra.mxu0 0.0
      %2482 = vmatprep.subr.mxu0 0.0
      %2483 = vmatpush1.msra.mxu0 0.0
      %2484 = vmatprep.subr.mxu0 0.0
      %2485 = vmatpush1.msra.mxu0 0.0
      %2486 = vmatprep.subr.mxu0 0.0
      %2487 = vmatpush1.msra.mxu0 0.0
      %2488 = vmatprep.subr.mxu0 0.0
      %2489 = vmatpush1.msra.mxu0 0.0
      %2490 = vmatprep.subr.mxu0 0.0
      %2491 = vmatpush1.msra.mxu0 0.0
      %2492 = vmatprep.subr.mxu0 0.0
      %2493 = vmatpush1.msra.mxu0 0.0
      %2494 = vmatprep.subr.mxu0 0.0
      %2495 = vmatpush1.msra.mxu0 0.0
      %2496 = vmatprep.subr.mxu0 0.0
      %2497 = vmatpush1.msra.mxu0 0.0
      %2498 = vmatprep.mubr.f32.mxu0 0.0
      %2499 = vmatmul.mubr.f32.gmra.mrb[0].mxu0 %v2432
      %v2500 = vpop.f32.mrb[0].mxu0
      %v2501 = vadd.f32 0.0, %v2500
      %v2502 = vpop.f32.mrb[0].mxu0
      %2503 = vdwg.mxu0
      %v2505 = vsel %vm240, %v175, 0
      %2507 = vmatprep.subr.mxu0 0.0
      %2508 = vmatpush1.msra.mxu0 %v238
      %2509 = vmatprep.subr.mxu0 0.0
      %2510 = vmatpush1.msra.mxu0 %v239
      %2511 = vmatprep.subr.mxu0 0.0
      %2512 = vmatpush1.msra.mxu0 0.0
      %2513 = vmatprep.subr.mxu0 0.0
      %2514 = vmatpush1.msra.mxu0 0.0
      %2515 = vmatprep.subr.mxu0 0.0
      %2516 = vmatpush1.msra.mxu0 0.0
      %2517 = vmatprep.subr.mxu0 0.0
      %2518 = vmatpush1.msra.mxu0 0.0
      %2519 = vmatprep.subr.mxu0 0.0
      %2520 = vmatpush1.msra.mxu0 0.0
      %2521 = vmatprep.subr.mxu0 0.0
      %2522 = vmatpush1.msra.mxu0 0.0
      %2523 = vmatprep.subr.mxu0 0.0
      %2524 = vmatpush1.msra.mxu0 0.0
      %2525 = vmatprep.subr.mxu0 0.0
      %2526 = vmatpush1.msra.mxu0 0.0
      %2527 = vmatprep.subr.mxu0 0.0
      %2528 = vmatpush1.msra.mxu0 0.0
      %2529 = vmatprep.subr.mxu0 0.0
      %2530 = vmatpush1.msra.mxu0 0.0
      %2531 = vmatprep.subr.mxu0 0.0
      %2532 = vmatpush1.msra.mxu0 0.0
      %2533 = vmatprep.subr.mxu0 0.0
      %2534 = vmatpush1.msra.mxu0 0.0
      %2535 = vmatprep.subr.mxu0 0.0
      %2536 = vmatpush1.msra.mxu0 0.0
      %2537 = vmatprep.subr.mxu0 0.0
      %2538 = vmatpush1.msra.mxu0 0.0
      %2539 = vmatprep.subr.mxu0 0.0
      %2540 = vmatpush1.msra.mxu0 0.0
      %2541 = vmatprep.subr.mxu0 0.0
      %2542 = vmatpush1.msra.mxu0 0.0
      %2543 = vmatprep.subr.mxu0 0.0
      %2544 = vmatpush1.msra.mxu0 0.0
      %2545 = vmatprep.subr.mxu0 0.0
      %2546 = vmatpush1.msra.mxu0 0.0
      %2547 = vmatprep.subr.mxu0 0.0
      %2548 = vmatpush1.msra.mxu0 0.0
      %2549 = vmatprep.subr.mxu0 0.0
      %2550 = vmatpush1.msra.mxu0 0.0
      %2551 = vmatprep.subr.mxu0 0.0
      %2552 = vmatpush1.msra.mxu0 0.0
      %2553 = vmatprep.subr.mxu0 0.0
      %2554 = vmatpush1.msra.mxu0 0.0
      %2555 = vmatprep.subr.mxu0 0.0
      %2556 = vmatpush1.msra.mxu0 0.0
      %2557 = vmatprep.subr.mxu0 0.0
      %2558 = vmatpush1.msra.mxu0 0.0
      %2559 = vmatprep.subr.mxu0 0.0
      %2560 = vmatpush1.msra.mxu0 0.0
      %2561 = vmatprep.subr.mxu0 0.0
      %2562 = vmatpush1.msra.mxu0 0.0
      %2563 = vmatprep.subr.mxu0 0.0
      %2564 = vmatpush1.msra.mxu0 0.0
      %2565 = vmatprep.subr.mxu0 0.0
      %2566 = vmatpush1.msra.mxu0 0.0
      %2567 = vmatprep.subr.mxu0 0.0
      %2568 = vmatpush1.msra.mxu0 0.0
      %2569 = vmatprep.subr.mxu0 0.0
      %2570 = vmatpush1.msra.mxu0 0.0
      %2571 = vmatprep.mubr.f32.mxu0 0.0
      %2572 = vmatmul.mubr.f32.gmra.mrb[0].mxu0 %v2505
      %v2573 = vpop.f32.mrb[0].mxu0
      %v2574 = vadd.f32 0.0, %v2573
      %v2575 = vpop.f32.mrb[0].mxu0
      %2576 = vdwg.mxu0
      %v2577 = vmul.f32 %v311, 0.5
      %v2578 = vmul.f32 %v384, 0.5
      %v2579 = vmul.f32 %v457, 0.5
      %v2580 = vmul.f32 %v530, 0.5
      %v2581 = vmul.f32 %v603, 0.5
      %v2582 = vmul.f32 %v676, 0.5
      %v2583 = vmul.f32 %v749, 0.5
      %v2584 = vmul.f32 %v822, 0.5
      %v2585 = vmul.f32 %v895, 0.5
      %v2586 = vmul.f32 %v968, 0.5
      %v2587 = vmul.f32 %v1041, 0.5
      %v2588 = vmul.f32 %v1114, 0.5
      %v2589 = vmul.f32 %v1187, 0.5
      %v2590 = vmul.f32 %v1260, 0.5
      %v2591 = vmul.f32 %v1333, 0.5
      %v2592 = vmul.f32 %v1406, 0.5
      %v2593 = vmul.f32 %v1479, 0.5
      %v2594 = vmul.f32 %v1552, 0.5
      %v2595 = vmul.f32 %v1625, 0.5
      %v2596 = vmul.f32 %v1698, 0.5
      %v2597 = vmul.f32 %v1771, 0.5
      %v2598 = vmul.f32 %v1844, 0.5
      %v2599 = vmul.f32 %v1917, 0.5
      %v2600 = vmul.f32 %v1990, 0.5
      %v2601 = vmul.f32 %v2063, 0.5
      %v2602 = vmul.f32 %v2136, 0.5
      %v2603 = vmul.f32 %v2209, 0.5
      %v2604 = vmul.f32 %v2282, 0.5
      %v2605 = vmul.f32 %v2355, 0.5
      %v2606 = vmul.f32 %v2428, 0.5
      %v2607 = vmul.f32 %v2501, 0.5
      %v2608 = vmul.f32 %v2574, 0.5
      %v2609 = vmul.f32 %v311, 0.70710677
      %v2610 = vmul.f32 %v384, 0.70710677
      %v2611 = vmul.f32 %v457, 0.70710677
      %v2612 = vmul.f32 %v530, 0.70710677
      %v2613 = vmul.f32 %v603, 0.70710677
      %v2614 = vmul.f32 %v676, 0.70710677
      %v2615 = vmul.f32 %v749, 0.70710677
      %v2616 = vmul.f32 %v822, 0.70710677
      %v2617 = vmul.f32 %v895, 0.70710677
      %v2618 = vmul.f32 %v968, 0.70710677
      %v2619 = vmul.f32 %v1041, 0.70710677
      %v2620 = vmul.f32 %v1114, 0.70710677
      %v2621 = vmul.f32 %v1187, 0.70710677
      %v2622 = vmul.f32 %v1260, 0.70710677
      %v2623 = vmul.f32 %v1333, 0.70710677
      %v2624 = vmul.f32 %v1406, 0.70710677
      %v2625 = vmul.f32 %v1479, 0.70710677
      %v2626 = vmul.f32 %v1552, 0.70710677
      %v2627 = vmul.f32 %v1625, 0.70710677
      %v2628 = vmul.f32 %v1698, 0.70710677
      %v2629 = vmul.f32 %v1771, 0.70710677
      %v2630 = vmul.f32 %v1844, 0.70710677
      %v2631 = vmul.f32 %v1917, 0.70710677
      %v2632 = vmul.f32 %v1990, 0.70710677
      %v2633 = vmul.f32 %v2063, 0.70710677
      %v2634 = vmul.f32 %v2136, 0.70710677
      %v2635 = vmul.f32 %v2209, 0.70710677
      %v2636 = vmul.f32 %v2282, 0.70710677
      %v2637 = vmul.f32 %v2355, 0.70710677
      %v2638 = vmul.f32 %v2428, 0.70710677
      %v2639 = vmul.f32 %v2501, 0.70710677
      %v2640 = vmul.f32 %v2574, 0.70710677
      %vm2641 = vcmp.ge.f32.partialorder %v2609, 0.0
      %vm2642 = vcmp.ge.f32.partialorder %v2610, 0.0
      %vm2643 = vcmp.ge.f32.partialorder %v2611, 0.0
      %vm2644 = vcmp.ge.f32.partialorder %v2612, 0.0
      %vm2645 = vcmp.ge.f32.partialorder %v2613, 0.0
      %vm2646 = vcmp.ge.f32.partialorder %v2614, 0.0
      %vm2647 = vcmp.ge.f32.partialorder %v2615, 0.0
      %vm2648 = vcmp.ge.f32.partialorder %v2616, 0.0
      %vm2649 = vcmp.ge.f32.partialorder %v2617, 0.0
      %vm2650 = vcmp.ge.f32.partialorder %v2618, 0.0
      %vm2651 = vcmp.ge.f32.partialorder %v2619, 0.0
      %vm2652 = vcmp.ge.f32.partialorder %v2620, 0.0
      %vm2653 = vcmp.ge.f32.partialorder %v2621, 0.0
      %vm2654 = vcmp.ge.f32.partialorder %v2622, 0.0
      %vm2655 = vcmp.ge.f32.partialorder %v2623, 0.0
      %vm2656 = vcmp.ge.f32.partialorder %v2624, 0.0
      %vm2657 = vcmp.ge.f32.partialorder %v2625, 0.0
      %vm2658 = vcmp.ge.f32.partialorder %v2626, 0.0
      %vm2659 = vcmp.ge.f32.partialorder %v2627, 0.0
      %vm2660 = vcmp.ge.f32.partialorder %v2628, 0.0
      %vm2661 = vcmp.ge.f32.partialorder %v2629, 0.0
      %vm2662 = vcmp.ge.f32.partialorder %v2630, 0.0
      %vm2663 = vcmp.ge.f32.partialorder %v2631, 0.0
      %vm2664 = vcmp.ge.f32.partialorder %v2632, 0.0
      %vm2665 = vcmp.ge.f32.partialorder %v2633, 0.0
      %vm2666 = vcmp.ge.f32.partialorder %v2634, 0.0
      %vm2667 = vcmp.ge.f32.partialorder %v2635, 0.0
      %vm2668 = vcmp.ge.f32.partialorder %v2636, 0.0
      %vm2669 = vcmp.ge.f32.partialorder %v2637, 0.0
      %vm2670 = vcmp.ge.f32.partialorder %v2638, 0.0
      %vm2671 = vcmp.ge.f32.partialorder %v2639, 0.0
      %vm2672 = vcmp.ge.f32.partialorder %v2640, 0.0
      %v2673 = vsel %vm2641, 1.0, -1.0
      %v2674 = vsel %vm2642, 1.0, -1.0
      %v2675 = vsel %vm2643, 1.0, -1.0
      %v2676 = vsel %vm2644, 1.0, -1.0
      %v2677 = vsel %vm2645, 1.0, -1.0
      %v2678 = vsel %vm2646, 1.0, -1.0
      %v2679 = vsel %vm2647, 1.0, -1.0
      %v2680 = vsel %vm2648, 1.0, -1.0
      %v2681 = vsel %vm2649, 1.0, -1.0
      %v2682 = vsel %vm2650, 1.0, -1.0
      %v2683 = vsel %vm2651, 1.0, -1.0
      %v2684 = vsel %vm2652, 1.0, -1.0
      %v2685 = vsel %vm2653, 1.0, -1.0
      %v2686 = vsel %vm2654, 1.0, -1.0
      %v2687 = vsel %vm2655, 1.0, -1.0
      %v2688 = vsel %vm2656, 1.0, -1.0
      %v2689 = vsel %vm2657, 1.0, -1.0
      %v2690 = vsel %vm2658, 1.0, -1.0
      %v2691 = vsel %vm2659, 1.0, -1.0
      %v2692 = vsel %vm2660, 1.0, -1.0
      %v2693 = vsel %vm2661, 1.0, -1.0
      %v2694 = vsel %vm2662, 1.0, -1.0
      %v2695 = vsel %vm2663, 1.0, -1.0
      %v2696 = vsel %vm2664, 1.0, -1.0
      %v2697 = vsel %vm2665, 1.0, -1.0
      %v2698 = vsel %vm2666, 1.0, -1.0
      %v2699 = vsel %vm2667, 1.0, -1.0
      %v2700 = vsel %vm2668, 1.0, -1.0
      %v2701 = vsel %vm2669, 1.0, -1.0
      %v2702 = vsel %vm2670, 1.0, -1.0
      %v2703 = vsel %vm2671, 1.0, -1.0
      %v2704 = vsel %vm2672, 1.0, -1.0
      %v2705 = vand.u32 2147483647, %v2609
      %v2706 = vand.u32 2147483647, %v2610
      %v2707 = vand.u32 2147483647, %v2611
      %v2708 = vand.u32 2147483647, %v2612
      %v2709 = vand.u32 2147483647, %v2613
      %v2710 = vand.u32 2147483647, %v2614
      %v2711 = vand.u32 2147483647, %v2615
      %v2712 = vand.u32 2147483647, %v2616
      %v2713 = vand.u32 2147483647, %v2617
      %v2714 = vand.u32 2147483647, %v2618
      %v2715 = vand.u32 2147483647, %v2619
      %v2716 = vand.u32 2147483647, %v2620
      %v2717 = vand.u32 2147483647, %v2621
      %v2718 = vand.u32 2147483647, %v2622
      %v2719 = vand.u32 2147483647, %v2623
      %v2720 = vand.u32 2147483647, %v2624
      %v2721 = vand.u32 2147483647, %v2625
      %v2722 = vand.u32 2147483647, %v2626
      %v2723 = vand.u32 2147483647, %v2627
      %v2724 = vand.u32 2147483647, %v2628
      %v2725 = vand.u32 2147483647, %v2629
      %v2726 = vand.u32 2147483647, %v2630
      %v2727 = vand.u32 2147483647, %v2631
      %v2728 = vand.u32 2147483647, %v2632
      %v2729 = vand.u32 2147483647, %v2633
      %v2730 = vand.u32 2147483647, %v2634
      %v2731 = vand.u32 2147483647, %v2635
      %v2732 = vand.u32 2147483647, %v2636
      %v2733 = vand.u32 2147483647, %v2637
      %v2734 = vand.u32 2147483647, %v2638
      %v2735 = vand.u32 2147483647, %v2639
      %v2736 = vand.u32 2147483647, %v2640
      %v2737 = vmul.f32 %v2705, 0.3275911
      %v2738 = vmul.f32 %v2706, 0.3275911
      %v2739 = vmul.f32 %v2707, 0.3275911
      %v2740 = vmul.f32 %v2708, 0.3275911
      %v2741 = vmul.f32 %v2709, 0.3275911
      %v2742 = vmul.f32 %v2710, 0.3275911
      %v2743 = vmul.f32 %v2711, 0.3275911
      %v2744 = vmul.f32 %v2712, 0.3275911
      %v2745 = vmul.f32 %v2713, 0.3275911
      %v2746 = vmul.f32 %v2714, 0.3275911
      %v2747 = vmul.f32 %v2715, 0.3275911
      %v2748 = vmul.f32 %v2716, 0.3275911
      %v2749 = vmul.f32 %v2717, 0.3275911
      %v2750 = vmul.f32 %v2718, 0.3275911
      %v2751 = vmul.f32 %v2719, 0.3275911
      %v2752 = vmul.f32 %v2720, 0.3275911
      %v2753 = vmul.f32 %v2721, 0.3275911
      %v2754 = vmul.f32 %v2722, 0.3275911
      %v2755 = vmul.f32 %v2723, 0.3275911
      %v2756 = vmul.f32 %v2724, 0.3275911
      %v2757 = vmul.f32 %v2725, 0.3275911
      %v2758 = vmul.f32 %v2726, 0.3275911
      %v2759 = vmul.f32 %v2727, 0.3275911
      %v2760 = vmul.f32 %v2728, 0.3275911
      %v2761 = vmul.f32 %v2729, 0.3275911
      %v2762 = vmul.f32 %v2730, 0.3275911
      %v2763 = vmul.f32 %v2731, 0.3275911
      %v2764 = vmul.f32 %v2732, 0.3275911
      %v2765 = vmul.f32 %v2733, 0.3275911
      %v2766 = vmul.f32 %v2734, 0.3275911
      %v2767 = vmul.f32 %v2735, 0.3275911
      %v2768 = vmul.f32 %v2736, 0.3275911
      %v2769 = vadd.f32 %v2737, 1.0
      %v2770 = vadd.f32 %v2738, 1.0
      %v2771 = vadd.f32 %v2739, 1.0
      %v2772 = vadd.f32 %v2740, 1.0
      %v2773 = vadd.f32 %v2741, 1.0
      %v2774 = vadd.f32 %v2742, 1.0
      %v2775 = vadd.f32 %v2743, 1.0
      %v2776 = vadd.f32 %v2744, 1.0
      %v2777 = vadd.f32 %v2745, 1.0
      %v2778 = vadd.f32 %v2746, 1.0
      %v2779 = vadd.f32 %v2747, 1.0
      %v2780 = vadd.f32 %v2748, 1.0
      %v2781 = vadd.f32 %v2749, 1.0
      %v2782 = vadd.f32 %v2750, 1.0
      %v2783 = vadd.f32 %v2751, 1.0
      %v2784 = vadd.f32 %v2752, 1.0
      %v2785 = vadd.f32 %v2753, 1.0
      %v2786 = vadd.f32 %v2754, 1.0
      %v2787 = vadd.f32 %v2755, 1.0
      %v2788 = vadd.f32 %v2756, 1.0
      %v2789 = vadd.f32 %v2757, 1.0
      %v2790 = vadd.f32 %v2758, 1.0
      %v2791 = vadd.f32 %v2759, 1.0
      %v2792 = vadd.f32 %v2760, 1.0
      %v2793 = vadd.f32 %v2761, 1.0
      %v2794 = vadd.f32 %v2762, 1.0
      %v2795 = vadd.f32 %v2763, 1.0
      %v2796 = vadd.f32 %v2764, 1.0
      %v2797 = vadd.f32 %v2765, 1.0
      %v2798 = vadd.f32 %v2766, 1.0
      %v2799 = vadd.f32 %v2767, 1.0
      %v2800 = vadd.f32 %v2768, 1.0
      %v2801 = vrcp.pop %v2769
      %v2802 = vmul.f32 1.0, %v2801
      %v2803 = vrcp.pop %v2770
      %v2804 = vmul.f32 1.0, %v2803
      %v2805 = vrcp.pop %v2771
      %v2806 = vmul.f32 1.0, %v2805
      %v2807 = vrcp.pop %v2772
      %v2808 = vmul.f32 1.0, %v2807
      %v2809 = vrcp.pop %v2773
      %v2810 = vmul.f32 1.0, %v2809
      %v2811 = vrcp.pop %v2774
      %v2812 = vmul.f32 1.0, %v2811
      %v2813 = vrcp.pop %v2775
      %v2814 = vmul.f32 1.0, %v2813
      %v2815 = vrcp.pop %v2776
      %v2816 = vmul.f32 1.0, %v2815
      %v2817 = vrcp.pop %v2777
      %v2818 = vmul.f32 1.0, %v2817
      %v2819 = vrcp.pop %v2778
      %v2820 = vmul.f32 1.0, %v2819
      %v2821 = vrcp.pop %v2779
      %v2822 = vmul.f32 1.0, %v2821
      %v2823 = vrcp.pop %v2780
      %v2824 = vmul.f32 1.0, %v2823
      %v2825 = vrcp.pop %v2781
      %v2826 = vmul.f32 1.0, %v2825
      %v2827 = vrcp.pop %v2782
      %v2828 = vmul.f32 1.0, %v2827
      %v2829 = vrcp.pop %v2783
      %v2830 = vmul.f32 1.0, %v2829
      %v2831 = vrcp.pop %v2784
      %v2832 = vmul.f32 1.0, %v2831
      %v2833 = vrcp.pop %v2785
      %v2834 = vmul.f32 1.0, %v2833
      %v2835 = vrcp.pop %v2786
      %v2836 = vmul.f32 1.0, %v2835
      %v2837 = vrcp.pop %v2787
      %v2838 = vmul.f32 1.0, %v2837
      %v2839 = vrcp.pop %v2788
      %v2840 = vmul.f32 1.0, %v2839
      %v2841 = vrcp.pop %v2789
      %v2842 = vmul.f32 1.0, %v2841
      %v2843 = vrcp.pop %v2790
      %v2844 = vmul.f32 1.0, %v2843
      %v2845 = vrcp.pop %v2791
      %v2846 = vmul.f32 1.0, %v2845
      %v2847 = vrcp.pop %v2792
      %v2848 = vmul.f32 1.0, %v2847
      %v2849 = vrcp.pop %v2793
      %v2850 = vmul.f32 1.0, %v2849
      %v2851 = vrcp.pop %v2794
      %v2852 = vmul.f32 1.0, %v2851
      %v2853 = vrcp.pop %v2795
      %v2854 = vmul.f32 1.0, %v2853
      %v2855 = vrcp.pop %v2796
      %v2856 = vmul.f32 1.0, %v2855
      %v2857 = vrcp.pop %v2797
      %v2858 = vmul.f32 1.0, %v2857
      %v2859 = vrcp.pop %v2798
      %v2860 = vmul.f32 1.0, %v2859
      %v2861 = vrcp.pop %v2799
      %v2862 = vmul.f32 1.0, %v2861
      %v2863 = vrcp.pop %v2800
      %v2864 = vmul.f32 1.0, %v2863
      %v2865 = vmul.f32 %v2802, 1.0614054
      %v2866 = vmul.f32 %v2804, 1.0614054
      %v2867 = vmul.f32 %v2806, 1.0614054
      %v2868 = vmul.f32 %v2808, 1.0614054
      %v2869 = vmul.f32 %v2810, 1.0614054
      %v2870 = vmul.f32 %v2812, 1.0614054
      %v2871 = vmul.f32 %v2814, 1.0614054
      %v2872 = vmul.f32 %v2816, 1.0614054
      %v2873 = vmul.f32 %v2818, 1.0614054
      %v2874 = vmul.f32 %v2820, 1.0614054
      %v2875 = vmul.f32 %v2822, 1.0614054
      %v2876 = vmul.f32 %v2824, 1.0614054
      %v2877 = vmul.f32 %v2826, 1.0614054
      %v2878 = vmul.f32 %v2828, 1.0614054
      %v2879 = vmul.f32 %v2830, 1.0614054
      %v2880 = vmul.f32 %v2832, 1.0614054
      %v2881 = vmul.f32 %v2834, 1.0614054
      %v2882 = vmul.f32 %v2836, 1.0614054
      %v2883 = vmul.f32 %v2838, 1.0614054
      %v2884 = vmul.f32 %v2840, 1.0614054
      %v2885 = vmul.f32 %v2842, 1.0614054
      %v2886 = vmul.f32 %v2844, 1.0614054
      %v2887 = vmul.f32 %v2846, 1.0614054
      %v2888 = vmul.f32 %v2848, 1.0614054
      %v2889 = vmul.f32 %v2850, 1.0614054
      %v2890 = vmul.f32 %v2852, 1.0614054
      %v2891 = vmul.f32 %v2854, 1.0614054
      %v2892 = vmul.f32 %v2856, 1.0614054
      %v2893 = vmul.f32 %v2858, 1.0614054
      %v2894 = vmul.f32 %v2860, 1.0614054
      %v2895 = vmul.f32 %v2862, 1.0614054
      %v2896 = vmul.f32 %v2864, 1.0614054
      %v2897 = vadd.f32 %v2865, -1.4531521
      %v2898 = vadd.f32 %v2866, -1.4531521
      %v2899 = vadd.f32 %v2867, -1.4531521
      %v2900 = vadd.f32 %v2868, -1.4531521
      %v2901 = vadd.f32 %v2869, -1.4531521
      %v2902 = vadd.f32 %v2870, -1.4531521
      %v2903 = vadd.f32 %v2871, -1.4531521
      %v2904 = vadd.f32 %v2872, -1.4531521
      %v2905 = vadd.f32 %v2873, -1.4531521
      %v2906 = vadd.f32 %v2874, -1.4531521
      %v2907 = vadd.f32 %v2875, -1.4531521
      %v2908 = vadd.f32 %v2876, -1.4531521
      %v2909 = vadd.f32 %v2877, -1.4531521
      %v2910 = vadd.f32 %v2878, -1.4531521
      %v2911 = vadd.f32 %v2879, -1.4531521
      %v2912 = vadd.f32 %v2880, -1.4531521
      %v2913 = vadd.f32 %v2881, -1.4531521
      %v2914 = vadd.f32 %v2882, -1.4531521
      %v2915 = vadd.f32 %v2883, -1.4531521
      %v2916 = vadd.f32 %v2884, -1.4531521
      %v2917 = vadd.f32 %v2885, -1.4531521
      %v2918 = vadd.f32 %v2886, -1.4531521
      %v2919 = vadd.f32 %v2887, -1.4531521
      %v2920 = vadd.f32 %v2888, -1.4531521
      %v2921 = vadd.f32 %v2889, -1.4531521
      %v2922 = vadd.f32 %v2890, -1.4531521
      %v2923 = vadd.f32 %v2891, -1.4531521
      %v2924 = vadd.f32 %v2892, -1.4531521
      %v2925 = vadd.f32 %v2893, -1.4531521
      %v2926 = vadd.f32 %v2894, -1.4531521
      %v2927 = vadd.f32 %v2895, -1.4531521
      %v2928 = vadd.f32 %v2896, -1.4531521
      %v2929 = vmul.f32 %v2897, %v2802
      %v2930 = vmul.f32 %v2898, %v2804
      %v2931 = vmul.f32 %v2899, %v2806
      %v2932 = vmul.f32 %v2900, %v2808
      %v2933 = vmul.f32 %v2901, %v2810
      %v2934 = vmul.f32 %v2902, %v2812
      %v2935 = vmul.f32 %v2903, %v2814
      %v2936 = vmul.f32 %v2904, %v2816
      %v2937 = vmul.f32 %v2905, %v2818
      %v2938 = vmul.f32 %v2906, %v2820
      %v2939 = vmul.f32 %v2907, %v2822
      %v2940 = vmul.f32 %v2908, %v2824
      %v2941 = vmul.f32 %v2909, %v2826
      %v2942 = vmul.f32 %v2910, %v2828
      %v2943 = vmul.f32 %v2911, %v2830
      %v2944 = vmul.f32 %v2912, %v2832
      %v2945 = vmul.f32 %v2913, %v2834
      %v2946 = vmul.f32 %v2914, %v2836
      %v2947 = vmul.f32 %v2915, %v2838
      %v2948 = vmul.f32 %v2916, %v2840
      %v2949 = vmul.f32 %v2917, %v2842
      %v2950 = vmul.f32 %v2918, %v2844
      %v2951 = vmul.f32 %v2919, %v2846
      %v2952 = vmul.f32 %v2920, %v2848
      %v2953 = vmul.f32 %v2921, %v2850
      %v2954 = vmul.f32 %v2922, %v2852
      %v2955 = vmul.f32 %v2923, %v2854
      %v2956 = vmul.f32 %v2924, %v2856
      %v2957 = vmul.f32 %v2925, %v2858
      %v2958 = vmul.f32 %v2926, %v2860
      %v2959 = vmul.f32 %v2927, %v2862
      %v2960 = vmul.f32 %v2928, %v2864
      %v2961 = vadd.f32 %v2929, 1.4214138
      %v2962 = vadd.f32 %v2930, 1.4214138
      %v2963 = vadd.f32 %v2931, 1.4214138
      %v2964 = vadd.f32 %v2932, 1.4214138
      %v2965 = vadd.f32 %v2933, 1.4214138
      %v2966 = vadd.f32 %v2934, 1.4214138
      %v2967 = vadd.f32 %v2935, 1.4214138
      %v2968 = vadd.f32 %v2936, 1.4214138
      %v2969 = vadd.f32 %v2937, 1.4214138
      %v2970 = vadd.f32 %v2938, 1.4214138
      %v2971 = vadd.f32 %v2939, 1.4214138
      %v2972 = vadd.f32 %v2940, 1.4214138
      %v2973 = vadd.f32 %v2941, 1.4214138
      %v2974 = vadd.f32 %v2942, 1.4214138
      %v2975 = vadd.f32 %v2943, 1.4214138
      %v2976 = vadd.f32 %v2944, 1.4214138
      %v2977 = vadd.f32 %v2945, 1.4214138
      %v2978 = vadd.f32 %v2946, 1.4214138
      %v2979 = vadd.f32 %v2947, 1.4214138
      %v2980 = vadd.f32 %v2948, 1.4214138
      %v2981 = vadd.f32 %v2949, 1.4214138
      %v2982 = vadd.f32 %v2950, 1.4214138
      %v2983 = vadd.f32 %v2951, 1.4214138
      %v2984 = vadd.f32 %v2952, 1.4214138
      %v2985 = vadd.f32 %v2953, 1.4214138
      %v2986 = vadd.f32 %v2954, 1.4214138
      %v2987 = vadd.f32 %v2955, 1.4214138
      %v2988 = vadd.f32 %v2956, 1.4214138
      %v2989 = vadd.f32 %v2957, 1.4214138
      %v2990 = vadd.f32 %v2958, 1.4214138
      %v2991 = vadd.f32 %v2959, 1.4214138
      %v2992 = vadd.f32 %v2960, 1.4214138
      %v2993 = vmul.f32 %v2961, %v2802
      %v2994 = vmul.f32 %v2962, %v2804
      %v2995 = vmul.f32 %v2963, %v2806
      %v2996 = vmul.f32 %v2964, %v2808
      %v2997 = vmul.f32 %v2965, %v2810
      %v2998 = vmul.f32 %v2966, %v2812
      %v2999 = vmul.f32 %v2967, %v2814
      %v3000 = vmul.f32 %v2968, %v2816
      %v3001 = vmul.f32 %v2969, %v2818
      %v3002 = vmul.f32 %v2970, %v2820
      %v3003 = vmul.f32 %v2971, %v2822
      %v3004 = vmul.f32 %v2972, %v2824
      %v3005 = vmul.f32 %v2973, %v2826
      %v3006 = vmul.f32 %v2974, %v2828
      %v3007 = vmul.f32 %v2975, %v2830
      %v3008 = vmul.f32 %v2976, %v2832
      %v3009 = vmul.f32 %v2977, %v2834
      %v3010 = vmul.f32 %v2978, %v2836
      %v3011 = vmul.f32 %v2979, %v2838
      %v3012 = vmul.f32 %v2980, %v2840
      %v3013 = vmul.f32 %v2981, %v2842
      %v3014 = vmul.f32 %v2982, %v2844
      %v3015 = vmul.f32 %v2983, %v2846
      %v3016 = vmul.f32 %v2984, %v2848
      %v3017 = vmul.f32 %v2985, %v2850
      %v3018 = vmul.f32 %v2986, %v2852
      %v3019 = vmul.f32 %v2987, %v2854
      %v3020 = vmul.f32 %v2988, %v2856
      %v3021 = vmul.f32 %v2989, %v2858
      %v3022 = vmul.f32 %v2990, %v2860
      %v3023 = vmul.f32 %v2991, %v2862
      %v3024 = vmul.f32 %v2992, %v2864
      %v3025 = vadd.f32 %v2993, -0.28449672
      %v3026 = vadd.f32 %v2994, -0.28449672
      %v3027 = vadd.f32 %v2995, -0.28449672
      %v3028 = vadd.f32 %v2996, -0.28449672
      %v3029 = vadd.f32 %v2997, -0.28449672
      %v3030 = vadd.f32 %v2998, -0.28449672
      %v3031 = vadd.f32 %v2999, -0.28449672
      %v3032 = vadd.f32 %v3000, -0.28449672
      %v3033 = vadd.f32 %v3001, -0.28449672
      %v3034 = vadd.f32 %v3002, -0.28449672
      %v3035 = vadd.f32 %v3003, -0.28449672
      %v3036 = vadd.f32 %v3004, -0.28449672
      %v3037 = vadd.f32 %v3005, -0.28449672
      %v3038 = vadd.f32 %v3006, -0.28449672
      %v3039 = vadd.f32 %v3007, -0.28449672
      %v3040 = vadd.f32 %v3008, -0.28449672
      %v3041 = vadd.f32 %v3009, -0.28449672
      %v3042 = vadd.f32 %v3010, -0.28449672
      %v3043 = vadd.f32 %v3011, -0.28449672
      %v3044 = vadd.f32 %v3012, -0.28449672
      %v3045 = vadd.f32 %v3013, -0.28449672
      %v3046 = vadd.f32 %v3014, -0.28449672
      %v3047 = vadd.f32 %v3015, -0.28449672
      %v3048 = vadd.f32 %v3016, -0.28449672
      %v3049 = vadd.f32 %v3017, -0.28449672
      %v3050 = vadd.f32 %v3018, -0.28449672
      %v3051 = vadd.f32 %v3019, -0.28449672
      %v3052 = vadd.f32 %v3020, -0.28449672
      %v3053 = vadd.f32 %v3021, -0.28449672
      %v3054 = vadd.f32 %v3022, -0.28449672
      %v3055 = vadd.f32 %v3023, -0.28449672
      %v3056 = vadd.f32 %v3024, -0.28449672
      %v3057 = vmul.f32 %v3025, %v2802
      %v3058 = vmul.f32 %v3026, %v2804
      %v3059 = vmul.f32 %v3027, %v2806
      %v3060 = vmul.f32 %v3028, %v2808
      %v3061 = vmul.f32 %v3029, %v2810
      %v3062 = vmul.f32 %v3030, %v2812
      %v3063 = vmul.f32 %v3031, %v2814
      %v3064 = vmul.f32 %v3032, %v2816
      %v3065 = vmul.f32 %v3033, %v2818
      %v3066 = vmul.f32 %v3034, %v2820
      %v3067 = vmul.f32 %v3035, %v2822
      %v3068 = vmul.f32 %v3036, %v2824
      %v3069 = vmul.f32 %v3037, %v2826
      %v3070 = vmul.f32 %v3038, %v2828
      %v3071 = vmul.f32 %v3039, %v2830
      %v3072 = vmul.f32 %v3040, %v2832
      %v3073 = vmul.f32 %v3041, %v2834
      %v3074 = vmul.f32 %v3042, %v2836
      %v3075 = vmul.f32 %v3043, %v2838
      %v3076 = vmul.f32 %v3044, %v2840
      %v3077 = vmul.f32 %v3045, %v2842
      %v3078 = vmul.f32 %v3046, %v2844
      %v3079 = vmul.f32 %v3047, %v2846
      %v3080 = vmul.f32 %v3048, %v2848
      %v3081 = vmul.f32 %v3049, %v2850
      %v3082 = vmul.f32 %v3050, %v2852
      %v3083 = vmul.f32 %v3051, %v2854
      %v3084 = vmul.f32 %v3052, %v2856
      %v3085 = vmul.f32 %v3053, %v2858
      %v3086 = vmul.f32 %v3054, %v2860
      %v3087 = vmul.f32 %v3055, %v2862
      %v3088 = vmul.f32 %v3056, %v2864
      %v3089 = vadd.f32 %v3057, 0.2548296
      %v3090 = vadd.f32 %v3058, 0.2548296
      %v3091 = vadd.f32 %v3059, 0.2548296
      %v3092 = vadd.f32 %v3060, 0.2548296
      %v3093 = vadd.f32 %v3061, 0.2548296
      %v3094 = vadd.f32 %v3062, 0.2548296
      %v3095 = vadd.f32 %v3063, 0.2548296
      %v3096 = vadd.f32 %v3064, 0.2548296
      %v3097 = vadd.f32 %v3065, 0.2548296
      %v3098 = vadd.f32 %v3066, 0.2548296
      %v3099 = vadd.f32 %v3067, 0.2548296
      %v3100 = vadd.f32 %v3068, 0.2548296
      %v3101 = vadd.f32 %v3069, 0.2548296
      %v3102 = vadd.f32 %v3070, 0.2548296
      %v3103 = vadd.f32 %v3071, 0.2548296
      %v3104 = vadd.f32 %v3072, 0.2548296
      %v3105 = vadd.f32 %v3073, 0.2548296
      %v3106 = vadd.f32 %v3074, 0.2548296
      %v3107 = vadd.f32 %v3075, 0.2548296
      %v3108 = vadd.f32 %v3076, 0.2548296
      %v3109 = vadd.f32 %v3077, 0.2548296
      %v3110 = vadd.f32 %v3078, 0.2548296
      %v3111 = vadd.f32 %v3079, 0.2548296
      %v3112 = vadd.f32 %v3080, 0.2548296
      %v3113 = vadd.f32 %v3081, 0.2548296
      %v3114 = vadd.f32 %v3082, 0.2548296
      %v3115 = vadd.f32 %v3083, 0.2548296
      %v3116 = vadd.f32 %v3084, 0.2548296
      %v3117 = vadd.f32 %v3085, 0.2548296
      %v3118 = vadd.f32 %v3086, 0.2548296
      %v3119 = vadd.f32 %v3087, 0.2548296
      %v3120 = vadd.f32 %v3088, 0.2548296
      %v3121 = vmul.f32 %v3089, %v2802
      %v3122 = vmul.f32 %v3090, %v2804
      %v3123 = vmul.f32 %v3091, %v2806
      %v3124 = vmul.f32 %v3092, %v2808
      %v3125 = vmul.f32 %v3093, %v2810
      %v3126 = vmul.f32 %v3094, %v2812
      %v3127 = vmul.f32 %v3095, %v2814
      %v3128 = vmul.f32 %v3096, %v2816
      %v3129 = vmul.f32 %v3097, %v2818
      %v3130 = vmul.f32 %v3098, %v2820
      %v3131 = vmul.f32 %v3099, %v2822
      %v3132 = vmul.f32 %v3100, %v2824
      %v3133 = vmul.f32 %v3101, %v2826
      %v3134 = vmul.f32 %v3102, %v2828
      %v3135 = vmul.f32 %v3103, %v2830
      %v3136 = vmul.f32 %v3104, %v2832
      %v3137 = vmul.f32 %v3105, %v2834
      %v3138 = vmul.f32 %v3106, %v2836
      %v3139 = vmul.f32 %v3107, %v2838
      %v3140 = vmul.f32 %v3108, %v2840
      %v3141 = vmul.f32 %v3109, %v2842
      %v3142 = vmul.f32 %v3110, %v2844
      %v3143 = vmul.f32 %v3111, %v2846
      %v3144 = vmul.f32 %v3112, %v2848
      %v3145 = vmul.f32 %v3113, %v2850
      %v3146 = vmul.f32 %v3114, %v2852
      %v3147 = vmul.f32 %v3115, %v2854
      %v3148 = vmul.f32 %v3116, %v2856
      %v3149 = vmul.f32 %v3117, %v2858
      %v3150 = vmul.f32 %v3118, %v2860
      %v3151 = vmul.f32 %v3119, %v2862
      %v3152 = vmul.f32 %v3120, %v2864
      %v3153 = vsub.f32 0.0, %v2705
      %v3154 = vsub.f32 0.0, %v2706
      %v3155 = vsub.f32 0.0, %v2707
      %v3156 = vsub.f32 0.0, %v2708
      %v3157 = vsub.f32 0.0, %v2709
      %v3158 = vsub.f32 0.0, %v2710
      %v3159 = vsub.f32 0.0, %v2711
      %v3160 = vsub.f32 0.0, %v2712
      %v3161 = vsub.f32 0.0, %v2713
      %v3162 = vsub.f32 0.0, %v2714
      %v3163 = vsub.f32 0.0, %v2715
      %v3164 = vsub.f32 0.0, %v2716
      %v3165 = vsub.f32 0.0, %v2717
      %v3166 = vsub.f32 0.0, %v2718
      %v3167 = vsub.f32 0.0, %v2719
      %v3168 = vsub.f32 0.0, %v2720
      %v3169 = vsub.f32 0.0, %v2721
      %v3170 = vsub.f32 0.0, %v2722
      %v3171 = vsub.f32 0.0, %v2723
      %v3172 = vsub.f32 0.0, %v2724
      %v3173 = vsub.f32 0.0, %v2725
      %v3174 = vsub.f32 0.0, %v2726
      %v3175 = vsub.f32 0.0, %v2727
      %v3176 = vsub.f32 0.0, %v2728
      %v3177 = vsub.f32 0.0, %v2729
      %v3178 = vsub.f32 0.0, %v2730
      %v3179 = vsub.f32 0.0, %v2731
      %v3180 = vsub.f32 0.0, %v2732
      %v3181 = vsub.f32 0.0, %v2733
      %v3182 = vsub.f32 0.0, %v2734
      %v3183 = vsub.f32 0.0, %v2735
      %v3184 = vsub.f32 0.0, %v2736
      %v3185 = vmul.f32 %v3153, %v2705
      %v3186 = vmul.f32 %v3154, %v2706
      %v3187 = vmul.f32 %v3155, %v2707
      %v3188 = vmul.f32 %v3156, %v2708
      %v3189 = vmul.f32 %v3157, %v2709
      %v3190 = vmul.f32 %v3158, %v2710
      %v3191 = vmul.f32 %v3159, %v2711
      %v3192 = vmul.f32 %v3160, %v2712
      %v3193 = vmul.f32 %v3161, %v2713
      %v3194 = vmul.f32 %v3162, %v2714
      %v3195 = vmul.f32 %v3163, %v2715
      %v3196 = vmul.f32 %v3164, %v2716
      %v3197 = vmul.f32 %v3165, %v2717
      %v3198 = vmul.f32 %v3166, %v2718
      %v3199 = vmul.f32 %v3167, %v2719
      %v3200 = vmul.f32 %v3168, %v2720
      %v3201 = vmul.f32 %v3169, %v2721
      %v3202 = vmul.f32 %v3170, %v2722
      %v3203 = vmul.f32 %v3171, %v2723
      %v3204 = vmul.f32 %v3172, %v2724
      %v3205 = vmul.f32 %v3173, %v2725
      %v3206 = vmul.f32 %v3174, %v2726
      %v3207 = vmul.f32 %v3175, %v2727
      %v3208 = vmul.f32 %v3176, %v2728
      %v3209 = vmul.f32 %v3177, %v2729
      %v3210 = vmul.f32 %v3178, %v2730
      %v3211 = vmul.f32 %v3179, %v2731
      %v3212 = vmul.f32 %v3180, %v2732
      %v3213 = vmul.f32 %v3181, %v2733
      %v3214 = vmul.f32 %v3182, %v2734
      %v3215 = vmul.f32 %v3183, %v2735
      %v3216 = vmul.f32 %v3184, %v2736
      %v3217 = vmul.f32 %v3185, 1.442695
      %v3218 = vpow.pop %v3217
      %v3219 = vmul.f32 %v3186, 1.442695
      %v3220 = vpow.pop %v3219
      %v3221 = vmul.f32 %v3187, 1.442695
      %v3222 = vpow.pop %v3221
      %v3223 = vmul.f32 %v3188, 1.442695
      %v3224 = vpow.pop %v3223
      %v3225 = vmul.f32 %v3189, 1.442695
      %v3226 = vpow.pop %v3225
      %v3227 = vmul.f32 %v3190, 1.442695
      %v3228 = vpow.pop %v3227
      %v3229 = vmul.f32 %v3191, 1.442695
      %v3230 = vpow.pop %v3229
      %v3231 = vmul.f32 %v3192, 1.442695
      %v3232 = vpow.pop %v3231
      %v3233 = vmul.f32 %v3193, 1.442695
      %v3234 = vpow.pop %v3233
      %v3235 = vmul.f32 %v3194, 1.442695
      %v3236 = vpow.pop %v3235
      %v3237 = vmul.f32 %v3195, 1.442695
      %v3238 = vpow.pop %v3237
      %v3239 = vmul.f32 %v3196, 1.442695
      %v3240 = vpow.pop %v3239
      %v3241 = vmul.f32 %v3197, 1.442695
      %v3242 = vpow.pop %v3241
      %v3243 = vmul.f32 %v3198, 1.442695
      %v3244 = vpow.pop %v3243
      %v3245 = vmul.f32 %v3199, 1.442695
      %v3246 = vpow.pop %v3245
      %v3247 = vmul.f32 %v3200, 1.442695
      %v3248 = vpow.pop %v3247
      %v3249 = vmul.f32 %v3201, 1.442695
      %v3250 = vpow.pop %v3249
      %v3251 = vmul.f32 %v3202, 1.442695
      %v3252 = vpow.pop %v3251
      %v3253 = vmul.f32 %v3203, 1.442695
      %v3254 = vpow.pop %v3253
      %v3255 = vmul.f32 %v3204, 1.442695
      %v3256 = vpow.pop %v3255
      %v3257 = vmul.f32 %v3205, 1.442695
      %v3258 = vpow.pop %v3257
      %v3259 = vmul.f32 %v3206, 1.442695
      %v3260 = vpow.pop %v3259
      %v3261 = vmul.f32 %v3207, 1.442695
      %v3262 = vpow.pop %v3261
      %v3263 = vmul.f32 %v3208, 1.442695
      %v3264 = vpow.pop %v3263
      %v3265 = vmul.f32 %v3209, 1.442695
      %v3266 = vpow.pop %v3265
      %v3267 = vmul.f32 %v3210, 1.442695
      %v3268 = vpow.pop %v3267
      %v3269 = vmul.f32 %v3211, 1.442695
      %v3270 = vpow.pop %v3269
      %v3271 = vmul.f32 %v3212, 1.442695
      %v3272 = vpow.pop %v3271
      %v3273 = vmul.f32 %v3213, 1.442695
      %v3274 = vpow.pop %v3273
      %v3275 = vmul.f32 %v3214, 1.442695
      %v3276 = vpow.pop %v3275
      %v3277 = vmul.f32 %v3215, 1.442695
      %v3278 = vpow.pop %v3277
      %v3279 = vmul.f32 %v3216, 1.442695
      %v3280 = vpow.pop %v3279
      %v3281 = vmul.f32 %v3121, %v3218
      %v3282 = vmul.f32 %v3122, %v3220
      %v3283 = vmul.f32 %v3123, %v3222
      %v3284 = vmul.f32 %v3124, %v3224
      %v3285 = vmul.f32 %v3125, %v3226
      %v3286 = vmul.f32 %v3126, %v3228
      %v3287 = vmul.f32 %v3127, %v3230
      %v3288 = vmul.f32 %v3128, %v3232
      %v3289 = vmul.f32 %v3129, %v3234
      %v3290 = vmul.f32 %v3130, %v3236
      %v3291 = vmul.f32 %v3131, %v3238
      %v3292 = vmul.f32 %v3132, %v3240
      %v3293 = vmul.f32 %v3133, %v3242
      %v3294 = vmul.f32 %v3134, %v3244
      %v3295 = vmul.f32 %v3135, %v3246
      %v3296 = vmul.f32 %v3136, %v3248
      %v3297 = vmul.f32 %v3137, %v3250
      %v3298 = vmul.f32 %v3138, %v3252
      %v3299 = vmul.f32 %v3139, %v3254
      %v3300 = vmul.f32 %v3140, %v3256
      %v3301 = vmul.f32 %v3141, %v3258
      %v3302 = vmul.f32 %v3142, %v3260
      %v3303 = vmul.f32 %v3143, %v3262
      %v3304 = vmul.f32 %v3144, %v3264
      %v3305 = vmul.f32 %v3145, %v3266
      %v3306 = vmul.f32 %v3146, %v3268
      %v3307 = vmul.f32 %v3147, %v3270
      %v3308 = vmul.f32 %v3148, %v3272
      %v3309 = vmul.f32 %v3149, %v3274
      %v3310 = vmul.f32 %v3150, %v3276
      %v3311 = vmul.f32 %v3151, %v3278
      %v3312 = vmul.f32 %v3152, %v3280
      %v3313 = vsub.f32 1.0, %v3281
      %v3314 = vsub.f32 1.0, %v3282
      %v3315 = vsub.f32 1.0, %v3283
      %v3316 = vsub.f32 1.0, %v3284
      %v3317 = vsub.f32 1.0, %v3285
      %v3318 = vsub.f32 1.0, %v3286
      %v3319 = vsub.f32 1.0, %v3287
      %v3320 = vsub.f32 1.0, %v3288
      %v3321 = vsub.f32 1.0, %v3289
      %v3322 = vsub.f32 1.0, %v3290
      %v3323 = vsub.f32 1.0, %v3291
      %v3324 = vsub.f32 1.0, %v3292
      %v3325 = vsub.f32 1.0, %v3293
      %v3326 = vsub.f32 1.0, %v3294
      %v3327 = vsub.f32 1.0, %v3295
      %v3328 = vsub.f32 1.0, %v3296
      %v3329 = vsub.f32 1.0, %v3297
      %v3330 = vsub.f32 1.0, %v3298
      %v3331 = vsub.f32 1.0, %v3299
      %v3332 = vsub.f32 1.0, %v3300
      %v3333 = vsub.f32 1.0, %v3301
      %v3334 = vsub.f32 1.0, %v3302
      %v3335 = vsub.f32 1.0, %v3303
      %v3336 = vsub.f32 1.0, %v3304
      %v3337 = vsub.f32 1.0, %v3305
      %v3338 = vsub.f32 1.0, %v3306
      %v3339 = vsub.f32 1.0, %v3307
      %v3340 = vsub.f32 1.0, %v3308
      %v3341 = vsub.f32 1.0, %v3309
      %v3342 = vsub.f32 1.0, %v3310
      %v3343 = vsub.f32 1.0, %v3311
      %v3344 = vsub.f32 1.0, %v3312
      %v3345 = vmul.f32 %v2673, %v3313
      %v3346 = vmul.f32 %v2674, %v3314
      %v3347 = vmul.f32 %v2675, %v3315
      %v3348 = vmul.f32 %v2676, %v3316
      %v3349 = vmul.f32 %v2677, %v3317
      %v3350 = vmul.f32 %v2678, %v3318
      %v3351 = vmul.f32 %v2679, %v3319
      %v3352 = vmul.f32 %v2680, %v3320
      %v3353 = vmul.f32 %v2681, %v3321
      %v3354 = vmul.f32 %v2682, %v3322
      %v3355 = vmul.f32 %v2683, %v3323
      %v3356 = vmul.f32 %v2684, %v3324
      %v3357 = vmul.f32 %v2685, %v3325
      %v3358 = vmul.f32 %v2686, %v3326
      %v3359 = vmul.f32 %v2687, %v3327
      %v3360 = vmul.f32 %v2688, %v3328
      %v3361 = vmul.f32 %v2689, %v3329
      %v3362 = vmul.f32 %v2690, %v3330
      %v3363 = vmul.f32 %v2691, %v3331
      %v3364 = vmul.f32 %v2692, %v3332
      %v3365 = vmul.f32 %v2693, %v3333
      %v3366 = vmul.f32 %v2694, %v3334
      %v3367 = vmul.f32 %v2695, %v3335
      %v3368 = vmul.f32 %v2696, %v3336
      %v3369 = vmul.f32 %v2697, %v3337
      %v3370 = vmul.f32 %v2698, %v3338
      %v3371 = vmul.f32 %v2699, %v3339
      %v3372 = vmul.f32 %v2700, %v3340
      %v3373 = vmul.f32 %v2701, %v3341
      %v3374 = vmul.f32 %v2702, %v3342
      %v3375 = vmul.f32 %v2703, %v3343
      %v3376 = vmul.f32 %v2704, %v3344
      %v3377 = vadd.f32 %v3345, 1.0
      %v3378 = vadd.f32 %v3346, 1.0
      %v3379 = vadd.f32 %v3347, 1.0
      %v3380 = vadd.f32 %v3348, 1.0
      %v3381 = vadd.f32 %v3349, 1.0
      %v3382 = vadd.f32 %v3350, 1.0
      %v3383 = vadd.f32 %v3351, 1.0
      %v3384 = vadd.f32 %v3352, 1.0
      %v3385 = vadd.f32 %v3353, 1.0
      %v3386 = vadd.f32 %v3354, 1.0
      %v3387 = vadd.f32 %v3355, 1.0
      %v3388 = vadd.f32 %v3356, 1.0
      %v3389 = vadd.f32 %v3357, 1.0
      %v3390 = vadd.f32 %v3358, 1.0
      %v3391 = vadd.f32 %v3359, 1.0
      %v3392 = vadd.f32 %v3360, 1.0
      %v3393 = vadd.f32 %v3361, 1.0
      %v3394 = vadd.f32 %v3362, 1.0
      %v3395 = vadd.f32 %v3363, 1.0
      %v3396 = vadd.f32 %v3364, 1.0
      %v3397 = vadd.f32 %v3365, 1.0
      %v3398 = vadd.f32 %v3366, 1.0
      %v3399 = vadd.f32 %v3367, 1.0
      %v3400 = vadd.f32 %v3368, 1.0
      %v3401 = vadd.f32 %v3369, 1.0
      %v3402 = vadd.f32 %v3370, 1.0
      %v3403 = vadd.f32 %v3371, 1.0
      %v3404 = vadd.f32 %v3372, 1.0
      %v3405 = vadd.f32 %v3373, 1.0
      %v3406 = vadd.f32 %v3374, 1.0
      %v3407 = vadd.f32 %v3375, 1.0
      %v3408 = vadd.f32 %v3376, 1.0
      %v3409 = vmul.f32 %v2577, %v3377
      %v3410 = vmul.f32 %v2578, %v3378
      %v3411 = vmul.f32 %v2579, %v3379
      %v3412 = vmul.f32 %v2580, %v3380
      %v3413 = vmul.f32 %v2581, %v3381
      %v3414 = vmul.f32 %v2582, %v3382
      %v3415 = vmul.f32 %v2583, %v3383
      %v3416 = vmul.f32 %v2584, %v3384
      %v3417 = vmul.f32 %v2585, %v3385
      %v3418 = vmul.f32 %v2586, %v3386
      %v3419 = vmul.f32 %v2587, %v3387
      %v3420 = vmul.f32 %v2588, %v3388
      %v3421 = vmul.f32 %v2589, %v3389
      %v3422 = vmul.f32 %v2590, %v3390
      %v3423 = vmul.f32 %v2591, %v3391
      %v3424 = vmul.f32 %v2592, %v3392
      %v3425 = vmul.f32 %v2593, %v3393
      %v3426 = vmul.f32 %v2594, %v3394
      %v3427 = vmul.f32 %v2595, %v3395
      %v3428 = vmul.f32 %v2596, %v3396
      %v3429 = vmul.f32 %v2597, %v3397
      %v3430 = vmul.f32 %v2598, %v3398
      %v3431 = vmul.f32 %v2599, %v3399
      %v3432 = vmul.f32 %v2600, %v3400
      %v3433 = vmul.f32 %v2601, %v3401
      %v3434 = vmul.f32 %v2602, %v3402
      %v3435 = vmul.f32 %v2603, %v3403
      %v3436 = vmul.f32 %v2604, %v3404
      %v3437 = vmul.f32 %v2605, %v3405
      %v3438 = vmul.f32 %v2606, %v3406
      %v3439 = vmul.f32 %v2607, %v3407
      %v3440 = vmul.f32 %v2608, %v3408
      %vm3441 = vcmask 123904
      %3442 = vst.msk [vmem:[%s143] sm:$0x3] %vm3441, %v3409
      %3443 = vst.msk [vmem:[%s143 + $0x2] sm:$0x3] %vm3441, %v3410
      %3444 = vst.msk [vmem:[%s143 + $0x4] sm:$0x3] %vm3441, %v3411
      %3445 = vst.msk [vmem:[%s143 + $0x6] sm:$0x3] %vm3441, %v3412
      %3446 = vst.msk [vmem:[%s143 + $0x8] sm:$0x3] %vm3441, %v3413
      %3447 = vst.msk [vmem:[%s143 + $0xa] sm:$0x3] %vm3441, %v3414
      %3448 = vst.msk [vmem:[%s143 + $0xc] sm:$0x3] %vm3441, %v3415
      %3449 = vst.msk [vmem:[%s143 + $0xe] sm:$0x3] %vm3441, %v3416
      %3450 = vst.msk [vmem:[%s143 + $0x10] sm:$0x3] %vm3441, %v3417
      %3451 = vst.msk [vmem:[%s143 + $0x12] sm:$0x3] %vm3441, %v3418
      %3452 = vst.msk [vmem:[%s143 + $0x14] sm:$0x3] %vm3441, %v3419
      %3453 = vst.msk [vmem:[%s143 + $0x16] sm:$0x3] %vm3441, %v3420
      %3454 = vst.msk [vmem:[%s143 + $0x18] sm:$0x3] %vm3441, %v3421
      %3455 = vst.msk [vmem:[%s143 + $0x1a] sm:$0x3] %vm3441, %v3422
      %3456 = vst.msk [vmem:[%s143 + $0x1c] sm:$0x3] %vm3441, %v3423
      %3457 = vst.msk [vmem:[%s143 + $0x1e] sm:$0x3] %vm3441, %v3424
      %3458 = vst.msk [vmem:[%s143 + $0x20] sm:$0x3] %vm3441, %v3425
      %3459 = vst.msk [vmem:[%s143 + $0x22] sm:$0x3] %vm3441, %v3426
      %3460 = vst.msk [vmem:[%s143 + $0x24] sm:$0x3] %vm3441, %v3427
      %3461 = vst.msk [vmem:[%s143 + $0x26] sm:$0x3] %vm3441, %v3428
      %3462 = vst.msk [vmem:[%s143 + $0x28] sm:$0x3] %vm3441, %v3429
      %3463 = vst.msk [vmem:[%s143 + $0x2a] sm:$0x3] %vm3441, %v3430
      %3464 = vst.msk [vmem:[%s143 + $0x2c] sm:$0x3] %vm3441, %v3431
      %3465 = vst.msk [vmem:[%s143 + $0x2e] sm:$0x3] %vm3441, %v3432
      %3466 = vst.msk [vmem:[%s143 + $0x30] sm:$0x3] %vm3441, %v3433
      %3467 = vst.msk [vmem:[%s143 + $0x32] sm:$0x3] %vm3441, %v3434
      %3468 = vst.msk [vmem:[%s143 + $0x34] sm:$0x3] %vm3441, %v3435
      %3469 = vst.msk [vmem:[%s143 + $0x36] sm:$0x3] %vm3441, %v3436
      %3470 = vst.msk [vmem:[%s143 + $0x38] sm:$0x3] %vm3441, %v3437
      %3471 = vst.msk [vmem:[%s143 + $0x3a] sm:$0x3] %vm3441, %v3438
      %3472 = vst.msk [vmem:[%s143 + $0x3c] sm:$0x3] %vm3441, %v3439
      %3473 = vst.msk [vmem:[%s143 + $0x3e] sm:$0x3] %vm3441, %v3440
      %p3474 = scmp.lt.s32.totalorder %s13, 1
      %s3475 = scalar_select %p3474, %s13, 1
      %s3476 = smul.addr %s3475, 32
      %s3477 = smul.addr %s3476, 2
      %s3478 = scalar_lea.vmem %s2, %s3477
      // Predicated region
      $region29: #{tpu_custom_call.1} parent=27 // pred_check
        %p3479 = pneg %p78
      $region30: #{tpu_custom_call.1} parent=27 // pred_check_branch
        %3481 = sbr.rel (%p3479) target = $region32
      $region31: #{tpu_custom_call.1} parent=27 // pred_region
        _
      $region32: #{tpu_custom_call.1} parent=27 // pred_fallthru
        _
    $region28: #{tpu_custom_call.1} parent=5 // pred_fallthru
      _
    %p3482 = scmp.le.s32.totalorder 2, %s8
    // Predicated region
    $region33: #{tpu_custom_call.1} parent=5 // pred_check
      %p3483 = pneg %p3482
    $region34: #{tpu_custom_call.1} parent=5 // pred_check_branch
      %3485 = sbr.rel (%p3483) target = $region36
    $region35: #{tpu_custom_call.1} parent=5 // pred_region
      %s3486 = ssub.s32 %s8, 2
      // Predicated region
      $region37: #{tpu_custom_call.1} parent=35 // pred_check
        %p3487 = pneg %p84
      $region38: #{tpu_custom_call.1} parent=35 // pred_check_branch
        %3489 = sbr.rel (%p3487) target = $region40
      $region39: #{tpu_custom_call.1} parent=35 // pred_region
        %p3490 = scmp.lt.s32.totalorder %s14, 1
        %s3491 = scalar_select %p3490, %s14, 1
        %s3492 = smul.addr %s3491, 32
        %s3493 = smul.addr %s3492, 2
        %s3494 = scalar_lea.vmem %s2, %s3493
      $region40: #{tpu_custom_call.1} parent=35 // pred_fallthru
        _
    $region36: #{tpu_custom_call.1} parent=5 // pred_fallthru
      _
  $region6: #{tpu_custom_call.1} parent=0 // loop_footer
    %s12 = sadd.s32 1, %s8
  $region7: #{tpu_custom_call.1} parent=0 // loop_footer_branch
    %7 = sbr.rel target = $region3
  $region8: #{tpu_custom_call.1} parent=0 // loop_exit
    _

</llo_original>
